<compile_context>
chip_gen: v6e
topology: v6e:2x2x1
jax: 0.10.0
libtpu: 0.0.40
codegen_flags: <defaults>
</compile_context>

<pallas_src>
import functools

import jax
import jax.numpy as jnp
from jax import lax
from jax.experimental import pallas as pl
from jax.experimental.pallas import tpu as pltpu


def multicell_lstm_kernel(
    x_ref,          # (TB, B, I)      f32 inputs for this time block
    w1_ref,         # (I+H, 2CH+3H)   bf16 fused gate + composition weights
    b1_ref,         # (1, 2CH+3H)     f32  fused bias
    w2_ref,         # (H+CH, 2CH)     bf16 fused attention projections
    v_ref,          # (1, 2CH)        f32  attention vector tiled over cells
    h_out_ref,      # (TB, B, H)
    cell_out_ref,   # (TB, B, CH)     lane-dense packed per-cell states
    probs_out_ref,  # (TB, B, C)
    h_state,        # VMEM (B, H) f32, carried across grid steps
    c_state,        # VMEM (B, H) f32, carried across grid steps
    *, hidden_size, cell_num, time_block,
):
    H, C, TB = hidden_size, cell_num, time_block
    CH = C * H

    @pl.when(pl.program_id(0) == 0)
    def _():
        h_state[...] = jnp.zeros_like(h_state)
        c_state[...] = jnp.zeros_like(c_state)

    # Resident weights: loaded once per grid step (constant index_map).
    w1 = w1_ref[...]
    b1 = b1_ref[...]
    w2 = w2_ref[...]
    v = v_ref[...]

    def step(tt, carry):
        h, c_pre = carry                              # (B, H) f32 each
        x_t = x_ref[tt]                               # (B, I) f32

        # ---- ONE fused matmul: C gate cells + composition cell --------------
        xh = jnp.concatenate([x_t, h], axis=-1).astype(jnp.bfloat16)  # (B, I+H)
        net = jnp.dot(xh, w1, preferred_element_type=jnp.float32) + b1

        ig_all = jax.nn.sigmoid(net[:, :CH])          # (B, CH) per-cell gates
        ci_all = jnp.tanh(net[:, CH:2 * CH])          # (B, CH) per-cell candidates
        comp = net[:, 2 * CH:]                        # (B, 3H) composition cell
        i_gate = jax.nn.sigmoid(comp[:, :H])
        o_gate = jax.nn.sigmoid(comp[:, H:2 * H])
        c_c = jnp.tanh(comp[:, 2 * H:])

        c_pre_t = jnp.concatenate([c_pre] * C, axis=-1)      # (B, CH)
        cells = ig_all * ci_all + (1.0 - ig_all) * c_pre_t   # (B, CH)

        # ---- ONE fused attention matmul (input_proj + block-diag cell_proj) -
        q_in = jnp.concatenate([c_c, cells], axis=-1).astype(jnp.bfloat16)
        sc = jnp.tanh(jnp.dot(q_in, w2, preferred_element_type=jnp.float32))
        prod = sc * v                                         # (B, 2CH) on VPU
        scores = jnp.concatenate(
            [jnp.sum(prod[:, c * 2 * H:(c + 1) * 2 * H], axis=-1, keepdims=True)
             for c in range(C)], axis=-1)                     # (B, C)

        m = jnp.max(scores, axis=-1, keepdims=True)
        e = jnp.exp(scores - m)
        probs = e * pl.reciprocal(jnp.sum(e, axis=-1, keepdims=True), approx=True)

        atten = jnp.zeros_like(c_pre)
        for c in range(C):
            atten = atten + probs[:, c:c + 1] * cells[:, c * H:(c + 1) * H]

        c_new = (1.0 - i_gate) * c_pre + i_gate * atten
        h_new = o_gate * jnp.tanh(c_new)

        h_out_ref[tt] = h_new.astype(h_out_ref.dtype)
        cell_out_ref[tt] = cells.astype(cell_out_ref.dtype)
        probs_out_ref[tt] = probs.astype(probs_out_ref.dtype)
        return (h_new, c_new)

    carry0 = (h_state[...], c_state[...])
    h_fin, c_fin = lax.fori_loop(0, TB, step, carry0, unroll=True)
    h_state[...] = h_fin
    c_state[...] = c_fin


def _pack_params(params, input_size, hidden_size, cell_num,
                 weight_dtype=jnp.bfloat16):
    """Fuse the module's weights into two wide matrices (built once, bf16)."""
    I, H, C = input_size, hidden_size, cell_num
    CH = C * H
    wx_g, wh_g, bx_g = params["wx_g"], params["wh_g"], params["bx_g"]

    def stack_cols(w, lo, hi, rows):
        # (C, rows, hi-lo) -> (rows, C*(hi-lo)), cell-major along the lane axis.
        return jnp.transpose(w[:, :, lo:hi], (1, 0, 2)).reshape(rows, CH)

    # W1 columns: [per-cell input gates | per-cell candidates | composition 3H]
    w1 = jnp.concatenate([
        jnp.concatenate([stack_cols(wx_g, 0, H, I),
                         stack_cols(wx_g, H, 2 * H, I),
                         params["wx_c"]], axis=1),
        jnp.concatenate([stack_cols(wh_g, 0, H, H),
                         stack_cols(wh_g, H, 2 * H, H),
                         params["wh_c"]], axis=1),
    ], axis=0)                                                 # (I+H, 2CH+3H)
    b1 = jnp.concatenate([stack_cols(bx_g, 0, H, 1),
                          stack_cols(bx_g, H, 2 * H, 1),
                          params["bx_c"]], axis=1)             # (1, 2CH+3H)

    # W2 rows [0:H]       : input_proj replicated into every cell's 2H block
    #    rows [H+c*H:...] : cell_proj into cell c's 2H block only (block-diag)
    w2_top = jnp.tile(params["w_iproj"], (1, C))               # (H, 2CH)
    eye_c = jnp.eye(C, dtype=params["w_cproj"].dtype)
    w2_bot = jnp.einsum("cd,ho->chdo", eye_c,
                        params["w_cproj"]).reshape(CH, 2 * CH)
    w2 = jnp.concatenate([w2_top, w2_bot], axis=0)             # (H+CH, 2CH)

    v_tiled = jnp.tile(params["atten_v"][:, 0][None, :], (1, C))  # (1, 2CH)
    return (w1.astype(weight_dtype), b1.astype(jnp.float32),
            w2.astype(weight_dtype), v_tiled.astype(jnp.float32))


def multicell_lstm(x, mask, params, hidden_size, cell_num, *, time_block=16):
    """Pallas forward of _MultiCellLSTM (left2right=True; mask unused there)."""
    del mask  # unused on the left2right=True path, same as the PyTorch module
    B, T, I = x.shape
    H, C = hidden_size, cell_num
    CH = C * H

    TB = min(time_block, T)
    n_blocks = -(-T // TB)
    T_pad = n_blocks * TB

    x_t = jnp.transpose(x, (1, 0, 2))                 # (T, B, I) time-major
    if T_pad != T:
        x_t = jnp.pad(x_t, ((0, T_pad - T), (0, 0), (0, 0)))

    w1, b1, w2, v = _pack_params(params, I, H, C)
    N1 = 2 * CH + 3 * H

    kernel = functools.partial(multicell_lstm_kernel,
                               hidden_size=H, cell_num=C, time_block=TB)

    grid_spec = pltpu.PrefetchScalarGridSpec(
        num_scalar_prefetch=0,
        grid=(n_blocks,),
        in_specs=[
            pl.BlockSpec((TB, B, I), lambda b: (b, 0, 0)),
            # Resident weights (constant index_map -> never re-DMA'd).
            # TODO(synk): on v7x with large H/I/C, add pipeline_mode=pl.Buffered(1)
            # to these specs (and keep vmem_limit_bytes explicit) to drop the
            # unused second weight buffer inside the 64 MiB VMEM budget; at the
            # small sizes here the weights are a few tens of KiB so it is moot.
            pl.BlockSpec((I + H, N1), lambda b: (0, 0)),
            pl.BlockSpec((1, N1), lambda b: (0, 0)),
            pl.BlockSpec((H + CH, 2 * CH), lambda b: (0, 0)),
            pl.BlockSpec((1, 2 * CH), lambda b: (0, 0)),
        ],
        out_specs=[
            pl.BlockSpec((TB, B, H), lambda b: (b, 0, 0)),
            pl.BlockSpec((TB, B, CH), lambda b: (b, 0, 0)),
            pl.BlockSpec((TB, B, C), lambda b: (b, 0, 0)),
        ],
        scratch_shapes=[
            pltpu.VMEM((B, H), jnp.float32),   # hidden_states carry
            pltpu.VMEM((B, H), jnp.float32),   # cell_state_c carry
        ],
    )

    h_seq, cell_seq, probs_seq = pl.pallas_call(
        kernel,
        out_shape=(
            jax.ShapeDtypeStruct((T_pad, B, H), x.dtype),
            jax.ShapeDtypeStruct((T_pad, B, CH), x.dtype),
            jax.ShapeDtypeStruct((T_pad, B, C), x.dtype),
        ),
        grid_spec=grid_spec,
        compiler_params=pltpu.CompilerParams(
            dimension_semantics=("arbitrary",),   # recurrence: sequential grid
            vmem_limit_bytes=32 * 1024 * 1024,
        ),
    )(x_t, w1, b1, w2, v)

    hidden = jnp.transpose(h_seq[:T], (1, 0, 2))                       # (B, T, H)
    cells = jnp.transpose(cell_seq[:T], (1, 0, 2)).reshape(B, T, C, H)  # (B, T, C, H)
    probs = jnp.transpose(probs_seq[:T], (1, 0, 2))                    # (B, T, C)
    return hidden, cells, probs


def multicell_lstm_ref(x, params, H, C):
    """Pure-JAX reference, mirroring the PyTorch math step by step."""
    B, T, I = x.shape

    def step(carry, x_t):
        h, c_pre = carry
        # Composition_Cell
        net_c = x_t @ params["wx_c"] + h @ params["wh_c"] + params["bx_c"]
        i_gate = jax.nn.sigmoid(net_c[:, :H])
        o_gate = jax.nn.sigmoid(net_c[:, H:2 * H])
        c_c = jnp.tanh(net_c[:, 2 * H:])
        # Compute_Gate
        net_g = (jnp.einsum("bi,cio->bco", x_t, params["wx_g"])
                 + jnp.einsum("bh,cho->bco", h, params["wh_g"])
                 + params["bx_g"][:, 0, :][None])
        ig = jax.nn.sigmoid(net_g[..., :H])
        ci = jnp.tanh(net_g[..., H:])
        cells = ig * ci + (1.0 - ig) * c_pre[:, None, :]
        # Compute_Add_Attention
        net_in = c_c @ params["w_iproj"]
        net_cell = jnp.einsum("bch,ho->bco", cells, params["w_cproj"])
        sc = jnp.tanh(net_in[:, None, :] + net_cell)
        scores = jnp.einsum("bco,o->bc", sc, params["atten_v"][:, 0])
        probs = jax.nn.softmax(scores, axis=1)
        atten = jnp.einsum("bc,bch->bh", probs, cells)
        c_new = (1.0 - i_gate) * c_pre + i_gate * atten
        h_new = o_gate * jnp.tanh(c_new)
        return (h_new, c_new), (h_new, cells, probs)

    init = (jnp.zeros((B, H), x.dtype), jnp.zeros((B, H), x.dtype))
    _, (hs, cs, ps) = jax.lax.scan(step, init, jnp.transpose(x, (1, 0, 2)))
    return (jnp.transpose(hs, (1, 0, 2)),
            jnp.transpose(cs, (1, 0, 2, 3)),
            jnp.transpose(ps, (1, 0, 2)))


def init_params(key, input_size, hidden_size, cell_num):
    H, I, C = hidden_size, input_size, cell_num
    ks = jax.random.split(key, 9)
    s = 0.1
    return {
        "wx_g": s * jax.random.normal(ks[0], (C, I, 2 * H), jnp.float32),
        "bx_g": s * jax.random.normal(ks[1], (C, 1, 2 * H), jnp.float32),
        "wh_g": s * jax.random.normal(ks[2], (C, H, 2 * H), jnp.float32),
        "wx_c": s * jax.random.normal(ks[3], (I, 3 * H), jnp.float32),
        "bx_c": s * jax.random.normal(ks[4], (1, 3 * H), jnp.float32),
        "wh_c": s * jax.random.normal(ks[5], (H, 3 * H), jnp.float32),
        "w_iproj": s * jax.random.normal(ks[6], (H, 2 * H), jnp.float32),
        "w_cproj": s * jax.random.normal(ks[7], (H, 2 * H), jnp.float32),
        "atten_v": s * jax.random.normal(ks[8], (2 * H, 1), jnp.float32),
    }


# TODO(synk): the left2right=False branch (masked_select / masked_scatter
# sequence reversal) is data-dependent gather/scatter glue and is not
# implemented; only the default left2right=True path is covered.

if __name__ == "__main__":
    B, T, I, H, C = 2, 8, 32, 32, 4

    key = jax.random.PRNGKey(0)
    k_x, k_p = jax.random.split(key)
    x = jax.random.normal(k_x, (B, T, I), jnp.float32)
    mask = jnp.ones((B, T), jnp.bool_)
    params = init_params(k_p, I, H, C)

    hidden_seq, cell_seq, probs_seq = multicell_lstm(x, mask, params, H, C)
    jax.block_until_ready((hidden_seq, cell_seq, probs_seq))

    # Reference at high matmul precision (context-local; no global config).
    with jax.default_matmul_precision("highest"):
        h_ref, c_ref, p_ref = multicell_lstm_ref(x, params, H, C)
    jax.block_until_ready((h_ref, c_ref, p_ref))

    assert hidden_seq.shape == (B, T, H)
    assert cell_seq.shape == (B, T, C, H)
    assert probs_seq.shape == (B, T, C)
    # Kernel runs bf16 MXU matmuls with f32 accumulation / f32 recurrent state.
    assert jnp.allclose(hidden_seq, h_ref, atol=2e-2, rtol=2e-2)
    assert jnp.allclose(cell_seq, c_ref, atol=2e-2, rtol=2e-2)
    assert jnp.allclose(probs_seq, p_ref, atol=2e-2, rtol=2e-2)

    print("KERNEL_OK")
</pallas_src>

<mosaic_0001>
module attributes {stable_mosaic.version = 11 : i64} {
  func.func @multicell_lstm_kernel(%arg0: i32, %arg1: memref<8x2x32xf32, #tpu.memory_space<vmem>>, %arg2: memref<64x352xbf16, #tpu.memory_space<vmem>>, %arg3: memref<1x352xf32, #tpu.memory_space<vmem>>, %arg4: memref<160x256xbf16, #tpu.memory_space<vmem>>, %arg5: memref<1x256xf32, #tpu.memory_space<vmem>>, %arg6: memref<8x2x32xf32, #tpu.memory_space<vmem>>, %arg7: memref<8x2x128xf32, #tpu.memory_space<vmem>>, %arg8: memref<8x2x4xf32, #tpu.memory_space<vmem>>, %arg9: memref<2x32xf32, #tpu.memory_space<vmem>>, %arg10: memref<2x32xf32, #tpu.memory_space<vmem>>) attributes {dimension_semantics = [#tpu.dimension_semantics<arbitrary>], iteration_bounds = array<i64: 1>, scalar_prefetch = 0 : i64, scratch_operands = 2 : i64, tpu.core_type = #tpu.core_type<tc>, window_params = [{transform_indices = @transform_0, window_bounds = array<i64: 8, 2, 32>}, {pipeline_mode = #tpu.pipeline_mode<synchronous>, transform_indices = @transform_1, window_bounds = array<i64: 64, 352>}, {pipeline_mode = #tpu.pipeline_mode<synchronous>, transform_indices = @transform_2, window_bounds = array<i64: 1, 352>}, {pipeline_mode = #tpu.pipeline_mode<synchronous>, transform_indices = @transform_3, window_bounds = array<i64: 160, 256>}, {pipeline_mode = #tpu.pipeline_mode<synchronous>, transform_indices = @transform_4, window_bounds = array<i64: 1, 256>}, {transform_indices = @transform_5, window_bounds = array<i64: 8, 2, 32>}, {transform_indices = @transform_6, window_bounds = array<i64: 8, 2, 128>}, {transform_indices = @transform_7, window_bounds = array<i64: 8, 2, 4>}]} {
    %c0_i32 = arith.constant 0 : i32
    %0 = arith.cmpi eq, %arg0, %c0_i32 : i32
    %1 = arith.extui %0 : i1 to i32
    %c0_i32_0 = arith.constant 0 : i32
    %2 = arith.cmpi ne, %1, %c0_i32_0 : i32
    scf.if %2 {
      %cst_192 = arith.constant 0.000000e+00 : f32
      %859 = vector.broadcast %cst_192 : f32 to vector<2x32xf32>
      %c0_193 = arith.constant 0 : index
      %c0_194 = arith.constant 0 : index
      %860 = vector.load %arg9[%c0_193, %c0_194] : memref<2x32xf32, #tpu.memory_space<vmem>>, vector<2x32xf32>
      tpu.vector_store %arg9[%c0_193, %c0_194], %859 {strides = array<i32>} : memref<2x32xf32, #tpu.memory_space<vmem>>, vector<2x32xf32>,
      %cst_195 = arith.constant 0.000000e+00 : f32
      %861 = vector.broadcast %cst_195 : f32 to vector<2x32xf32>
      %c0_196 = arith.constant 0 : index
      %c0_197 = arith.constant 0 : index
      %862 = vector.load %arg10[%c0_196, %c0_197] : memref<2x32xf32, #tpu.memory_space<vmem>>, vector<2x32xf32>
      tpu.vector_store %arg10[%c0_196, %c0_197], %861 {strides = array<i32>} : memref<2x32xf32, #tpu.memory_space<vmem>>, vector<2x32xf32>,
    } else {
    }
    %c0 = arith.constant 0 : index
    %c0_1 = arith.constant 0 : index
    %3 = vector.load %arg2[%c0, %c0_1] : memref<64x352xbf16, #tpu.memory_space<vmem>>, vector<64x352xbf16>
    %c0_2 = arith.constant 0 : index
    %c0_3 = arith.constant 0 : index
    %4 = vector.load %arg3[%c0_2, %c0_3] : memref<1x352xf32, #tpu.memory_space<vmem>>, vector<1x352xf32>
    %c0_4 = arith.constant 0 : index
    %c0_5 = arith.constant 0 : index
    %5 = vector.load %arg4[%c0_4, %c0_5] : memref<160x256xbf16, #tpu.memory_space<vmem>>, vector<160x256xbf16>
    %c0_6 = arith.constant 0 : index
    %c0_7 = arith.constant 0 : index
    %6 = vector.load %arg5[%c0_6, %c0_7] : memref<1x256xf32, #tpu.memory_space<vmem>>, vector<1x256xf32>
    %c0_8 = arith.constant 0 : index
    %c0_9 = arith.constant 0 : index
    %7 = vector.load %arg9[%c0_8, %c0_9] : memref<2x32xf32, #tpu.memory_space<vmem>>, vector<2x32xf32>
    %c0_10 = arith.constant 0 : index
    %c0_11 = arith.constant 0 : index
    %8 = vector.load %arg10[%c0_10, %c0_11] : memref<2x32xf32, #tpu.memory_space<vmem>>, vector<2x32xf32>
    %c0_i32_12 = arith.constant 0 : i32
    %9 = arith.index_cast %c0_i32_12 : i32 to index
    %c0_13 = arith.constant 0 : index
    %c0_14 = arith.constant 0 : index
    %10 = vector.load %arg1[%9, %c0_13, %c0_14] : memref<8x2x32xf32, #tpu.memory_space<vmem>>, vector<1x2x32xf32>
    %11 = vector.shape_cast %10 : vector<1x2x32xf32> to vector<2x32xf32>
    %12 = tpu.concatenate %11, %7 in 1 : vector<2x32xf32>, vector<2x32xf32> -> vector<2x64xf32>
    %13 = arith.truncf %12 : vector<2x64xf32> to vector<2x64xbf16>
    %cst = arith.constant dense<0.000000e+00> : vector<2x352xf32>
    %14 = tpu.matmul %13, %3, %cst {dimension_numbers = #tpu.dot_dimension_numbers<[1], [0], [0], [1], [0, 0, 1, 1], [], []>} : vector<2x64xbf16>, vector<64x352xbf16>, vector<2x352xf32> -> vector<2x352xf32>
    %15 = vector.broadcast %4 : vector<1x352xf32> to vector<2x352xf32>
    %16 = arith.addf %14, %15 : vector<2x352xf32>
    %17 = vector.extract_strided_slice %16 {offsets = [0, 0], sizes = [2, 128], strides = [1, 1]} : vector<2x352xf32> to vector<2x128xf32>
    %18 = arith.negf %17 : vector<2x128xf32>
    %19 = math.exp %18 : vector<2x128xf32>
    %cst_15 = arith.constant 1.000000e+00 : f32
    %20 = vector.broadcast %cst_15 : f32 to vector<2x128xf32>
    %21 = arith.addf %20, %19 : vector<2x128xf32>
    %22 = arith.divf %20, %21 : vector<2x128xf32>
    %23 = vector.extract_strided_slice %16 {offsets = [0, 128], sizes = [2, 128], strides = [1, 1]} : vector<2x352xf32> to vector<2x128xf32>
    %24 = math.tanh %23 : vector<2x128xf32>
    %25 = vector.extract_strided_slice %16 {offsets = [0, 256], sizes = [2, 96], strides = [1, 1]} : vector<2x352xf32> to vector<2x96xf32>
    %26 = vector.extract_strided_slice %25 {offsets = [0, 0], sizes = [2, 32], strides = [1, 1]} : vector<2x96xf32> to vector<2x32xf32>
    %27 = arith.negf %26 : vector<2x32xf32>
    %28 = math.exp %27 : vector<2x32xf32>
    %cst_16 = arith.constant 1.000000e+00 : f32
    %29 = vector.broadcast %cst_16 : f32 to vector<2x32xf32>
    %30 = arith.addf %29, %28 : vector<2x32xf32>
    %31 = arith.divf %29, %30 : vector<2x32xf32>
    %32 = vector.extract_strided_slice %25 {offsets = [0, 32], sizes = [2, 32], strides = [1, 1]} : vector<2x96xf32> to vector<2x32xf32>
    %33 = arith.negf %32 : vector<2x32xf32>
    %34 = math.exp %33 : vector<2x32xf32>
    %cst_17 = arith.constant 1.000000e+00 : f32
    %35 = vector.broadcast %cst_17 : f32 to vector<2x32xf32>
    %36 = arith.addf %35, %34 : vector<2x32xf32>
    %37 = arith.divf %35, %36 : vector<2x32xf32>
    %38 = vector.extract_strided_slice %25 {offsets = [0, 64], sizes = [2, 32], strides = [1, 1]} : vector<2x96xf32> to vector<2x32xf32>
    %39 = math.tanh %38 : vector<2x32xf32>
    %40 = tpu.concatenate %8, %8, %8, %8 in 1 : vector<2x32xf32>, vector<2x32xf32>, vector<2x32xf32>, vector<2x32xf32> -> vector<2x128xf32>
    %41 = arith.mulf %22, %24 : vector<2x128xf32>
    %cst_18 = arith.constant 1.000000e+00 : f32
    %42 = vector.broadcast %cst_18 : f32 to vector<2x128xf32>
    %43 = arith.subf %42, %22 : vector<2x128xf32>
    %44 = arith.mulf %43, %40 : vector<2x128xf32>
    %45 = arith.addf %41, %44 : vector<2x128xf32>
    %46 = tpu.concatenate %39, %45 in 1 : vector<2x32xf32>, vector<2x128xf32> -> vector<2x160xf32>
    %47 = arith.truncf %46 : vector<2x160xf32> to vector<2x160xbf16>
    %cst_19 = arith.constant dense<0.000000e+00> : vector<2x256xf32>
    %48 = tpu.matmul %47, %5, %cst_19 {dimension_numbers = #tpu.dot_dimension_numbers<[1], [0], [0], [1], [0, 0, 1, 1], [], []>} : vector<2x160xbf16>, vector<160x256xbf16>, vector<2x256xf32> -> vector<2x256xf32>
    %49 = math.tanh %48 : vector<2x256xf32>
    %50 = vector.broadcast %6 : vector<1x256xf32> to vector<2x256xf32>
    %51 = arith.mulf %49, %50 : vector<2x256xf32>
    %52 = vector.extract_strided_slice %51 {offsets = [0, 0], sizes = [2, 64], strides = [1, 1]} : vector<2x256xf32> to vector<2x64xf32>
    %cst_20 = arith.constant dense<0.000000e+00> : vector<2xf32>
    %53 = vector.multi_reduction <add>, %52, %cst_20 [1] : vector<2x64xf32> to vector<2xf32>
    %54 = vector.shape_cast %53 : vector<2xf32> to vector<2x1xf32>
    %55 = vector.extract_strided_slice %51 {offsets = [0, 64], sizes = [2, 64], strides = [1, 1]} : vector<2x256xf32> to vector<2x64xf32>
    %cst_21 = arith.constant dense<0.000000e+00> : vector<2xf32>
    %56 = vector.multi_reduction <add>, %55, %cst_21 [1] : vector<2x64xf32> to vector<2xf32>
    %57 = vector.shape_cast %56 : vector<2xf32> to vector<2x1xf32>
    %58 = vector.extract_strided_slice %51 {offsets = [0, 128], sizes = [2, 64], strides = [1, 1]} : vector<2x256xf32> to vector<2x64xf32>
    %cst_22 = arith.constant dense<0.000000e+00> : vector<2xf32>
    %59 = vector.multi_reduction <add>, %58, %cst_22 [1] : vector<2x64xf32> to vector<2xf32>
    %60 = vector.shape_cast %59 : vector<2xf32> to vector<2x1xf32>
    %61 = vector.extract_strided_slice %51 {offsets = [0, 192], sizes = [2, 64], strides = [1, 1]} : vector<2x256xf32> to vector<2x64xf32>
    %cst_23 = arith.constant dense<0.000000e+00> : vector<2xf32>
    %62 = vector.multi_reduction <add>, %61, %cst_23 [1] : vector<2x64xf32> to vector<2xf32>
    %63 = vector.shape_cast %62 : vector<2xf32> to vector<2x1xf32>
    %64 = tpu.concatenate %54, %57, %60, %63 in 1 : vector<2x1xf32>, vector<2x1xf32>, vector<2x1xf32>, vector<2x1xf32> -> vector<2x4xf32>
    %cst_24 = arith.constant dense<0xFF800000> : vector<2xf32>
    %65 = vector.multi_reduction <maximumf>, %64, %cst_24 [1] : vector<2x4xf32> to vector<2xf32>
    %66 = vector.shape_cast %65 : vector<2xf32> to vector<2x1xf32>
    %67 = vector.broadcast %66 : vector<2x1xf32> to vector<2x4xf32>
    %68 = arith.subf %64, %67 : vector<2x4xf32>
    %69 = math.exp %68 : vector<2x4xf32>
    %cst_25 = arith.constant dense<0.000000e+00> : vector<2xf32>
    %70 = vector.multi_reduction <add>, %69, %cst_25 [1] : vector<2x4xf32> to vector<2xf32>
    %71 = vector.shape_cast %70 : vector<2xf32> to vector<2x1xf32>
    %72 = tpu.reciprocal %71 {approx = true} : vector<2x1xf32> -> vector<2x1xf32>
    %73 = vector.broadcast %72 : vector<2x1xf32> to vector<2x4xf32>
    %74 = arith.mulf %69, %73 : vector<2x4xf32>
    %cst_26 = arith.constant 0.000000e+00 : f32
    %75 = vector.broadcast %cst_26 : f32 to vector<2x32xf32>
    %76 = vector.extract_strided_slice %74 {offsets = [0, 0], sizes = [2, 1], strides = [1, 1]} : vector<2x4xf32> to vector<2x1xf32>
    %77 = vector.extract_strided_slice %45 {offsets = [0, 0], sizes = [2, 32], strides = [1, 1]} : vector<2x128xf32> to vector<2x32xf32>
    %78 = vector.broadcast %76 : vector<2x1xf32> to vector<2x32xf32>
    %79 = arith.mulf %78, %77 : vector<2x32xf32>
    %80 = arith.addf %75, %79 : vector<2x32xf32>
    %81 = vector.extract_strided_slice %74 {offsets = [0, 1], sizes = [2, 1], strides = [1, 1]} : vector<2x4xf32> to vector<2x1xf32>
    %82 = vector.extract_strided_slice %45 {offsets = [0, 32], sizes = [2, 32], strides = [1, 1]} : vector<2x128xf32> to vector<2x32xf32>
    %83 = vector.broadcast %81 : vector<2x1xf32> to vector<2x32xf32>
    %84 = arith.mulf %83, %82 : vector<2x32xf32>
    %85 = arith.addf %80, %84 : vector<2x32xf32>
    %86 = vector.extract_strided_slice %74 {offsets = [0, 2], sizes = [2, 1], strides = [1, 1]} : vector<2x4xf32> to vector<2x1xf32>
    %87 = vector.extract_strided_slice %45 {offsets = [0, 64], sizes = [2, 32], strides = [1, 1]} : vector<2x128xf32> to vector<2x32xf32>
    %88 = vector.broadcast %86 : vector<2x1xf32> to vector<2x32xf32>
    %89 = arith.mulf %88, %87 : vector<2x32xf32>
    %90 = arith.addf %85, %89 : vector<2x32xf32>
    %91 = vector.extract_strided_slice %74 {offsets = [0, 3], sizes = [2, 1], strides = [1, 1]} : vector<2x4xf32> to vector<2x1xf32>
    %92 = vector.extract_strided_slice %45 {offsets = [0, 96], sizes = [2, 32], strides = [1, 1]} : vector<2x128xf32> to vector<2x32xf32>
    %93 = vector.broadcast %91 : vector<2x1xf32> to vector<2x32xf32>
    %94 = arith.mulf %93, %92 : vector<2x32xf32>
    %95 = arith.addf %90, %94 : vector<2x32xf32>
    %cst_27 = arith.constant 1.000000e+00 : f32
    %96 = vector.broadcast %cst_27 : f32 to vector<2x32xf32>
    %97 = arith.subf %96, %31 : vector<2x32xf32>
    %98 = arith.mulf %97, %8 : vector<2x32xf32>
    %99 = arith.mulf %31, %95 : vector<2x32xf32>
    %100 = arith.addf %98, %99 : vector<2x32xf32>
    %101 = math.tanh %100 : vector<2x32xf32>
    %102 = arith.mulf %37, %101 : vector<2x32xf32>
    %103 = arith.index_cast %c0_i32_12 : i32 to index
    %c0_28 = arith.constant 0 : index
    %c0_29 = arith.constant 0 : index
    %104 = vector.load %arg6[%103, %c0_28, %c0_29] : memref<8x2x32xf32, #tpu.memory_space<vmem>>, vector<1x2x32xf32>
    %105 = vector.shape_cast %104 : vector<1x2x32xf32> to vector<2x32xf32>
    %106 = vector.shape_cast %102 : vector<2x32xf32> to vector<1x2x32xf32>
    tpu.vector_store %arg6[%103, %c0_28, %c0_29], %106 {strides = array<i32>} : memref<8x2x32xf32, #tpu.memory_space<vmem>>, vector<1x2x32xf32>,
    %107 = arith.index_cast %c0_i32_12 : i32 to index
    %c0_30 = arith.constant 0 : index
    %c0_31 = arith.constant 0 : index
    %108 = vector.load %arg7[%107, %c0_30, %c0_31] : memref<8x2x128xf32, #tpu.memory_space<vmem>>, vector<1x2x128xf32>
    %109 = vector.shape_cast %108 : vector<1x2x128xf32> to vector<2x128xf32>
    %110 = vector.shape_cast %45 : vector<2x128xf32> to vector<1x2x128xf32>
    tpu.vector_store %arg7[%107, %c0_30, %c0_31], %110 {strides = array<i32>} : memref<8x2x128xf32, #tpu.memory_space<vmem>>, vector<1x2x128xf32>,
    %111 = arith.index_cast %c0_i32_12 : i32 to index
    %c0_32 = arith.constant 0 : index
    %c0_33 = arith.constant 0 : index
    %112 = vector.load %arg8[%111, %c0_32, %c0_33] : memref<8x2x4xf32, #tpu.memory_space<vmem>>, vector<1x2x4xf32>
    %113 = vector.shape_cast %112 : vector<1x2x4xf32> to vector<2x4xf32>
    %114 = vector.shape_cast %74 : vector<2x4xf32> to vector<1x2x4xf32>
    tpu.vector_store %arg8[%111, %c0_32, %c0_33], %114 {strides = array<i32>} : memref<8x2x4xf32, #tpu.memory_space<vmem>>, vector<1x2x4xf32>,
    %c1_i32 = arith.constant 1 : i32
    %115 = arith.index_cast %c1_i32 : i32 to index
    %c0_34 = arith.constant 0 : index
    %c0_35 = arith.constant 0 : index
    %116 = vector.load %arg1[%115, %c0_34, %c0_35] : memref<8x2x32xf32, #tpu.memory_space<vmem>>, vector<1x2x32xf32>
    %117 = vector.shape_cast %116 : vector<1x2x32xf32> to vector<2x32xf32>
    %118 = tpu.concatenate %117, %102 in 1 : vector<2x32xf32>, vector<2x32xf32> -> vector<2x64xf32>
    %119 = arith.truncf %118 : vector<2x64xf32> to vector<2x64xbf16>
    %cst_36 = arith.constant dense<0.000000e+00> : vector<2x352xf32>
    %120 = tpu.matmul %119, %3, %cst_36 {dimension_numbers = #tpu.dot_dimension_numbers<[1], [0], [0], [1], [0, 0, 1, 1], [], []>} : vector<2x64xbf16>, vector<64x352xbf16>, vector<2x352xf32> -> vector<2x352xf32>
    %121 = vector.broadcast %4 : vector<1x352xf32> to vector<2x352xf32>
    %122 = arith.addf %120, %121 : vector<2x352xf32>
    %123 = vector.extract_strided_slice %122 {offsets = [0, 0], sizes = [2, 128], strides = [1, 1]} : vector<2x352xf32> to vector<2x128xf32>
    %124 = arith.negf %123 : vector<2x128xf32>
    %125 = math.exp %124 : vector<2x128xf32>
    %cst_37 = arith.constant 1.000000e+00 : f32
    %126 = vector.broadcast %cst_37 : f32 to vector<2x128xf32>
    %127 = arith.addf %126, %125 : vector<2x128xf32>
    %128 = arith.divf %126, %127 : vector<2x128xf32>
    %129 = vector.extract_strided_slice %122 {offsets = [0, 128], sizes = [2, 128], strides = [1, 1]} : vector<2x352xf32> to vector<2x128xf32>
    %130 = math.tanh %129 : vector<2x128xf32>
    %131 = vector.extract_strided_slice %122 {offsets = [0, 256], sizes = [2, 96], strides = [1, 1]} : vector<2x352xf32> to vector<2x96xf32>
    %132 = vector.extract_strided_slice %131 {offsets = [0, 0], sizes = [2, 32], strides = [1, 1]} : vector<2x96xf32> to vector<2x32xf32>
    %133 = arith.negf %132 : vector<2x32xf32>
    %134 = math.exp %133 : vector<2x32xf32>
    %cst_38 = arith.constant 1.000000e+00 : f32
    %135 = vector.broadcast %cst_38 : f32 to vector<2x32xf32>
    %136 = arith.addf %135, %134 : vector<2x32xf32>
    %137 = arith.divf %135, %136 : vector<2x32xf32>
    %138 = vector.extract_strided_slice %131 {offsets = [0, 32], sizes = [2, 32], strides = [1, 1]} : vector<2x96xf32> to vector<2x32xf32>
    %139 = arith.negf %138 : vector<2x32xf32>
    %140 = math.exp %139 : vector<2x32xf32>
    %cst_39 = arith.constant 1.000000e+00 : f32
    %141 = vector.broadcast %cst_39 : f32 to vector<2x32xf32>
    %142 = arith.addf %141, %140 : vector<2x32xf32>
    %143 = arith.divf %141, %142 : vector<2x32xf32>
    %144 = vector.extract_strided_slice %131 {offsets = [0, 64], sizes = [2, 32], strides = [1, 1]} : vector<2x96xf32> to vector<2x32xf32>
    %145 = math.tanh %144 : vector<2x32xf32>
    %146 = tpu.concatenate %100, %100, %100, %100 in 1 : vector<2x32xf32>, vector<2x32xf32>, vector<2x32xf32>, vector<2x32xf32> -> vector<2x128xf32>
    %147 = arith.mulf %128, %130 : vector<2x128xf32>
    %cst_40 = arith.constant 1.000000e+00 : f32
    %148 = vector.broadcast %cst_40 : f32 to vector<2x128xf32>
    %149 = arith.subf %148, %128 : vector<2x128xf32>
    %150 = arith.mulf %149, %146 : vector<2x128xf32>
    %151 = arith.addf %147, %150 : vector<2x128xf32>
    %152 = tpu.concatenate %145, %151 in 1 : vector<2x32xf32>, vector<2x128xf32> -> vector<2x160xf32>
    %153 = arith.truncf %152 : vector<2x160xf32> to vector<2x160xbf16>
    %cst_41 = arith.constant dense<0.000000e+00> : vector<2x256xf32>
    %154 = tpu.matmul %153, %5, %cst_41 {dimension_numbers = #tpu.dot_dimension_numbers<[1], [0], [0], [1], [0, 0, 1, 1], [], []>} : vector<2x160xbf16>, vector<160x256xbf16>, vector<2x256xf32> -> vector<2x256xf32>
    %155 = math.tanh %154 : vector<2x256xf32>
    %156 = vector.broadcast %6 : vector<1x256xf32> to vector<2x256xf32>
    %157 = arith.mulf %155, %156 : vector<2x256xf32>
    %158 = vector.extract_strided_slice %157 {offsets = [0, 0], sizes = [2, 64], strides = [1, 1]} : vector<2x256xf32> to vector<2x64xf32>
    %cst_42 = arith.constant dense<0.000000e+00> : vector<2xf32>
    %159 = vector.multi_reduction <add>, %158, %cst_42 [1] : vector<2x64xf32> to vector<2xf32>
    %160 = vector.shape_cast %159 : vector<2xf32> to vector<2x1xf32>
    %161 = vector.extract_strided_slice %157 {offsets = [0, 64], sizes = [2, 64], strides = [1, 1]} : vector<2x256xf32> to vector<2x64xf32>
    %cst_43 = arith.constant dense<0.000000e+00> : vector<2xf32>
    %162 = vector.multi_reduction <add>, %161, %cst_43 [1] : vector<2x64xf32> to vector<2xf32>
    %163 = vector.shape_cast %162 : vector<2xf32> to vector<2x1xf32>
    %164 = vector.extract_strided_slice %157 {offsets = [0, 128], sizes = [2, 64], strides = [1, 1]} : vector<2x256xf32> to vector<2x64xf32>
    %cst_44 = arith.constant dense<0.000000e+00> : vector<2xf32>
    %165 = vector.multi_reduction <add>, %164, %cst_44 [1] : vector<2x64xf32> to vector<2xf32>
    %166 = vector.shape_cast %165 : vector<2xf32> to vector<2x1xf32>
    %167 = vector.extract_strided_slice %157 {offsets = [0, 192], sizes = [2, 64], strides = [1, 1]} : vector<2x256xf32> to vector<2x64xf32>
    %cst_45 = arith.constant dense<0.000000e+00> : vector<2xf32>
    %168 = vector.multi_reduction <add>, %167, %cst_45 [1] : vector<2x64xf32> to vector<2xf32>
    %169 = vector.shape_cast %168 : vector<2xf32> to vector<2x1xf32>
    %170 = tpu.concatenate %160, %163, %166, %169 in 1 : vector<2x1xf32>, vector<2x1xf32>, vector<2x1xf32>, vector<2x1xf32> -> vector<2x4xf32>
    %cst_46 = arith.constant dense<0xFF800000> : vector<2xf32>
    %171 = vector.multi_reduction <maximumf>, %170, %cst_46 [1] : vector<2x4xf32> to vector<2xf32>
    %172 = vector.shape_cast %171 : vector<2xf32> to vector<2x1xf32>
    %173 = vector.broadcast %172 : vector<2x1xf32> to vector<2x4xf32>
    %174 = arith.subf %170, %173 : vector<2x4xf32>
    %175 = math.exp %174 : vector<2x4xf32>
    %cst_47 = arith.constant dense<0.000000e+00> : vector<2xf32>
    %176 = vector.multi_reduction <add>, %175, %cst_47 [1] : vector<2x4xf32> to vector<2xf32>
    %177 = vector.shape_cast %176 : vector<2xf32> to vector<2x1xf32>
    %178 = tpu.reciprocal %177 {approx = true} : vector<2x1xf32> -> vector<2x1xf32>
    %179 = vector.broadcast %178 : vector<2x1xf32> to vector<2x4xf32>
    %180 = arith.mulf %175, %179 : vector<2x4xf32>
    %cst_48 = arith.constant 0.000000e+00 : f32
    %181 = vector.broadcast %cst_48 : f32 to vector<2x32xf32>
    %182 = vector.extract_strided_slice %180 {offsets = [0, 0], sizes = [2, 1], strides = [1, 1]} : vector<2x4xf32> to vector<2x1xf32>
    %183 = vector.extract_strided_slice %151 {offsets = [0, 0], sizes = [2, 32], strides = [1, 1]} : vector<2x128xf32> to vector<2x32xf32>
    %184 = vector.broadcast %182 : vector<2x1xf32> to vector<2x32xf32>
    %185 = arith.mulf %184, %183 : vector<2x32xf32>
    %186 = arith.addf %181, %185 : vector<2x32xf32>
    %187 = vector.extract_strided_slice %180 {offsets = [0, 1], sizes = [2, 1], strides = [1, 1]} : vector<2x4xf32> to vector<2x1xf32>
    %188 = vector.extract_strided_slice %151 {offsets = [0, 32], sizes = [2, 32], strides = [1, 1]} : vector<2x128xf32> to vector<2x32xf32>
    %189 = vector.broadcast %187 : vector<2x1xf32> to vector<2x32xf32>
    %190 = arith.mulf %189, %188 : vector<2x32xf32>
    %191 = arith.addf %186, %190 : vector<2x32xf32>
    %192 = vector.extract_strided_slice %180 {offsets = [0, 2], sizes = [2, 1], strides = [1, 1]} : vector<2x4xf32> to vector<2x1xf32>
    %193 = vector.extract_strided_slice %151 {offsets = [0, 64], sizes = [2, 32], strides = [1, 1]} : vector<2x128xf32> to vector<2x32xf32>
    %194 = vector.broadcast %192 : vector<2x1xf32> to vector<2x32xf32>
    %195 = arith.mulf %194, %193 : vector<2x32xf32>
    %196 = arith.addf %191, %195 : vector<2x32xf32>
    %197 = vector.extract_strided_slice %180 {offsets = [0, 3], sizes = [2, 1], strides = [1, 1]} : vector<2x4xf32> to vector<2x1xf32>
    %198 = vector.extract_strided_slice %151 {offsets = [0, 96], sizes = [2, 32], strides = [1, 1]} : vector<2x128xf32> to vector<2x32xf32>
    %199 = vector.broadcast %197 : vector<2x1xf32> to vector<2x32xf32>
    %200 = arith.mulf %199, %198 : vector<2x32xf32>
    %201 = arith.addf %196, %200 : vector<2x32xf32>
    %cst_49 = arith.constant 1.000000e+00 : f32
    %202 = vector.broadcast %cst_49 : f32 to vector<2x32xf32>
    %203 = arith.subf %202, %137 : vector<2x32xf32>
    %204 = arith.mulf %203, %100 : vector<2x32xf32>
    %205 = arith.mulf %137, %201 : vector<2x32xf32>
    %206 = arith.addf %204, %205 : vector<2x32xf32>
    %207 = math.tanh %206 : vector<2x32xf32>
    %208 = arith.mulf %143, %207 : vector<2x32xf32>
    %209 = arith.index_cast %c1_i32 : i32 to index
    %c0_50 = arith.constant 0 : index
    %c0_51 = arith.constant 0 : index
    %210 = vector.load %arg6[%209, %c0_50, %c0_51] : memref<8x2x32xf32, #tpu.memory_space<vmem>>, vector<1x2x32xf32>
    %211 = vector.shape_cast %210 : vector<1x2x32xf32> to vector<2x32xf32>
    %212 = vector.shape_cast %208 : vector<2x32xf32> to vector<1x2x32xf32>
    tpu.vector_store %arg6[%209, %c0_50, %c0_51], %212 {strides = array<i32>} : memref<8x2x32xf32, #tpu.memory_space<vmem>>, vector<1x2x32xf32>,
    %213 = arith.index_cast %c1_i32 : i32 to index
    %c0_52 = arith.constant 0 : index
    %c0_53 = arith.constant 0 : index
    %214 = vector.load %arg7[%213, %c0_52, %c0_53] : memref<8x2x128xf32, #tpu.memory_space<vmem>>, vector<1x2x128xf32>
    %215 = vector.shape_cast %214 : vector<1x2x128xf32> to vector<2x128xf32>
    %216 = vector.shape_cast %151 : vector<2x128xf32> to vector<1x2x128xf32>
    tpu.vector_store %arg7[%213, %c0_52, %c0_53], %216 {strides = array<i32>} : memref<8x2x128xf32, #tpu.memory_space<vmem>>, vector<1x2x128xf32>,
    %217 = arith.index_cast %c1_i32 : i32 to index
    %c0_54 = arith.constant 0 : index
    %c0_55 = arith.constant 0 : index
    %218 = vector.load %arg8[%217, %c0_54, %c0_55] : memref<8x2x4xf32, #tpu.memory_space<vmem>>, vector<1x2x4xf32>
    %219 = vector.shape_cast %218 : vector<1x2x4xf32> to vector<2x4xf32>
    %220 = vector.shape_cast %180 : vector<2x4xf32> to vector<1x2x4xf32>
    tpu.vector_store %arg8[%217, %c0_54, %c0_55], %220 {strides = array<i32>} : memref<8x2x4xf32, #tpu.memory_space<vmem>>, vector<1x2x4xf32>,
    %c2_i32 = arith.constant 2 : i32
    %221 = arith.index_cast %c2_i32 : i32 to index
    %c0_56 = arith.constant 0 : index
    %c0_57 = arith.constant 0 : index
    %222 = vector.load %arg1[%221, %c0_56, %c0_57] : memref<8x2x32xf32, #tpu.memory_space<vmem>>, vector<1x2x32xf32>
    %223 = vector.shape_cast %222 : vector<1x2x32xf32> to vector<2x32xf32>
    %224 = tpu.concatenate %223, %208 in 1 : vector<2x32xf32>, vector<2x32xf32> -> vector<2x64xf32>
    %225 = arith.truncf %224 : vector<2x64xf32> to vector<2x64xbf16>
    %cst_58 = arith.constant dense<0.000000e+00> : vector<2x352xf32>
    %226 = tpu.matmul %225, %3, %cst_58 {dimension_numbers = #tpu.dot_dimension_numbers<[1], [0], [0], [1], [0, 0, 1, 1], [], []>} : vector<2x64xbf16>, vector<64x352xbf16>, vector<2x352xf32> -> vector<2x352xf32>
    %227 = vector.broadcast %4 : vector<1x352xf32> to vector<2x352xf32>
    %228 = arith.addf %226, %227 : vector<2x352xf32>
    %229 = vector.extract_strided_slice %228 {offsets = [0, 0], sizes = [2, 128], strides = [1, 1]} : vector<2x352xf32> to vector<2x128xf32>
    %230 = arith.negf %229 : vector<2x128xf32>
    %231 = math.exp %230 : vector<2x128xf32>
    %cst_59 = arith.constant 1.000000e+00 : f32
    %232 = vector.broadcast %cst_59 : f32 to vector<2x128xf32>
    %233 = arith.addf %232, %231 : vector<2x128xf32>
    %234 = arith.divf %232, %233 : vector<2x128xf32>
    %235 = vector.extract_strided_slice %228 {offsets = [0, 128], sizes = [2, 128], strides = [1, 1]} : vector<2x352xf32> to vector<2x128xf32>
    %236 = math.tanh %235 : vector<2x128xf32>
    %237 = vector.extract_strided_slice %228 {offsets = [0, 256], sizes = [2, 96], strides = [1, 1]} : vector<2x352xf32> to vector<2x96xf32>
    %238 = vector.extract_strided_slice %237 {offsets = [0, 0], sizes = [2, 32], strides = [1, 1]} : vector<2x96xf32> to vector<2x32xf32>
    %239 = arith.negf %238 : vector<2x32xf32>
    %240 = math.exp %239 : vector<2x32xf32>
    %cst_60 = arith.constant 1.000000e+00 : f32
    %241 = vector.broadcast %cst_60 : f32 to vector<2x32xf32>
    %242 = arith.addf %241, %240 : vector<2x32xf32>
    %243 = arith.divf %241, %242 : vector<2x32xf32>
    %244 = vector.extract_strided_slice %237 {offsets = [0, 32], sizes = [2, 32], strides = [1, 1]} : vector<2x96xf32> to vector<2x32xf32>
    %245 = arith.negf %244 : vector<2x32xf32>
    %246 = math.exp %245 : vector<2x32xf32>
    %cst_61 = arith.constant 1.000000e+00 : f32
    %247 = vector.broadcast %cst_61 : f32 to vector<2x32xf32>
    %248 = arith.addf %247, %246 : vector<2x32xf32>
    %249 = arith.divf %247, %248 : vector<2x32xf32>
    %250 = vector.extract_strided_slice %237 {offsets = [0, 64], sizes = [2, 32], strides = [1, 1]} : vector<2x96xf32> to vector<2x32xf32>
    %251 = math.tanh %250 : vector<2x32xf32>
    %252 = tpu.concatenate %206, %206, %206, %206 in 1 : vector<2x32xf32>, vector<2x32xf32>, vector<2x32xf32>, vector<2x32xf32> -> vector<2x128xf32>
    %253 = arith.mulf %234, %236 : vector<2x128xf32>
    %cst_62 = arith.constant 1.000000e+00 : f32
    %254 = vector.broadcast %cst_62 : f32 to vector<2x128xf32>
    %255 = arith.subf %254, %234 : vector<2x128xf32>
    %256 = arith.mulf %255, %252 : vector<2x128xf32>
    %257 = arith.addf %253, %256 : vector<2x128xf32>
    %258 = tpu.concatenate %251, %257 in 1 : vector<2x32xf32>, vector<2x128xf32> -> vector<2x160xf32>
    %259 = arith.truncf %258 : vector<2x160xf32> to vector<2x160xbf16>
    %cst_63 = arith.constant dense<0.000000e+00> : vector<2x256xf32>
    %260 = tpu.matmul %259, %5, %cst_63 {dimension_numbers = #tpu.dot_dimension_numbers<[1], [0], [0], [1], [0, 0, 1, 1], [], []>} : vector<2x160xbf16>, vector<160x256xbf16>, vector<2x256xf32> -> vector<2x256xf32>
    %261 = math.tanh %260 : vector<2x256xf32>
    %262 = vector.broadcast %6 : vector<1x256xf32> to vector<2x256xf32>
    %263 = arith.mulf %261, %262 : vector<2x256xf32>
    %264 = vector.extract_strided_slice %263 {offsets = [0, 0], sizes = [2, 64], strides = [1, 1]} : vector<2x256xf32> to vector<2x64xf32>
    %cst_64 = arith.constant dense<0.000000e+00> : vector<2xf32>
    %265 = vector.multi_reduction <add>, %264, %cst_64 [1] : vector<2x64xf32> to vector<2xf32>
    %266 = vector.shape_cast %265 : vector<2xf32> to vector<2x1xf32>
    %267 = vector.extract_strided_slice %263 {offsets = [0, 64], sizes = [2, 64], strides = [1, 1]} : vector<2x256xf32> to vector<2x64xf32>
    %cst_65 = arith.constant dense<0.000000e+00> : vector<2xf32>
    %268 = vector.multi_reduction <add>, %267, %cst_65 [1] : vector<2x64xf32> to vector<2xf32>
    %269 = vector.shape_cast %268 : vector<2xf32> to vector<2x1xf32>
    %270 = vector.extract_strided_slice %263 {offsets = [0, 128], sizes = [2, 64], strides = [1, 1]} : vector<2x256xf32> to vector<2x64xf32>
    %cst_66 = arith.constant dense<0.000000e+00> : vector<2xf32>
    %271 = vector.multi_reduction <add>, %270, %cst_66 [1] : vector<2x64xf32> to vector<2xf32>
    %272 = vector.shape_cast %271 : vector<2xf32> to vector<2x1xf32>
    %273 = vector.extract_strided_slice %263 {offsets = [0, 192], sizes = [2, 64], strides = [1, 1]} : vector<2x256xf32> to vector<2x64xf32>
    %cst_67 = arith.constant dense<0.000000e+00> : vector<2xf32>
    %274 = vector.multi_reduction <add>, %273, %cst_67 [1] : vector<2x64xf32> to vector<2xf32>
    %275 = vector.shape_cast %274 : vector<2xf32> to vector<2x1xf32>
    %276 = tpu.concatenate %266, %269, %272, %275 in 1 : vector<2x1xf32>, vector<2x1xf32>, vector<2x1xf32>, vector<2x1xf32> -> vector<2x4xf32>
    %cst_68 = arith.constant dense<0xFF800000> : vector<2xf32>
    %277 = vector.multi_reduction <maximumf>, %276, %cst_68 [1] : vector<2x4xf32> to vector<2xf32>
    %278 = vector.shape_cast %277 : vector<2xf32> to vector<2x1xf32>
    %279 = vector.broadcast %278 : vector<2x1xf32> to vector<2x4xf32>
    %280 = arith.subf %276, %279 : vector<2x4xf32>
    %281 = math.exp %280 : vector<2x4xf32>
    %cst_69 = arith.constant dense<0.000000e+00> : vector<2xf32>
    %282 = vector.multi_reduction <add>, %281, %cst_69 [1] : vector<2x4xf32> to vector<2xf32>
    %283 = vector.shape_cast %282 : vector<2xf32> to vector<2x1xf32>
    %284 = tpu.reciprocal %283 {approx = true} : vector<2x1xf32> -> vector<2x1xf32>
    %285 = vector.broadcast %284 : vector<2x1xf32> to vector<2x4xf32>
    %286 = arith.mulf %281, %285 : vector<2x4xf32>
    %cst_70 = arith.constant 0.000000e+00 : f32
    %287 = vector.broadcast %cst_70 : f32 to vector<2x32xf32>
    %288 = vector.extract_strided_slice %286 {offsets = [0, 0], sizes = [2, 1], strides = [1, 1]} : vector<2x4xf32> to vector<2x1xf32>
    %289 = vector.extract_strided_slice %257 {offsets = [0, 0], sizes = [2, 32], strides = [1, 1]} : vector<2x128xf32> to vector<2x32xf32>
    %290 = vector.broadcast %288 : vector<2x1xf32> to vector<2x32xf32>
    %291 = arith.mulf %290, %289 : vector<2x32xf32>
    %292 = arith.addf %287, %291 : vector<2x32xf32>
    %293 = vector.extract_strided_slice %286 {offsets = [0, 1], sizes = [2, 1], strides = [1, 1]} : vector<2x4xf32> to vector<2x1xf32>
    %294 = vector.extract_strided_slice %257 {offsets = [0, 32], sizes = [2, 32], strides = [1, 1]} : vector<2x128xf32> to vector<2x32xf32>
    %295 = vector.broadcast %293 : vector<2x1xf32> to vector<2x32xf32>
    %296 = arith.mulf %295, %294 : vector<2x32xf32>
    %297 = arith.addf %292, %296 : vector<2x32xf32>
    %298 = vector.extract_strided_slice %286 {offsets = [0, 2], sizes = [2, 1], strides = [1, 1]} : vector<2x4xf32> to vector<2x1xf32>
    %299 = vector.extract_strided_slice %257 {offsets = [0, 64], sizes = [2, 32], strides = [1, 1]} : vector<2x128xf32> to vector<2x32xf32>
    %300 = vector.broadcast %298 : vector<2x1xf32> to vector<2x32xf32>
    %301 = arith.mulf %300, %299 : vector<2x32xf32>
    %302 = arith.addf %297, %301 : vector<2x32xf32>
    %303 = vector.extract_strided_slice %286 {offsets = [0, 3], sizes = [2, 1], strides = [1, 1]} : vector<2x4xf32> to vector<2x1xf32>
    %304 = vector.extract_strided_slice %257 {offsets = [0, 96], sizes = [2, 32], strides = [1, 1]} : vector<2x128xf32> to vector<2x32xf32>
    %305 = vector.broadcast %303 : vector<2x1xf32> to vector<2x32xf32>
    %306 = arith.mulf %305, %304 : vector<2x32xf32>
    %307 = arith.addf %302, %306 : vector<2x32xf32>
    %cst_71 = arith.constant 1.000000e+00 : f32
    %308 = vector.broadcast %cst_71 : f32 to vector<2x32xf32>
    %309 = arith.subf %308, %243 : vector<2x32xf32>
    %310 = arith.mulf %309, %206 : vector<2x32xf32>
    %311 = arith.mulf %243, %307 : vector<2x32xf32>
    %312 = arith.addf %310, %311 : vector<2x32xf32>
    %313 = math.tanh %312 : vector<2x32xf32>
    %314 = arith.mulf %249, %313 : vector<2x32xf32>
    %315 = arith.index_cast %c2_i32 : i32 to index
    %c0_72 = arith.constant 0 : index
    %c0_73 = arith.constant 0 : index
    %316 = vector.load %arg6[%315, %c0_72, %c0_73] : memref<8x2x32xf32, #tpu.memory_space<vmem>>, vector<1x2x32xf32>
    %317 = vector.shape_cast %316 : vector<1x2x32xf32> to vector<2x32xf32>
    %318 = vector.shape_cast %314 : vector<2x32xf32> to vector<1x2x32xf32>
    tpu.vector_store %arg6[%315, %c0_72, %c0_73], %318 {strides = array<i32>} : memref<8x2x32xf32, #tpu.memory_space<vmem>>, vector<1x2x32xf32>,
    %319 = arith.index_cast %c2_i32 : i32 to index
    %c0_74 = arith.constant 0 : index
    %c0_75 = arith.constant 0 : index
    %320 = vector.load %arg7[%319, %c0_74, %c0_75] : memref<8x2x128xf32, #tpu.memory_space<vmem>>, vector<1x2x128xf32>
    %321 = vector.shape_cast %320 : vector<1x2x128xf32> to vector<2x128xf32>
    %322 = vector.shape_cast %257 : vector<2x128xf32> to vector<1x2x128xf32>
    tpu.vector_store %arg7[%319, %c0_74, %c0_75], %322 {strides = array<i32>} : memref<8x2x128xf32, #tpu.memory_space<vmem>>, vector<1x2x128xf32>,
    %323 = arith.index_cast %c2_i32 : i32 to index
    %c0_76 = arith.constant 0 : index
    %c0_77 = arith.constant 0 : index
    %324 = vector.load %arg8[%323, %c0_76, %c0_77] : memref<8x2x4xf32, #tpu.memory_space<vmem>>, vector<1x2x4xf32>
    %325 = vector.shape_cast %324 : vector<1x2x4xf32> to vector<2x4xf32>
    %326 = vector.shape_cast %286 : vector<2x4xf32> to vector<1x2x4xf32>
    tpu.vector_store %arg8[%323, %c0_76, %c0_77], %326 {strides = array<i32>} : memref<8x2x4xf32, #tpu.memory_space<vmem>>, vector<1x2x4xf32>,
    %c3_i32 = arith.constant 3 : i32
    %327 = arith.index_cast %c3_i32 : i32 to index
    %c0_78 = arith.constant 0 : index
    %c0_79 = arith.constant 0 : index
    %328 = vector.load %arg1[%327, %c0_78, %c0_79] : memref<8x2x32xf32, #tpu.memory_space<vmem>>, vector<1x2x32xf32>
    %329 = vector.shape_cast %328 : vector<1x2x32xf32> to vector<2x32xf32>
    %330 = tpu.concatenate %329, %314 in 1 : vector<2x32xf32>, vector<2x32xf32> -> vector<2x64xf32>
    %331 = arith.truncf %330 : vector<2x64xf32> to vector<2x64xbf16>
    %cst_80 = arith.constant dense<0.000000e+00> : vector<2x352xf32>
    %332 = tpu.matmul %331, %3, %cst_80 {dimension_numbers = #tpu.dot_dimension_numbers<[1], [0], [0], [1], [0, 0, 1, 1], [], []>} : vector<2x64xbf16>, vector<64x352xbf16>, vector<2x352xf32> -> vector<2x352xf32>
    %333 = vector.broadcast %4 : vector<1x352xf32> to vector<2x352xf32>
    %334 = arith.addf %332, %333 : vector<2x352xf32>
    %335 = vector.extract_strided_slice %334 {offsets = [0, 0], sizes = [2, 128], strides = [1, 1]} : vector<2x352xf32> to vector<2x128xf32>
    %336 = arith.negf %335 : vector<2x128xf32>
    %337 = math.exp %336 : vector<2x128xf32>
    %cst_81 = arith.constant 1.000000e+00 : f32
    %338 = vector.broadcast %cst_81 : f32 to vector<2x128xf32>
    %339 = arith.addf %338, %337 : vector<2x128xf32>
    %340 = arith.divf %338, %339 : vector<2x128xf32>
    %341 = vector.extract_strided_slice %334 {offsets = [0, 128], sizes = [2, 128], strides = [1, 1]} : vector<2x352xf32> to vector<2x128xf32>
    %342 = math.tanh %341 : vector<2x128xf32>
    %343 = vector.extract_strided_slice %334 {offsets = [0, 256], sizes = [2, 96], strides = [1, 1]} : vector<2x352xf32> to vector<2x96xf32>
    %344 = vector.extract_strided_slice %343 {offsets = [0, 0], sizes = [2, 32], strides = [1, 1]} : vector<2x96xf32> to vector<2x32xf32>
    %345 = arith.negf %344 : vector<2x32xf32>
    %346 = math.exp %345 : vector<2x32xf32>
    %cst_82 = arith.constant 1.000000e+00 : f32
    %347 = vector.broadcast %cst_82 : f32 to vector<2x32xf32>
    %348 = arith.addf %347, %346 : vector<2x32xf32>
    %349 = arith.divf %347, %348 : vector<2x32xf32>
    %350 = vector.extract_strided_slice %343 {offsets = [0, 32], sizes = [2, 32], strides = [1, 1]} : vector<2x96xf32> to vector<2x32xf32>
    %351 = arith.negf %350 : vector<2x32xf32>
    %352 = math.exp %351 : vector<2x32xf32>
    %cst_83 = arith.constant 1.000000e+00 : f32
    %353 = vector.broadcast %cst_83 : f32 to vector<2x32xf32>
    %354 = arith.addf %353, %352 : vector<2x32xf32>
    %355 = arith.divf %353, %354 : vector<2x32xf32>
    %356 = vector.extract_strided_slice %343 {offsets = [0, 64], sizes = [2, 32], strides = [1, 1]} : vector<2x96xf32> to vector<2x32xf32>
    %357 = math.tanh %356 : vector<2x32xf32>
    %358 = tpu.concatenate %312, %312, %312, %312 in 1 : vector<2x32xf32>, vector<2x32xf32>, vector<2x32xf32>, vector<2x32xf32> -> vector<2x128xf32>
    %359 = arith.mulf %340, %342 : vector<2x128xf32>
    %cst_84 = arith.constant 1.000000e+00 : f32
    %360 = vector.broadcast %cst_84 : f32 to vector<2x128xf32>
    %361 = arith.subf %360, %340 : vector<2x128xf32>
    %362 = arith.mulf %361, %358 : vector<2x128xf32>
    %363 = arith.addf %359, %362 : vector<2x128xf32>
    %364 = tpu.concatenate %357, %363 in 1 : vector<2x32xf32>, vector<2x128xf32> -> vector<2x160xf32>
    %365 = arith.truncf %364 : vector<2x160xf32> to vector<2x160xbf16>
    %cst_85 = arith.constant dense<0.000000e+00> : vector<2x256xf32>
    %366 = tpu.matmul %365, %5, %cst_85 {dimension_numbers = #tpu.dot_dimension_numbers<[1], [0], [0], [1], [0, 0, 1, 1], [], []>} : vector<2x160xbf16>, vector<160x256xbf16>, vector<2x256xf32> -> vector<2x256xf32>
    %367 = math.tanh %366 : vector<2x256xf32>
    %368 = vector.broadcast %6 : vector<1x256xf32> to vector<2x256xf32>
    %369 = arith.mulf %367, %368 : vector<2x256xf32>
    %370 = vector.extract_strided_slice %369 {offsets = [0, 0], sizes = [2, 64], strides = [1, 1]} : vector<2x256xf32> to vector<2x64xf32>
    %cst_86 = arith.constant dense<0.000000e+00> : vector<2xf32>
    %371 = vector.multi_reduction <add>, %370, %cst_86 [1] : vector<2x64xf32> to vector<2xf32>
    %372 = vector.shape_cast %371 : vector<2xf32> to vector<2x1xf32>
    %373 = vector.extract_strided_slice %369 {offsets = [0, 64], sizes = [2, 64], strides = [1, 1]} : vector<2x256xf32> to vector<2x64xf32>
    %cst_87 = arith.constant dense<0.000000e+00> : vector<2xf32>
    %374 = vector.multi_reduction <add>, %373, %cst_87 [1] : vector<2x64xf32> to vector<2xf32>
    %375 = vector.shape_cast %374 : vector<2xf32> to vector<2x1xf32>
    %376 = vector.extract_strided_slice %369 {offsets = [0, 128], sizes = [2, 64], strides = [1, 1]} : vector<2x256xf32> to vector<2x64xf32>
    %cst_88 = arith.constant dense<0.000000e+00> : vector<2xf32>
    %377 = vector.multi_reduction <add>, %376, %cst_88 [1] : vector<2x64xf32> to vector<2xf32>
    %378 = vector.shape_cast %377 : vector<2xf32> to vector<2x1xf32>
    %379 = vector.extract_strided_slice %369 {offsets = [0, 192], sizes = [2, 64], strides = [1, 1]} : vector<2x256xf32> to vector<2x64xf32>
    %cst_89 = arith.constant dense<0.000000e+00> : vector<2xf32>
    %380 = vector.multi_reduction <add>, %379, %cst_89 [1] : vector<2x64xf32> to vector<2xf32>
    %381 = vector.shape_cast %380 : vector<2xf32> to vector<2x1xf32>
    %382 = tpu.concatenate %372, %375, %378, %381 in 1 : vector<2x1xf32>, vector<2x1xf32>, vector<2x1xf32>, vector<2x1xf32> -> vector<2x4xf32>
    %cst_90 = arith.constant dense<0xFF800000> : vector<2xf32>
    %383 = vector.multi_reduction <maximumf>, %382, %cst_90 [1] : vector<2x4xf32> to vector<2xf32>
    %384 = vector.shape_cast %383 : vector<2xf32> to vector<2x1xf32>
    %385 = vector.broadcast %384 : vector<2x1xf32> to vector<2x4xf32>
    %386 = arith.subf %382, %385 : vector<2x4xf32>
    %387 = math.exp %386 : vector<2x4xf32>
    %cst_91 = arith.constant dense<0.000000e+00> : vector<2xf32>
    %388 = vector.multi_reduction <add>, %387, %cst_91 [1] : vector<2x4xf32> to vector<2xf32>
    %389 = vector.shape_cast %388 : vector<2xf32> to vector<2x1xf32>
    %390 = tpu.reciprocal %389 {approx = true} : vector<2x1xf32> -> vector<2x1xf32>
    %391 = vector.broadcast %390 : vector<2x1xf32> to vector<2x4xf32>
    %392 = arith.mulf %387, %391 : vector<2x4xf32>
    %cst_92 = arith.constant 0.000000e+00 : f32
    %393 = vector.broadcast %cst_92 : f32 to vector<2x32xf32>
    %394 = vector.extract_strided_slice %392 {offsets = [0, 0], sizes = [2, 1], strides = [1, 1]} : vector<2x4xf32> to vector<2x1xf32>
    %395 = vector.extract_strided_slice %363 {offsets = [0, 0], sizes = [2, 32], strides = [1, 1]} : vector<2x128xf32> to vector<2x32xf32>
    %396 = vector.broadcast %394 : vector<2x1xf32> to vector<2x32xf32>
    %397 = arith.mulf %396, %395 : vector<2x32xf32>
    %398 = arith.addf %393, %397 : vector<2x32xf32>
    %399 = vector.extract_strided_slice %392 {offsets = [0, 1], sizes = [2, 1], strides = [1, 1]} : vector<2x4xf32> to vector<2x1xf32>
    %400 = vector.extract_strided_slice %363 {offsets = [0, 32], sizes = [2, 32], strides = [1, 1]} : vector<2x128xf32> to vector<2x32xf32>
    %401 = vector.broadcast %399 : vector<2x1xf32> to vector<2x32xf32>
    %402 = arith.mulf %401, %400 : vector<2x32xf32>
    %403 = arith.addf %398, %402 : vector<2x32xf32>
    %404 = vector.extract_strided_slice %392 {offsets = [0, 2], sizes = [2, 1], strides = [1, 1]} : vector<2x4xf32> to vector<2x1xf32>
    %405 = vector.extract_strided_slice %363 {offsets = [0, 64], sizes = [2, 32], strides = [1, 1]} : vector<2x128xf32> to vector<2x32xf32>
    %406 = vector.broadcast %404 : vector<2x1xf32> to vector<2x32xf32>
    %407 = arith.mulf %406, %405 : vector<2x32xf32>
    %408 = arith.addf %403, %407 : vector<2x32xf32>
    %409 = vector.extract_strided_slice %392 {offsets = [0, 3], sizes = [2, 1], strides = [1, 1]} : vector<2x4xf32> to vector<2x1xf32>
    %410 = vector.extract_strided_slice %363 {offsets = [0, 96], sizes = [2, 32], strides = [1, 1]} : vector<2x128xf32> to vector<2x32xf32>
    %411 = vector.broadcast %409 : vector<2x1xf32> to vector<2x32xf32>
    %412 = arith.mulf %411, %410 : vector<2x32xf32>
    %413 = arith.addf %408, %412 : vector<2x32xf32>
    %cst_93 = arith.constant 1.000000e+00 : f32
    %414 = vector.broadcast %cst_93 : f32 to vector<2x32xf32>
    %415 = arith.subf %414, %349 : vector<2x32xf32>
    %416 = arith.mulf %415, %312 : vector<2x32xf32>
    %417 = arith.mulf %349, %413 : vector<2x32xf32>
    %418 = arith.addf %416, %417 : vector<2x32xf32>
    %419 = math.tanh %418 : vector<2x32xf32>
    %420 = arith.mulf %355, %419 : vector<2x32xf32>
    %421 = arith.index_cast %c3_i32 : i32 to index
    %c0_94 = arith.constant 0 : index
    %c0_95 = arith.constant 0 : index
    %422 = vector.load %arg6[%421, %c0_94, %c0_95] : memref<8x2x32xf32, #tpu.memory_space<vmem>>, vector<1x2x32xf32>
    %423 = vector.shape_cast %422 : vector<1x2x32xf32> to vector<2x32xf32>
    %424 = vector.shape_cast %420 : vector<2x32xf32> to vector<1x2x32xf32>
    tpu.vector_store %arg6[%421, %c0_94, %c0_95], %424 {strides = array<i32>} : memref<8x2x32xf32, #tpu.memory_space<vmem>>, vector<1x2x32xf32>,
    %425 = arith.index_cast %c3_i32 : i32 to index
    %c0_96 = arith.constant 0 : index
    %c0_97 = arith.constant 0 : index
    %426 = vector.load %arg7[%425, %c0_96, %c0_97] : memref<8x2x128xf32, #tpu.memory_space<vmem>>, vector<1x2x128xf32>
    %427 = vector.shape_cast %426 : vector<1x2x128xf32> to vector<2x128xf32>
    %428 = vector.shape_cast %363 : vector<2x128xf32> to vector<1x2x128xf32>
    tpu.vector_store %arg7[%425, %c0_96, %c0_97], %428 {strides = array<i32>} : memref<8x2x128xf32, #tpu.memory_space<vmem>>, vector<1x2x128xf32>,
    %429 = arith.index_cast %c3_i32 : i32 to index
    %c0_98 = arith.constant 0 : index
    %c0_99 = arith.constant 0 : index
    %430 = vector.load %arg8[%429, %c0_98, %c0_99] : memref<8x2x4xf32, #tpu.memory_space<vmem>>, vector<1x2x4xf32>
    %431 = vector.shape_cast %430 : vector<1x2x4xf32> to vector<2x4xf32>
    %432 = vector.shape_cast %392 : vector<2x4xf32> to vector<1x2x4xf32>
    tpu.vector_store %arg8[%429, %c0_98, %c0_99], %432 {strides = array<i32>} : memref<8x2x4xf32, #tpu.memory_space<vmem>>, vector<1x2x4xf32>,
    %c4_i32 = arith.constant 4 : i32
    %433 = arith.index_cast %c4_i32 : i32 to index
    %c0_100 = arith.constant 0 : index
    %c0_101 = arith.constant 0 : index
    %434 = vector.load %arg1[%433, %c0_100, %c0_101] : memref<8x2x32xf32, #tpu.memory_space<vmem>>, vector<1x2x32xf32>
    %435 = vector.shape_cast %434 : vector<1x2x32xf32> to vector<2x32xf32>
    %436 = tpu.concatenate %435, %420 in 1 : vector<2x32xf32>, vector<2x32xf32> -> vector<2x64xf32>
    %437 = arith.truncf %436 : vector<2x64xf32> to vector<2x64xbf16>
    %cst_102 = arith.constant dense<0.000000e+00> : vector<2x352xf32>
    %438 = tpu.matmul %437, %3, %cst_102 {dimension_numbers = #tpu.dot_dimension_numbers<[1], [0], [0], [1], [0, 0, 1, 1], [], []>} : vector<2x64xbf16>, vector<64x352xbf16>, vector<2x352xf32> -> vector<2x352xf32>
    %439 = vector.broadcast %4 : vector<1x352xf32> to vector<2x352xf32>
    %440 = arith.addf %438, %439 : vector<2x352xf32>
    %441 = vector.extract_strided_slice %440 {offsets = [0, 0], sizes = [2, 128], strides = [1, 1]} : vector<2x352xf32> to vector<2x128xf32>
    %442 = arith.negf %441 : vector<2x128xf32>
    %443 = math.exp %442 : vector<2x128xf32>
    %cst_103 = arith.constant 1.000000e+00 : f32
    %444 = vector.broadcast %cst_103 : f32 to vector<2x128xf32>
    %445 = arith.addf %444, %443 : vector<2x128xf32>
    %446 = arith.divf %444, %445 : vector<2x128xf32>
    %447 = vector.extract_strided_slice %440 {offsets = [0, 128], sizes = [2, 128], strides = [1, 1]} : vector<2x352xf32> to vector<2x128xf32>
    %448 = math.tanh %447 : vector<2x128xf32>
    %449 = vector.extract_strided_slice %440 {offsets = [0, 256], sizes = [2, 96], strides = [1, 1]} : vector<2x352xf32> to vector<2x96xf32>
    %450 = vector.extract_strided_slice %449 {offsets = [0, 0], sizes = [2, 32], strides = [1, 1]} : vector<2x96xf32> to vector<2x32xf32>
    %451 = arith.negf %450 : vector<2x32xf32>
    %452 = math.exp %451 : vector<2x32xf32>
    %cst_104 = arith.constant 1.000000e+00 : f32
    %453 = vector.broadcast %cst_104 : f32 to vector<2x32xf32>
    %454 = arith.addf %453, %452 : vector<2x32xf32>
    %455 = arith.divf %453, %454 : vector<2x32xf32>
    %456 = vector.extract_strided_slice %449 {offsets = [0, 32], sizes = [2, 32], strides = [1, 1]} : vector<2x96xf32> to vector<2x32xf32>
    %457 = arith.negf %456 : vector<2x32xf32>
    %458 = math.exp %457 : vector<2x32xf32>
    %cst_105 = arith.constant 1.000000e+00 : f32
    %459 = vector.broadcast %cst_105 : f32 to vector<2x32xf32>
    %460 = arith.addf %459, %458 : vector<2x32xf32>
    %461 = arith.divf %459, %460 : vector<2x32xf32>
    %462 = vector.extract_strided_slice %449 {offsets = [0, 64], sizes = [2, 32], strides = [1, 1]} : vector<2x96xf32> to vector<2x32xf32>
    %463 = math.tanh %462 : vector<2x32xf32>
    %464 = tpu.concatenate %418, %418, %418, %418 in 1 : vector<2x32xf32>, vector<2x32xf32>, vector<2x32xf32>, vector<2x32xf32> -> vector<2x128xf32>
    %465 = arith.mulf %446, %448 : vector<2x128xf32>
    %cst_106 = arith.constant 1.000000e+00 : f32
    %466 = vector.broadcast %cst_106 : f32 to vector<2x128xf32>
    %467 = arith.subf %466, %446 : vector<2x128xf32>
    %468 = arith.mulf %467, %464 : vector<2x128xf32>
    %469 = arith.addf %465, %468 : vector<2x128xf32>
    %470 = tpu.concatenate %463, %469 in 1 : vector<2x32xf32>, vector<2x128xf32> -> vector<2x160xf32>
    %471 = arith.truncf %470 : vector<2x160xf32> to vector<2x160xbf16>
    %cst_107 = arith.constant dense<0.000000e+00> : vector<2x256xf32>
    %472 = tpu.matmul %471, %5, %cst_107 {dimension_numbers = #tpu.dot_dimension_numbers<[1], [0], [0], [1], [0, 0, 1, 1], [], []>} : vector<2x160xbf16>, vector<160x256xbf16>, vector<2x256xf32> -> vector<2x256xf32>
    %473 = math.tanh %472 : vector<2x256xf32>
    %474 = vector.broadcast %6 : vector<1x256xf32> to vector<2x256xf32>
    %475 = arith.mulf %473, %474 : vector<2x256xf32>
    %476 = vector.extract_strided_slice %475 {offsets = [0, 0], sizes = [2, 64], strides = [1, 1]} : vector<2x256xf32> to vector<2x64xf32>
    %cst_108 = arith.constant dense<0.000000e+00> : vector<2xf32>
    %477 = vector.multi_reduction <add>, %476, %cst_108 [1] : vector<2x64xf32> to vector<2xf32>
    %478 = vector.shape_cast %477 : vector<2xf32> to vector<2x1xf32>
    %479 = vector.extract_strided_slice %475 {offsets = [0, 64], sizes = [2, 64], strides = [1, 1]} : vector<2x256xf32> to vector<2x64xf32>
    %cst_109 = arith.constant dense<0.000000e+00> : vector<2xf32>
    %480 = vector.multi_reduction <add>, %479, %cst_109 [1] : vector<2x64xf32> to vector<2xf32>
    %481 = vector.shape_cast %480 : vector<2xf32> to vector<2x1xf32>
    %482 = vector.extract_strided_slice %475 {offsets = [0, 128], sizes = [2, 64], strides = [1, 1]} : vector<2x256xf32> to vector<2x64xf32>
    %cst_110 = arith.constant dense<0.000000e+00> : vector<2xf32>
    %483 = vector.multi_reduction <add>, %482, %cst_110 [1] : vector<2x64xf32> to vector<2xf32>
    %484 = vector.shape_cast %483 : vector<2xf32> to vector<2x1xf32>
    %485 = vector.extract_strided_slice %475 {offsets = [0, 192], sizes = [2, 64], strides = [1, 1]} : vector<2x256xf32> to vector<2x64xf32>
    %cst_111 = arith.constant dense<0.000000e+00> : vector<2xf32>
    %486 = vector.multi_reduction <add>, %485, %cst_111 [1] : vector<2x64xf32> to vector<2xf32>
    %487 = vector.shape_cast %486 : vector<2xf32> to vector<2x1xf32>
    %488 = tpu.concatenate %478, %481, %484, %487 in 1 : vector<2x1xf32>, vector<2x1xf32>, vector<2x1xf32>, vector<2x1xf32> -> vector<2x4xf32>
    %cst_112 = arith.constant dense<0xFF800000> : vector<2xf32>
    %489 = vector.multi_reduction <maximumf>, %488, %cst_112 [1] : vector<2x4xf32> to vector<2xf32>
    %490 = vector.shape_cast %489 : vector<2xf32> to vector<2x1xf32>
    %491 = vector.broadcast %490 : vector<2x1xf32> to vector<2x4xf32>
    %492 = arith.subf %488, %491 : vector<2x4xf32>
    %493 = math.exp %492 : vector<2x4xf32>
    %cst_113 = arith.constant dense<0.000000e+00> : vector<2xf32>
    %494 = vector.multi_reduction <add>, %493, %cst_113 [1] : vector<2x4xf32> to vector<2xf32>
    %495 = vector.shape_cast %494 : vector<2xf32> to vector<2x1xf32>
    %496 = tpu.reciprocal %495 {approx = true} : vector<2x1xf32> -> vector<2x1xf32>
    %497 = vector.broadcast %496 : vector<2x1xf32> to vector<2x4xf32>
    %498 = arith.mulf %493, %497 : vector<2x4xf32>
    %cst_114 = arith.constant 0.000000e+00 : f32
    %499 = vector.broadcast %cst_114 : f32 to vector<2x32xf32>
    %500 = vector.extract_strided_slice %498 {offsets = [0, 0], sizes = [2, 1], strides = [1, 1]} : vector<2x4xf32> to vector<2x1xf32>
    %501 = vector.extract_strided_slice %469 {offsets = [0, 0], sizes = [2, 32], strides = [1, 1]} : vector<2x128xf32> to vector<2x32xf32>
    %502 = vector.broadcast %500 : vector<2x1xf32> to vector<2x32xf32>
    %503 = arith.mulf %502, %501 : vector<2x32xf32>
    %504 = arith.addf %499, %503 : vector<2x32xf32>
    %505 = vector.extract_strided_slice %498 {offsets = [0, 1], sizes = [2, 1], strides = [1, 1]} : vector<2x4xf32> to vector<2x1xf32>
    %506 = vector.extract_strided_slice %469 {offsets = [0, 32], sizes = [2, 32], strides = [1, 1]} : vector<2x128xf32> to vector<2x32xf32>
    %507 = vector.broadcast %505 : vector<2x1xf32> to vector<2x32xf32>
    %508 = arith.mulf %507, %506 : vector<2x32xf32>
    %509 = arith.addf %504, %508 : vector<2x32xf32>
    %510 = vector.extract_strided_slice %498 {offsets = [0, 2], sizes = [2, 1], strides = [1, 1]} : vector<2x4xf32> to vector<2x1xf32>
    %511 = vector.extract_strided_slice %469 {offsets = [0, 64], sizes = [2, 32], strides = [1, 1]} : vector<2x128xf32> to vector<2x32xf32>
    %512 = vector.broadcast %510 : vector<2x1xf32> to vector<2x32xf32>
    %513 = arith.mulf %512, %511 : vector<2x32xf32>
    %514 = arith.addf %509, %513 : vector<2x32xf32>
    %515 = vector.extract_strided_slice %498 {offsets = [0, 3], sizes = [2, 1], strides = [1, 1]} : vector<2x4xf32> to vector<2x1xf32>
    %516 = vector.extract_strided_slice %469 {offsets = [0, 96], sizes = [2, 32], strides = [1, 1]} : vector<2x128xf32> to vector<2x32xf32>
    %517 = vector.broadcast %515 : vector<2x1xf32> to vector<2x32xf32>
    %518 = arith.mulf %517, %516 : vector<2x32xf32>
    %519 = arith.addf %514, %518 : vector<2x32xf32>
    %cst_115 = arith.constant 1.000000e+00 : f32
    %520 = vector.broadcast %cst_115 : f32 to vector<2x32xf32>
    %521 = arith.subf %520, %455 : vector<2x32xf32>
    %522 = arith.mulf %521, %418 : vector<2x32xf32>
    %523 = arith.mulf %455, %519 : vector<2x32xf32>
    %524 = arith.addf %522, %523 : vector<2x32xf32>
    %525 = math.tanh %524 : vector<2x32xf32>
    %526 = arith.mulf %461, %525 : vector<2x32xf32>
    %527 = arith.index_cast %c4_i32 : i32 to index
    %c0_116 = arith.constant 0 : index
    %c0_117 = arith.constant 0 : index
    %528 = vector.load %arg6[%527, %c0_116, %c0_117] : memref<8x2x32xf32, #tpu.memory_space<vmem>>, vector<1x2x32xf32>
    %529 = vector.shape_cast %528 : vector<1x2x32xf32> to vector<2x32xf32>
    %530 = vector.shape_cast %526 : vector<2x32xf32> to vector<1x2x32xf32>
    tpu.vector_store %arg6[%527, %c0_116, %c0_117], %530 {strides = array<i32>} : memref<8x2x32xf32, #tpu.memory_space<vmem>>, vector<1x2x32xf32>,
    %531 = arith.index_cast %c4_i32 : i32 to index
    %c0_118 = arith.constant 0 : index
    %c0_119 = arith.constant 0 : index
    %532 = vector.load %arg7[%531, %c0_118, %c0_119] : memref<8x2x128xf32, #tpu.memory_space<vmem>>, vector<1x2x128xf32>
    %533 = vector.shape_cast %532 : vector<1x2x128xf32> to vector<2x128xf32>
    %534 = vector.shape_cast %469 : vector<2x128xf32> to vector<1x2x128xf32>
    tpu.vector_store %arg7[%531, %c0_118, %c0_119], %534 {strides = array<i32>} : memref<8x2x128xf32, #tpu.memory_space<vmem>>, vector<1x2x128xf32>,
    %535 = arith.index_cast %c4_i32 : i32 to index
    %c0_120 = arith.constant 0 : index
    %c0_121 = arith.constant 0 : index
    %536 = vector.load %arg8[%535, %c0_120, %c0_121] : memref<8x2x4xf32, #tpu.memory_space<vmem>>, vector<1x2x4xf32>
    %537 = vector.shape_cast %536 : vector<1x2x4xf32> to vector<2x4xf32>
    %538 = vector.shape_cast %498 : vector<2x4xf32> to vector<1x2x4xf32>
    tpu.vector_store %arg8[%535, %c0_120, %c0_121], %538 {strides = array<i32>} : memref<8x2x4xf32, #tpu.memory_space<vmem>>, vector<1x2x4xf32>,
    %c5_i32 = arith.constant 5 : i32
    %539 = arith.index_cast %c5_i32 : i32 to index
    %c0_122 = arith.constant 0 : index
    %c0_123 = arith.constant 0 : index
    %540 = vector.load %arg1[%539, %c0_122, %c0_123] : memref<8x2x32xf32, #tpu.memory_space<vmem>>, vector<1x2x32xf32>
    %541 = vector.shape_cast %540 : vector<1x2x32xf32> to vector<2x32xf32>
    %542 = tpu.concatenate %541, %526 in 1 : vector<2x32xf32>, vector<2x32xf32> -> vector<2x64xf32>
    %543 = arith.truncf %542 : vector<2x64xf32> to vector<2x64xbf16>
    %cst_124 = arith.constant dense<0.000000e+00> : vector<2x352xf32>
    %544 = tpu.matmul %543, %3, %cst_124 {dimension_numbers = #tpu.dot_dimension_numbers<[1], [0], [0], [1], [0, 0, 1, 1], [], []>} : vector<2x64xbf16>, vector<64x352xbf16>, vector<2x352xf32> -> vector<2x352xf32>
    %545 = vector.broadcast %4 : vector<1x352xf32> to vector<2x352xf32>
    %546 = arith.addf %544, %545 : vector<2x352xf32>
    %547 = vector.extract_strided_slice %546 {offsets = [0, 0], sizes = [2, 128], strides = [1, 1]} : vector<2x352xf32> to vector<2x128xf32>
    %548 = arith.negf %547 : vector<2x128xf32>
    %549 = math.exp %548 : vector<2x128xf32>
    %cst_125 = arith.constant 1.000000e+00 : f32
    %550 = vector.broadcast %cst_125 : f32 to vector<2x128xf32>
    %551 = arith.addf %550, %549 : vector<2x128xf32>
    %552 = arith.divf %550, %551 : vector<2x128xf32>
    %553 = vector.extract_strided_slice %546 {offsets = [0, 128], sizes = [2, 128], strides = [1, 1]} : vector<2x352xf32> to vector<2x128xf32>
    %554 = math.tanh %553 : vector<2x128xf32>
    %555 = vector.extract_strided_slice %546 {offsets = [0, 256], sizes = [2, 96], strides = [1, 1]} : vector<2x352xf32> to vector<2x96xf32>
    %556 = vector.extract_strided_slice %555 {offsets = [0, 0], sizes = [2, 32], strides = [1, 1]} : vector<2x96xf32> to vector<2x32xf32>
    %557 = arith.negf %556 : vector<2x32xf32>
    %558 = math.exp %557 : vector<2x32xf32>
    %cst_126 = arith.constant 1.000000e+00 : f32
    %559 = vector.broadcast %cst_126 : f32 to vector<2x32xf32>
    %560 = arith.addf %559, %558 : vector<2x32xf32>
    %561 = arith.divf %559, %560 : vector<2x32xf32>
    %562 = vector.extract_strided_slice %555 {offsets = [0, 32], sizes = [2, 32], strides = [1, 1]} : vector<2x96xf32> to vector<2x32xf32>
    %563 = arith.negf %562 : vector<2x32xf32>
    %564 = math.exp %563 : vector<2x32xf32>
    %cst_127 = arith.constant 1.000000e+00 : f32
    %565 = vector.broadcast %cst_127 : f32 to vector<2x32xf32>
    %566 = arith.addf %565, %564 : vector<2x32xf32>
    %567 = arith.divf %565, %566 : vector<2x32xf32>
    %568 = vector.extract_strided_slice %555 {offsets = [0, 64], sizes = [2, 32], strides = [1, 1]} : vector<2x96xf32> to vector<2x32xf32>
    %569 = math.tanh %568 : vector<2x32xf32>
    %570 = tpu.concatenate %524, %524, %524, %524 in 1 : vector<2x32xf32>, vector<2x32xf32>, vector<2x32xf32>, vector<2x32xf32> -> vector<2x128xf32>
    %571 = arith.mulf %552, %554 : vector<2x128xf32>
    %cst_128 = arith.constant 1.000000e+00 : f32
    %572 = vector.broadcast %cst_128 : f32 to vector<2x128xf32>
    %573 = arith.subf %572, %552 : vector<2x128xf32>
    %574 = arith.mulf %573, %570 : vector<2x128xf32>
    %575 = arith.addf %571, %574 : vector<2x128xf32>
    %576 = tpu.concatenate %569, %575 in 1 : vector<2x32xf32>, vector<2x128xf32> -> vector<2x160xf32>
    %577 = arith.truncf %576 : vector<2x160xf32> to vector<2x160xbf16>
    %cst_129 = arith.constant dense<0.000000e+00> : vector<2x256xf32>
    %578 = tpu.matmul %577, %5, %cst_129 {dimension_numbers = #tpu.dot_dimension_numbers<[1], [0], [0], [1], [0, 0, 1, 1], [], []>} : vector<2x160xbf16>, vector<160x256xbf16>, vector<2x256xf32> -> vector<2x256xf32>
    %579 = math.tanh %578 : vector<2x256xf32>
    %580 = vector.broadcast %6 : vector<1x256xf32> to vector<2x256xf32>
    %581 = arith.mulf %579, %580 : vector<2x256xf32>
    %582 = vector.extract_strided_slice %581 {offsets = [0, 0], sizes = [2, 64], strides = [1, 1]} : vector<2x256xf32> to vector<2x64xf32>
    %cst_130 = arith.constant dense<0.000000e+00> : vector<2xf32>
    %583 = vector.multi_reduction <add>, %582, %cst_130 [1] : vector<2x64xf32> to vector<2xf32>
    %584 = vector.shape_cast %583 : vector<2xf32> to vector<2x1xf32>
    %585 = vector.extract_strided_slice %581 {offsets = [0, 64], sizes = [2, 64], strides = [1, 1]} : vector<2x256xf32> to vector<2x64xf32>
    %cst_131 = arith.constant dense<0.000000e+00> : vector<2xf32>
    %586 = vector.multi_reduction <add>, %585, %cst_131 [1] : vector<2x64xf32> to vector<2xf32>
    %587 = vector.shape_cast %586 : vector<2xf32> to vector<2x1xf32>
    %588 = vector.extract_strided_slice %581 {offsets = [0, 128], sizes = [2, 64], strides = [1, 1]} : vector<2x256xf32> to vector<2x64xf32>
    %cst_132 = arith.constant dense<0.000000e+00> : vector<2xf32>
    %589 = vector.multi_reduction <add>, %588, %cst_132 [1] : vector<2x64xf32> to vector<2xf32>
    %590 = vector.shape_cast %589 : vector<2xf32> to vector<2x1xf32>
    %591 = vector.extract_strided_slice %581 {offsets = [0, 192], sizes = [2, 64], strides = [1, 1]} : vector<2x256xf32> to vector<2x64xf32>
    %cst_133 = arith.constant dense<0.000000e+00> : vector<2xf32>
    %592 = vector.multi_reduction <add>, %591, %cst_133 [1] : vector<2x64xf32> to vector<2xf32>
    %593 = vector.shape_cast %592 : vector<2xf32> to vector<2x1xf32>
    %594 = tpu.concatenate %584, %587, %590, %593 in 1 : vector<2x1xf32>, vector<2x1xf32>, vector<2x1xf32>, vector<2x1xf32> -> vector<2x4xf32>
    %cst_134 = arith.constant dense<0xFF800000> : vector<2xf32>
    %595 = vector.multi_reduction <maximumf>, %594, %cst_134 [1] : vector<2x4xf32> to vector<2xf32>
    %596 = vector.shape_cast %595 : vector<2xf32> to vector<2x1xf32>
    %597 = vector.broadcast %596 : vector<2x1xf32> to vector<2x4xf32>
    %598 = arith.subf %594, %597 : vector<2x4xf32>
    %599 = math.exp %598 : vector<2x4xf32>
    %cst_135 = arith.constant dense<0.000000e+00> : vector<2xf32>
    %600 = vector.multi_reduction <add>, %599, %cst_135 [1] : vector<2x4xf32> to vector<2xf32>
    %601 = vector.shape_cast %600 : vector<2xf32> to vector<2x1xf32>
    %602 = tpu.reciprocal %601 {approx = true} : vector<2x1xf32> -> vector<2x1xf32>
    %603 = vector.broadcast %602 : vector<2x1xf32> to vector<2x4xf32>
    %604 = arith.mulf %599, %603 : vector<2x4xf32>
    %cst_136 = arith.constant 0.000000e+00 : f32
    %605 = vector.broadcast %cst_136 : f32 to vector<2x32xf32>
    %606 = vector.extract_strided_slice %604 {offsets = [0, 0], sizes = [2, 1], strides = [1, 1]} : vector<2x4xf32> to vector<2x1xf32>
    %607 = vector.extract_strided_slice %575 {offsets = [0, 0], sizes = [2, 32], strides = [1, 1]} : vector<2x128xf32> to vector<2x32xf32>
    %608 = vector.broadcast %606 : vector<2x1xf32> to vector<2x32xf32>
    %609 = arith.mulf %608, %607 : vector<2x32xf32>
    %610 = arith.addf %605, %609 : vector<2x32xf32>
    %611 = vector.extract_strided_slice %604 {offsets = [0, 1], sizes = [2, 1], strides = [1, 1]} : vector<2x4xf32> to vector<2x1xf32>
    %612 = vector.extract_strided_slice %575 {offsets = [0, 32], sizes = [2, 32], strides = [1, 1]} : vector<2x128xf32> to vector<2x32xf32>
    %613 = vector.broadcast %611 : vector<2x1xf32> to vector<2x32xf32>
    %614 = arith.mulf %613, %612 : vector<2x32xf32>
    %615 = arith.addf %610, %614 : vector<2x32xf32>
    %616 = vector.extract_strided_slice %604 {offsets = [0, 2], sizes = [2, 1], strides = [1, 1]} : vector<2x4xf32> to vector<2x1xf32>
    %617 = vector.extract_strided_slice %575 {offsets = [0, 64], sizes = [2, 32], strides = [1, 1]} : vector<2x128xf32> to vector<2x32xf32>
    %618 = vector.broadcast %616 : vector<2x1xf32> to vector<2x32xf32>
    %619 = arith.mulf %618, %617 : vector<2x32xf32>
    %620 = arith.addf %615, %619 : vector<2x32xf32>
    %621 = vector.extract_strided_slice %604 {offsets = [0, 3], sizes = [2, 1], strides = [1, 1]} : vector<2x4xf32> to vector<2x1xf32>
    %622 = vector.extract_strided_slice %575 {offsets = [0, 96], sizes = [2, 32], strides = [1, 1]} : vector<2x128xf32> to vector<2x32xf32>
    %623 = vector.broadcast %621 : vector<2x1xf32> to vector<2x32xf32>
    %624 = arith.mulf %623, %622 : vector<2x32xf32>
    %625 = arith.addf %620, %624 : vector<2x32xf32>
    %cst_137 = arith.constant 1.000000e+00 : f32
    %626 = vector.broadcast %cst_137 : f32 to vector<2x32xf32>
    %627 = arith.subf %626, %561 : vector<2x32xf32>
    %628 = arith.mulf %627, %524 : vector<2x32xf32>
    %629 = arith.mulf %561, %625 : vector<2x32xf32>
    %630 = arith.addf %628, %629 : vector<2x32xf32>
    %631 = math.tanh %630 : vector<2x32xf32>
    %632 = arith.mulf %567, %631 : vector<2x32xf32>
    %633 = arith.index_cast %c5_i32 : i32 to index
    %c0_138 = arith.constant 0 : index
    %c0_139 = arith.constant 0 : index
    %634 = vector.load %arg6[%633, %c0_138, %c0_139] : memref<8x2x32xf32, #tpu.memory_space<vmem>>, vector<1x2x32xf32>
    %635 = vector.shape_cast %634 : vector<1x2x32xf32> to vector<2x32xf32>
    %636 = vector.shape_cast %632 : vector<2x32xf32> to vector<1x2x32xf32>
    tpu.vector_store %arg6[%633, %c0_138, %c0_139], %636 {strides = array<i32>} : memref<8x2x32xf32, #tpu.memory_space<vmem>>, vector<1x2x32xf32>,
    %637 = arith.index_cast %c5_i32 : i32 to index
    %c0_140 = arith.constant 0 : index
    %c0_141 = arith.constant 0 : index
    %638 = vector.load %arg7[%637, %c0_140, %c0_141] : memref<8x2x128xf32, #tpu.memory_space<vmem>>, vector<1x2x128xf32>
    %639 = vector.shape_cast %638 : vector<1x2x128xf32> to vector<2x128xf32>
    %640 = vector.shape_cast %575 : vector<2x128xf32> to vector<1x2x128xf32>
    tpu.vector_store %arg7[%637, %c0_140, %c0_141], %640 {strides = array<i32>} : memref<8x2x128xf32, #tpu.memory_space<vmem>>, vector<1x2x128xf32>,
    %641 = arith.index_cast %c5_i32 : i32 to index
    %c0_142 = arith.constant 0 : index
    %c0_143 = arith.constant 0 : index
    %642 = vector.load %arg8[%641, %c0_142, %c0_143] : memref<8x2x4xf32, #tpu.memory_space<vmem>>, vector<1x2x4xf32>
    %643 = vector.shape_cast %642 : vector<1x2x4xf32> to vector<2x4xf32>
    %644 = vector.shape_cast %604 : vector<2x4xf32> to vector<1x2x4xf32>
    tpu.vector_store %arg8[%641, %c0_142, %c0_143], %644 {strides = array<i32>} : memref<8x2x4xf32, #tpu.memory_space<vmem>>, vector<1x2x4xf32>,
    %c6_i32 = arith.constant 6 : i32
    %645 = arith.index_cast %c6_i32 : i32 to index
    %c0_144 = arith.constant 0 : index
    %c0_145 = arith.constant 0 : index
    %646 = vector.load %arg1[%645, %c0_144, %c0_145] : memref<8x2x32xf32, #tpu.memory_space<vmem>>, vector<1x2x32xf32>
    %647 = vector.shape_cast %646 : vector<1x2x32xf32> to vector<2x32xf32>
    %648 = tpu.concatenate %647, %632 in 1 : vector<2x32xf32>, vector<2x32xf32> -> vector<2x64xf32>
    %649 = arith.truncf %648 : vector<2x64xf32> to vector<2x64xbf16>
    %cst_146 = arith.constant dense<0.000000e+00> : vector<2x352xf32>
    %650 = tpu.matmul %649, %3, %cst_146 {dimension_numbers = #tpu.dot_dimension_numbers<[1], [0], [0], [1], [0, 0, 1, 1], [], []>} : vector<2x64xbf16>, vector<64x352xbf16>, vector<2x352xf32> -> vector<2x352xf32>
    %651 = vector.broadcast %4 : vector<1x352xf32> to vector<2x352xf32>
    %652 = arith.addf %650, %651 : vector<2x352xf32>
    %653 = vector.extract_strided_slice %652 {offsets = [0, 0], sizes = [2, 128], strides = [1, 1]} : vector<2x352xf32> to vector<2x128xf32>
    %654 = arith.negf %653 : vector<2x128xf32>
    %655 = math.exp %654 : vector<2x128xf32>
    %cst_147 = arith.constant 1.000000e+00 : f32
    %656 = vector.broadcast %cst_147 : f32 to vector<2x128xf32>
    %657 = arith.addf %656, %655 : vector<2x128xf32>
    %658 = arith.divf %656, %657 : vector<2x128xf32>
    %659 = vector.extract_strided_slice %652 {offsets = [0, 128], sizes = [2, 128], strides = [1, 1]} : vector<2x352xf32> to vector<2x128xf32>
    %660 = math.tanh %659 : vector<2x128xf32>
    %661 = vector.extract_strided_slice %652 {offsets = [0, 256], sizes = [2, 96], strides = [1, 1]} : vector<2x352xf32> to vector<2x96xf32>
    %662 = vector.extract_strided_slice %661 {offsets = [0, 0], sizes = [2, 32], strides = [1, 1]} : vector<2x96xf32> to vector<2x32xf32>
    %663 = arith.negf %662 : vector<2x32xf32>
    %664 = math.exp %663 : vector<2x32xf32>
    %cst_148 = arith.constant 1.000000e+00 : f32
    %665 = vector.broadcast %cst_148 : f32 to vector<2x32xf32>
    %666 = arith.addf %665, %664 : vector<2x32xf32>
    %667 = arith.divf %665, %666 : vector<2x32xf32>
    %668 = vector.extract_strided_slice %661 {offsets = [0, 32], sizes = [2, 32], strides = [1, 1]} : vector<2x96xf32> to vector<2x32xf32>
    %669 = arith.negf %668 : vector<2x32xf32>
    %670 = math.exp %669 : vector<2x32xf32>
    %cst_149 = arith.constant 1.000000e+00 : f32
    %671 = vector.broadcast %cst_149 : f32 to vector<2x32xf32>
    %672 = arith.addf %671, %670 : vector<2x32xf32>
    %673 = arith.divf %671, %672 : vector<2x32xf32>
    %674 = vector.extract_strided_slice %661 {offsets = [0, 64], sizes = [2, 32], strides = [1, 1]} : vector<2x96xf32> to vector<2x32xf32>
    %675 = math.tanh %674 : vector<2x32xf32>
    %676 = tpu.concatenate %630, %630, %630, %630 in 1 : vector<2x32xf32>, vector<2x32xf32>, vector<2x32xf32>, vector<2x32xf32> -> vector<2x128xf32>
    %677 = arith.mulf %658, %660 : vector<2x128xf32>
    %cst_150 = arith.constant 1.000000e+00 : f32
    %678 = vector.broadcast %cst_150 : f32 to vector<2x128xf32>
    %679 = arith.subf %678, %658 : vector<2x128xf32>
    %680 = arith.mulf %679, %676 : vector<2x128xf32>
    %681 = arith.addf %677, %680 : vector<2x128xf32>
    %682 = tpu.concatenate %675, %681 in 1 : vector<2x32xf32>, vector<2x128xf32> -> vector<2x160xf32>
    %683 = arith.truncf %682 : vector<2x160xf32> to vector<2x160xbf16>
    %cst_151 = arith.constant dense<0.000000e+00> : vector<2x256xf32>
    %684 = tpu.matmul %683, %5, %cst_151 {dimension_numbers = #tpu.dot_dimension_numbers<[1], [0], [0], [1], [0, 0, 1, 1], [], []>} : vector<2x160xbf16>, vector<160x256xbf16>, vector<2x256xf32> -> vector<2x256xf32>
    %685 = math.tanh %684 : vector<2x256xf32>
    %686 = vector.broadcast %6 : vector<1x256xf32> to vector<2x256xf32>
    %687 = arith.mulf %685, %686 : vector<2x256xf32>
    %688 = vector.extract_strided_slice %687 {offsets = [0, 0], sizes = [2, 64], strides = [1, 1]} : vector<2x256xf32> to vector<2x64xf32>
    %cst_152 = arith.constant dense<0.000000e+00> : vector<2xf32>
    %689 = vector.multi_reduction <add>, %688, %cst_152 [1] : vector<2x64xf32> to vector<2xf32>
    %690 = vector.shape_cast %689 : vector<2xf32> to vector<2x1xf32>
    %691 = vector.extract_strided_slice %687 {offsets = [0, 64], sizes = [2, 64], strides = [1, 1]} : vector<2x256xf32> to vector<2x64xf32>
    %cst_153 = arith.constant dense<0.000000e+00> : vector<2xf32>
    %692 = vector.multi_reduction <add>, %691, %cst_153 [1] : vector<2x64xf32> to vector<2xf32>
    %693 = vector.shape_cast %692 : vector<2xf32> to vector<2x1xf32>
    %694 = vector.extract_strided_slice %687 {offsets = [0, 128], sizes = [2, 64], strides = [1, 1]} : vector<2x256xf32> to vector<2x64xf32>
    %cst_154 = arith.constant dense<0.000000e+00> : vector<2xf32>
    %695 = vector.multi_reduction <add>, %694, %cst_154 [1] : vector<2x64xf32> to vector<2xf32>
    %696 = vector.shape_cast %695 : vector<2xf32> to vector<2x1xf32>
    %697 = vector.extract_strided_slice %687 {offsets = [0, 192], sizes = [2, 64], strides = [1, 1]} : vector<2x256xf32> to vector<2x64xf32>
    %cst_155 = arith.constant dense<0.000000e+00> : vector<2xf32>
    %698 = vector.multi_reduction <add>, %697, %cst_155 [1] : vector<2x64xf32> to vector<2xf32>
    %699 = vector.shape_cast %698 : vector<2xf32> to vector<2x1xf32>
    %700 = tpu.concatenate %690, %693, %696, %699 in 1 : vector<2x1xf32>, vector<2x1xf32>, vector<2x1xf32>, vector<2x1xf32> -> vector<2x4xf32>
    %cst_156 = arith.constant dense<0xFF800000> : vector<2xf32>
    %701 = vector.multi_reduction <maximumf>, %700, %cst_156 [1] : vector<2x4xf32> to vector<2xf32>
    %702 = vector.shape_cast %701 : vector<2xf32> to vector<2x1xf32>
    %703 = vector.broadcast %702 : vector<2x1xf32> to vector<2x4xf32>
    %704 = arith.subf %700, %703 : vector<2x4xf32>
    %705 = math.exp %704 : vector<2x4xf32>
    %cst_157 = arith.constant dense<0.000000e+00> : vector<2xf32>
    %706 = vector.multi_reduction <add>, %705, %cst_157 [1] : vector<2x4xf32> to vector<2xf32>
    %707 = vector.shape_cast %706 : vector<2xf32> to vector<2x1xf32>
    %708 = tpu.reciprocal %707 {approx = true} : vector<2x1xf32> -> vector<2x1xf32>
    %709 = vector.broadcast %708 : vector<2x1xf32> to vector<2x4xf32>
    %710 = arith.mulf %705, %709 : vector<2x4xf32>
    %cst_158 = arith.constant 0.000000e+00 : f32
    %711 = vector.broadcast %cst_158 : f32 to vector<2x32xf32>
    %712 = vector.extract_strided_slice %710 {offsets = [0, 0], sizes = [2, 1], strides = [1, 1]} : vector<2x4xf32> to vector<2x1xf32>
    %713 = vector.extract_strided_slice %681 {offsets = [0, 0], sizes = [2, 32], strides = [1, 1]} : vector<2x128xf32> to vector<2x32xf32>
    %714 = vector.broadcast %712 : vector<2x1xf32> to vector<2x32xf32>
    %715 = arith.mulf %714, %713 : vector<2x32xf32>
    %716 = arith.addf %711, %715 : vector<2x32xf32>
    %717 = vector.extract_strided_slice %710 {offsets = [0, 1], sizes = [2, 1], strides = [1, 1]} : vector<2x4xf32> to vector<2x1xf32>
    %718 = vector.extract_strided_slice %681 {offsets = [0, 32], sizes = [2, 32], strides = [1, 1]} : vector<2x128xf32> to vector<2x32xf32>
    %719 = vector.broadcast %717 : vector<2x1xf32> to vector<2x32xf32>
    %720 = arith.mulf %719, %718 : vector<2x32xf32>
    %721 = arith.addf %716, %720 : vector<2x32xf32>
    %722 = vector.extract_strided_slice %710 {offsets = [0, 2], sizes = [2, 1], strides = [1, 1]} : vector<2x4xf32> to vector<2x1xf32>
    %723 = vector.extract_strided_slice %681 {offsets = [0, 64], sizes = [2, 32], strides = [1, 1]} : vector<2x128xf32> to vector<2x32xf32>
    %724 = vector.broadcast %722 : vector<2x1xf32> to vector<2x32xf32>
    %725 = arith.mulf %724, %723 : vector<2x32xf32>
    %726 = arith.addf %721, %725 : vector<2x32xf32>
    %727 = vector.extract_strided_slice %710 {offsets = [0, 3], sizes = [2, 1], strides = [1, 1]} : vector<2x4xf32> to vector<2x1xf32>
    %728 = vector.extract_strided_slice %681 {offsets = [0, 96], sizes = [2, 32], strides = [1, 1]} : vector<2x128xf32> to vector<2x32xf32>
    %729 = vector.broadcast %727 : vector<2x1xf32> to vector<2x32xf32>
    %730 = arith.mulf %729, %728 : vector<2x32xf32>
    %731 = arith.addf %726, %730 : vector<2x32xf32>
    %cst_159 = arith.constant 1.000000e+00 : f32
    %732 = vector.broadcast %cst_159 : f32 to vector<2x32xf32>
    %733 = arith.subf %732, %667 : vector<2x32xf32>
    %734 = arith.mulf %733, %630 : vector<2x32xf32>
    %735 = arith.mulf %667, %731 : vector<2x32xf32>
    %736 = arith.addf %734, %735 : vector<2x32xf32>
    %737 = math.tanh %736 : vector<2x32xf32>
    %738 = arith.mulf %673, %737 : vector<2x32xf32>
    %739 = arith.index_cast %c6_i32 : i32 to index
    %c0_160 = arith.constant 0 : index
    %c0_161 = arith.constant 0 : index
    %740 = vector.load %arg6[%739, %c0_160, %c0_161] : memref<8x2x32xf32, #tpu.memory_space<vmem>>, vector<1x2x32xf32>
    %741 = vector.shape_cast %740 : vector<1x2x32xf32> to vector<2x32xf32>
    %742 = vector.shape_cast %738 : vector<2x32xf32> to vector<1x2x32xf32>
    tpu.vector_store %arg6[%739, %c0_160, %c0_161], %742 {strides = array<i32>} : memref<8x2x32xf32, #tpu.memory_space<vmem>>, vector<1x2x32xf32>,
    %743 = arith.index_cast %c6_i32 : i32 to index
    %c0_162 = arith.constant 0 : index
    %c0_163 = arith.constant 0 : index
    %744 = vector.load %arg7[%743, %c0_162, %c0_163] : memref<8x2x128xf32, #tpu.memory_space<vmem>>, vector<1x2x128xf32>
    %745 = vector.shape_cast %744 : vector<1x2x128xf32> to vector<2x128xf32>
    %746 = vector.shape_cast %681 : vector<2x128xf32> to vector<1x2x128xf32>
    tpu.vector_store %arg7[%743, %c0_162, %c0_163], %746 {strides = array<i32>} : memref<8x2x128xf32, #tpu.memory_space<vmem>>, vector<1x2x128xf32>,
    %747 = arith.index_cast %c6_i32 : i32 to index
    %c0_164 = arith.constant 0 : index
    %c0_165 = arith.constant 0 : index
    %748 = vector.load %arg8[%747, %c0_164, %c0_165] : memref<8x2x4xf32, #tpu.memory_space<vmem>>, vector<1x2x4xf32>
    %749 = vector.shape_cast %748 : vector<1x2x4xf32> to vector<2x4xf32>
    %750 = vector.shape_cast %710 : vector<2x4xf32> to vector<1x2x4xf32>
    tpu.vector_store %arg8[%747, %c0_164, %c0_165], %750 {strides = array<i32>} : memref<8x2x4xf32, #tpu.memory_space<vmem>>, vector<1x2x4xf32>,
    %c7_i32 = arith.constant 7 : i32
    %751 = arith.index_cast %c7_i32 : i32 to index
    %c0_166 = arith.constant 0 : index
    %c0_167 = arith.constant 0 : index
    %752 = vector.load %arg1[%751, %c0_166, %c0_167] : memref<8x2x32xf32, #tpu.memory_space<vmem>>, vector<1x2x32xf32>
    %753 = vector.shape_cast %752 : vector<1x2x32xf32> to vector<2x32xf32>
    %754 = tpu.concatenate %753, %738 in 1 : vector<2x32xf32>, vector<2x32xf32> -> vector<2x64xf32>
    %755 = arith.truncf %754 : vector<2x64xf32> to vector<2x64xbf16>
    %cst_168 = arith.constant dense<0.000000e+00> : vector<2x352xf32>
    %756 = tpu.matmul %755, %3, %cst_168 {dimension_numbers = #tpu.dot_dimension_numbers<[1], [0], [0], [1], [0, 0, 1, 1], [], []>} : vector<2x64xbf16>, vector<64x352xbf16>, vector<2x352xf32> -> vector<2x352xf32>
    %757 = vector.broadcast %4 : vector<1x352xf32> to vector<2x352xf32>
    %758 = arith.addf %756, %757 : vector<2x352xf32>
    %759 = vector.extract_strided_slice %758 {offsets = [0, 0], sizes = [2, 128], strides = [1, 1]} : vector<2x352xf32> to vector<2x128xf32>
    %760 = arith.negf %759 : vector<2x128xf32>
    %761 = math.exp %760 : vector<2x128xf32>
    %cst_169 = arith.constant 1.000000e+00 : f32
    %762 = vector.broadcast %cst_169 : f32 to vector<2x128xf32>
    %763 = arith.addf %762, %761 : vector<2x128xf32>
    %764 = arith.divf %762, %763 : vector<2x128xf32>
    %765 = vector.extract_strided_slice %758 {offsets = [0, 128], sizes = [2, 128], strides = [1, 1]} : vector<2x352xf32> to vector<2x128xf32>
    %766 = math.tanh %765 : vector<2x128xf32>
    %767 = vector.extract_strided_slice %758 {offsets = [0, 256], sizes = [2, 96], strides = [1, 1]} : vector<2x352xf32> to vector<2x96xf32>
    %768 = vector.extract_strided_slice %767 {offsets = [0, 0], sizes = [2, 32], strides = [1, 1]} : vector<2x96xf32> to vector<2x32xf32>
    %769 = arith.negf %768 : vector<2x32xf32>
    %770 = math.exp %769 : vector<2x32xf32>
    %cst_170 = arith.constant 1.000000e+00 : f32
    %771 = vector.broadcast %cst_170 : f32 to vector<2x32xf32>
    %772 = arith.addf %771, %770 : vector<2x32xf32>
    %773 = arith.divf %771, %772 : vector<2x32xf32>
    %774 = vector.extract_strided_slice %767 {offsets = [0, 32], sizes = [2, 32], strides = [1, 1]} : vector<2x96xf32> to vector<2x32xf32>
    %775 = arith.negf %774 : vector<2x32xf32>
    %776 = math.exp %775 : vector<2x32xf32>
    %cst_171 = arith.constant 1.000000e+00 : f32
    %777 = vector.broadcast %cst_171 : f32 to vector<2x32xf32>
    %778 = arith.addf %777, %776 : vector<2x32xf32>
    %779 = arith.divf %777, %778 : vector<2x32xf32>
    %780 = vector.extract_strided_slice %767 {offsets = [0, 64], sizes = [2, 32], strides = [1, 1]} : vector<2x96xf32> to vector<2x32xf32>
    %781 = math.tanh %780 : vector<2x32xf32>
    %782 = tpu.concatenate %736, %736, %736, %736 in 1 : vector<2x32xf32>, vector<2x32xf32>, vector<2x32xf32>, vector<2x32xf32> -> vector<2x128xf32>
    %783 = arith.mulf %764, %766 : vector<2x128xf32>
    %cst_172 = arith.constant 1.000000e+00 : f32
    %784 = vector.broadcast %cst_172 : f32 to vector<2x128xf32>
    %785 = arith.subf %784, %764 : vector<2x128xf32>
    %786 = arith.mulf %785, %782 : vector<2x128xf32>
    %787 = arith.addf %783, %786 : vector<2x128xf32>
    %788 = tpu.concatenate %781, %787 in 1 : vector<2x32xf32>, vector<2x128xf32> -> vector<2x160xf32>
    %789 = arith.truncf %788 : vector<2x160xf32> to vector<2x160xbf16>
    %cst_173 = arith.constant dense<0.000000e+00> : vector<2x256xf32>
    %790 = tpu.matmul %789, %5, %cst_173 {dimension_numbers = #tpu.dot_dimension_numbers<[1], [0], [0], [1], [0, 0, 1, 1], [], []>} : vector<2x160xbf16>, vector<160x256xbf16>, vector<2x256xf32> -> vector<2x256xf32>
    %791 = math.tanh %790 : vector<2x256xf32>
    %792 = vector.broadcast %6 : vector<1x256xf32> to vector<2x256xf32>
    %793 = arith.mulf %791, %792 : vector<2x256xf32>
    %794 = vector.extract_strided_slice %793 {offsets = [0, 0], sizes = [2, 64], strides = [1, 1]} : vector<2x256xf32> to vector<2x64xf32>
    %cst_174 = arith.constant dense<0.000000e+00> : vector<2xf32>
    %795 = vector.multi_reduction <add>, %794, %cst_174 [1] : vector<2x64xf32> to vector<2xf32>
    %796 = vector.shape_cast %795 : vector<2xf32> to vector<2x1xf32>
    %797 = vector.extract_strided_slice %793 {offsets = [0, 64], sizes = [2, 64], strides = [1, 1]} : vector<2x256xf32> to vector<2x64xf32>
    %cst_175 = arith.constant dense<0.000000e+00> : vector<2xf32>
    %798 = vector.multi_reduction <add>, %797, %cst_175 [1] : vector<2x64xf32> to vector<2xf32>
    %799 = vector.shape_cast %798 : vector<2xf32> to vector<2x1xf32>
    %800 = vector.extract_strided_slice %793 {offsets = [0, 128], sizes = [2, 64], strides = [1, 1]} : vector<2x256xf32> to vector<2x64xf32>
    %cst_176 = arith.constant dense<0.000000e+00> : vector<2xf32>
    %801 = vector.multi_reduction <add>, %800, %cst_176 [1] : vector<2x64xf32> to vector<2xf32>
    %802 = vector.shape_cast %801 : vector<2xf32> to vector<2x1xf32>
    %803 = vector.extract_strided_slice %793 {offsets = [0, 192], sizes = [2, 64], strides = [1, 1]} : vector<2x256xf32> to vector<2x64xf32>
    %cst_177 = arith.constant dense<0.000000e+00> : vector<2xf32>
    %804 = vector.multi_reduction <add>, %803, %cst_177 [1] : vector<2x64xf32> to vector<2xf32>
    %805 = vector.shape_cast %804 : vector<2xf32> to vector<2x1xf32>
    %806 = tpu.concatenate %796, %799, %802, %805 in 1 : vector<2x1xf32>, vector<2x1xf32>, vector<2x1xf32>, vector<2x1xf32> -> vector<2x4xf32>
    %cst_178 = arith.constant dense<0xFF800000> : vector<2xf32>
    %807 = vector.multi_reduction <maximumf>, %806, %cst_178 [1] : vector<2x4xf32> to vector<2xf32>
    %808 = vector.shape_cast %807 : vector<2xf32> to vector<2x1xf32>
    %809 = vector.broadcast %808 : vector<2x1xf32> to vector<2x4xf32>
    %810 = arith.subf %806, %809 : vector<2x4xf32>
    %811 = math.exp %810 : vector<2x4xf32>
    %cst_179 = arith.constant dense<0.000000e+00> : vector<2xf32>
    %812 = vector.multi_reduction <add>, %811, %cst_179 [1] : vector<2x4xf32> to vector<2xf32>
    %813 = vector.shape_cast %812 : vector<2xf32> to vector<2x1xf32>
    %814 = tpu.reciprocal %813 {approx = true} : vector<2x1xf32> -> vector<2x1xf32>
    %815 = vector.broadcast %814 : vector<2x1xf32> to vector<2x4xf32>
    %816 = arith.mulf %811, %815 : vector<2x4xf32>
    %cst_180 = arith.constant 0.000000e+00 : f32
    %817 = vector.broadcast %cst_180 : f32 to vector<2x32xf32>
    %818 = vector.extract_strided_slice %816 {offsets = [0, 0], sizes = [2, 1], strides = [1, 1]} : vector<2x4xf32> to vector<2x1xf32>
    %819 = vector.extract_strided_slice %787 {offsets = [0, 0], sizes = [2, 32], strides = [1, 1]} : vector<2x128xf32> to vector<2x32xf32>
    %820 = vector.broadcast %818 : vector<2x1xf32> to vector<2x32xf32>
    %821 = arith.mulf %820, %819 : vector<2x32xf32>
    %822 = arith.addf %817, %821 : vector<2x32xf32>
    %823 = vector.extract_strided_slice %816 {offsets = [0, 1], sizes = [2, 1], strides = [1, 1]} : vector<2x4xf32> to vector<2x1xf32>
    %824 = vector.extract_strided_slice %787 {offsets = [0, 32], sizes = [2, 32], strides = [1, 1]} : vector<2x128xf32> to vector<2x32xf32>
    %825 = vector.broadcast %823 : vector<2x1xf32> to vector<2x32xf32>
    %826 = arith.mulf %825, %824 : vector<2x32xf32>
    %827 = arith.addf %822, %826 : vector<2x32xf32>
    %828 = vector.extract_strided_slice %816 {offsets = [0, 2], sizes = [2, 1], strides = [1, 1]} : vector<2x4xf32> to vector<2x1xf32>
    %829 = vector.extract_strided_slice %787 {offsets = [0, 64], sizes = [2, 32], strides = [1, 1]} : vector<2x128xf32> to vector<2x32xf32>
    %830 = vector.broadcast %828 : vector<2x1xf32> to vector<2x32xf32>
    %831 = arith.mulf %830, %829 : vector<2x32xf32>
    %832 = arith.addf %827, %831 : vector<2x32xf32>
    %833 = vector.extract_strided_slice %816 {offsets = [0, 3], sizes = [2, 1], strides = [1, 1]} : vector<2x4xf32> to vector<2x1xf32>
    %834 = vector.extract_strided_slice %787 {offsets = [0, 96], sizes = [2, 32], strides = [1, 1]} : vector<2x128xf32> to vector<2x32xf32>
    %835 = vector.broadcast %833 : vector<2x1xf32> to vector<2x32xf32>
    %836 = arith.mulf %835, %834 : vector<2x32xf32>
    %837 = arith.addf %832, %836 : vector<2x32xf32>
    %cst_181 = arith.constant 1.000000e+00 : f32
    %838 = vector.broadcast %cst_181 : f32 to vector<2x32xf32>
    %839 = arith.subf %838, %773 : vector<2x32xf32>
    %840 = arith.mulf %839, %736 : vector<2x32xf32>
    %841 = arith.mulf %773, %837 : vector<2x32xf32>
    %842 = arith.addf %840, %841 : vector<2x32xf32>
    %843 = math.tanh %842 : vector<2x32xf32>
    %844 = arith.mulf %779, %843 : vector<2x32xf32>
    %845 = arith.index_cast %c7_i32 : i32 to index
    %c0_182 = arith.constant 0 : index
    %c0_183 = arith.constant 0 : index
    %846 = vector.load %arg6[%845, %c0_182, %c0_183] : memref<8x2x32xf32, #tpu.memory_space<vmem>>, vector<1x2x32xf32>
    %847 = vector.shape_cast %846 : vector<1x2x32xf32> to vector<2x32xf32>
    %848 = vector.shape_cast %844 : vector<2x32xf32> to vector<1x2x32xf32>
    tpu.vector_store %arg6[%845, %c0_182, %c0_183], %848 {strides = array<i32>} : memref<8x2x32xf32, #tpu.memory_space<vmem>>, vector<1x2x32xf32>,
    %849 = arith.index_cast %c7_i32 : i32 to index
    %c0_184 = arith.constant 0 : index
    %c0_185 = arith.constant 0 : index
    %850 = vector.load %arg7[%849, %c0_184, %c0_185] : memref<8x2x128xf32, #tpu.memory_space<vmem>>, vector<1x2x128xf32>
    %851 = vector.shape_cast %850 : vector<1x2x128xf32> to vector<2x128xf32>
    %852 = vector.shape_cast %787 : vector<2x128xf32> to vector<1x2x128xf32>
    tpu.vector_store %arg7[%849, %c0_184, %c0_185], %852 {strides = array<i32>} : memref<8x2x128xf32, #tpu.memory_space<vmem>>, vector<1x2x128xf32>,
    %853 = arith.index_cast %c7_i32 : i32 to index
    %c0_186 = arith.constant 0 : index
    %c0_187 = arith.constant 0 : index
    %854 = vector.load %arg8[%853, %c0_186, %c0_187] : memref<8x2x4xf32, #tpu.memory_space<vmem>>, vector<1x2x4xf32>
    %855 = vector.shape_cast %854 : vector<1x2x4xf32> to vector<2x4xf32>
    %856 = vector.shape_cast %816 : vector<2x4xf32> to vector<1x2x4xf32>
    tpu.vector_store %arg8[%853, %c0_186, %c0_187], %856 {strides = array<i32>} : memref<8x2x4xf32, #tpu.memory_space<vmem>>, vector<1x2x4xf32>,
    %c8_i32 = arith.constant 8 : i32
    %c0_188 = arith.constant 0 : index
    %c0_189 = arith.constant 0 : index
    %857 = vector.load %arg9[%c0_188, %c0_189] : memref<2x32xf32, #tpu.memory_space<vmem>>, vector<2x32xf32>
    tpu.vector_store %arg9[%c0_188, %c0_189], %844 {strides = array<i32>} : memref<2x32xf32, #tpu.memory_space<vmem>>, vector<2x32xf32>,
    %c0_190 = arith.constant 0 : index
    %c0_191 = arith.constant 0 : index
    %858 = vector.load %arg10[%c0_190, %c0_191] : memref<2x32xf32, #tpu.memory_space<vmem>>, vector<2x32xf32>
    tpu.vector_store %arg10[%c0_190, %c0_191], %842 {strides = array<i32>} : memref<2x32xf32, #tpu.memory_space<vmem>>, vector<2x32xf32>,
    return
  }
  func.func @transform_0(%arg0: i32) -> (i32, i32, i32) {
    %c0_i32 = arith.constant 0 : i32
    %c0_i32_0 = arith.constant 0 : i32
    %c0_i32_1 = arith.constant 0 : i32
    return %arg0, %c0_i32, %c0_i32_0 : i32, i32, i32
  }
  func.func @transform_1(%arg0: i32) -> (i32, i32) {
    %c0_i32 = arith.constant 0 : i32
    %c0_i32_0 = arith.constant 0 : i32
    %c0_i32_1 = arith.constant 0 : i32
    return %c0_i32, %c0_i32_0 : i32, i32
  }
  func.func @transform_2(%arg0: i32) -> (i32, i32) {
    %c0_i32 = arith.constant 0 : i32
    %c0_i32_0 = arith.constant 0 : i32
    %c0_i32_1 = arith.constant 0 : i32
    return %c0_i32, %c0_i32_0 : i32, i32
  }
  func.func @transform_3(%arg0: i32) -> (i32, i32) {
    %c0_i32 = arith.constant 0 : i32
    %c0_i32_0 = arith.constant 0 : i32
    %c0_i32_1 = arith.constant 0 : i32
    return %c0_i32, %c0_i32_0 : i32, i32
  }
  func.func @transform_4(%arg0: i32) -> (i32, i32) {
    %c0_i32 = arith.constant 0 : i32
    %c0_i32_0 = arith.constant 0 : i32
    %c0_i32_1 = arith.constant 0 : i32
    return %c0_i32, %c0_i32_0 : i32, i32
  }
  func.func @transform_5(%arg0: i32) -> (i32, i32, i32) {
    %c0_i32 = arith.constant 0 : i32
    %c0_i32_0 = arith.constant 0 : i32
    %c0_i32_1 = arith.constant 0 : i32
    return %arg0, %c0_i32, %c0_i32_0 : i32, i32, i32
  }
  func.func @transform_6(%arg0: i32) -> (i32, i32, i32) {
    %c0_i32 = arith.constant 0 : i32
    %c0_i32_0 = arith.constant 0 : i32
    %c0_i32_1 = arith.constant 0 : i32
    return %arg0, %c0_i32, %c0_i32_0 : i32, i32, i32
  }
  func.func @transform_7(%arg0: i32) -> (i32, i32, i32) {
    %c0_i32 = arith.constant 0 : i32
    %c0_i32_0 = arith.constant 0 : i32
    %c0_i32_1 = arith.constant 0 : i32
    return %arg0, %c0_i32, %c0_i32_0 : i32, i32, i32
  }
}

</mosaic_0001>

<llo_original>
// kernel: tpu_custom_call.1
$region0: #{tpu_custom_call.1}
  #allocation0 [shape = 'u32[]', space=smem, size = 0x4, offset = 0x4, fixed_abs, tag = 'smem constant byte address 0x4 - core index']
  #allocation1 [shape = 'u32[144,128]{1,0:T(1,128)}', space=vmem, size = 0x12000, scoped, tag = 'internal scratch']
  #allocation2 [shape = 'f32[2,32]{1,0:T(2,128)}', space=vmem, size = 0x400, scoped, tag = 'scratch operand']
  #allocation3 [shape = 'f32[2,32]{1,0:T(2,128)}', space=vmem, size = 0x400, scoped, tag = 'scratch operand']
  %s0 = inlined_call_operand.hbm [shape: f32[8,2,32], index: 0, kind: input, shape index: {}]
  %s1 = inlined_call_operand.hbm [shape: bf16[64,352], index: 1, kind: input, shape index: {}]
  %s2 = inlined_call_operand.vmem [shape: f32[1,352], index: 2, kind: input, shape index: {}]
  %s3 = inlined_call_operand.hbm [shape: bf16[160,256], index: 3, kind: input, shape index: {}]
  %s4 = inlined_call_operand.vmem [shape: f32[1,256], index: 4, kind: input, shape index: {}]
  %s5 = inlined_call_operand.hbm [shape: f32[8,2,32], index: 5, kind: output, shape index: {0}]
  %s6 = inlined_call_operand.hbm [shape: f32[8,2,128], index: 6, kind: output, shape index: {1}]
  %s7 = inlined_call_operand.vmem [shape: f32[8,2,4], index: 7, kind: output, shape index: {2}]
  %8 = xla_tuple %s5, %s6, %s7
  %s9 = sld [smem:[#allocation0]]
  $region62: #{tpu_custom_call.1} parent=0
    _
  %s11 = ssub.s32 1, %s9
  %s12 = scalar_select 0, %s11, %s9
  $region1: #{tpu_custom_call.1} parent=0
    #allocation4 [shape = 'u8[8192]{0}', space=vmem, size = 0x2000, scoped, tag = 'input window, operand 0, single buffered']
    #allocation5 [shape = 's32[1]{0}', space=sflag, size = 0x4, scoped, tag = 'scoped memory for tpu_custom_call.1']
    #allocation6 [shape = 's32[1]{0}', space=sflag, size = 0x4, scoped, tag = 'scoped memory for tpu_custom_call.1']
    #allocation7 [shape = 'u8[49152]{0}', space=vmem, size = 0xc000, scoped, tag = 'input window, operand 1, single buffered']
    #allocation8 [shape = 's32[1]{0}', space=sflag, size = 0x4, scoped, tag = 'scoped memory for tpu_custom_call.1']
    #allocation9 [shape = 'u8[81920]{0}', space=vmem, size = 0x14000, scoped, tag = 'input window, operand 3, single buffered']
    #allocation10 [shape = 'u8[8192]{0}', space=vmem, size = 0x2000, scoped, tag = 'output window, operand 0, single buffered']
    #allocation11 [shape = 'u8[8192]{0}', space=vmem, size = 0x2000, scoped, tag = 'output window, operand 1, single buffered']
    #allocation12 [shape = 's32[1]{0}', space=sflag, size = 0x4, scoped, tag = 'scoped memory for tpu_custom_call.1']
    %13 = vsyncpa [#allocation5], 0
    %14 = vsyncpa [#allocation8], 0
    %15 = vsyncpa [#allocation6], 0
    %16 = vsyncpa [#allocation12], 0
    // Predicated region
    $region2: #{tpu_custom_call.1} parent=1 // pred_check
      _
    $region3: #{tpu_custom_call.1} parent=1 // pred_check_branch
      %18 = sbr.rel (0) target = $region5
    $region4: #{tpu_custom_call.1} parent=1 // pred_region
      %s20 = ssub.s32 256, 256
      %21 = vsyncadd [#allocation5], %s20
      %s22 = sshll.u32 [#allocation4], 4
      %s23 = int_to_ptr.vmem [resolvable:$true] %s22
      %28 = dma.hbm_to_vmem [thread:$0]  %s0, 256, %s23, [#allocation5], 32, 32, 2
    $region5: #{tpu_custom_call.1} parent=1 // pred_fallthru
      _
    // Predicated region
    $region6: #{tpu_custom_call.1} parent=1 // pred_check
      _
    $region7: #{tpu_custom_call.1} parent=1 // pred_check_branch
      %30 = sbr.rel (0) target = $region9
    $region8: #{tpu_custom_call.1} parent=1 // pred_region
      %s32 = ssub.s32 1536, 1536
      %33 = vsyncadd [#allocation8], %s32
      %s34 = sshll.u32 [#allocation7], 4
      %s35 = int_to_ptr.vmem [resolvable:$true] %s34
      %40 = dma.hbm_to_vmem [thread:$0]  %s1, 1536, %s35, [#allocation8], 192, 192, 12
    $region9: #{tpu_custom_call.1} parent=1 // pred_fallthru
      _
    // Predicated region
    $region10: #{tpu_custom_call.1} parent=1 // pred_check
      _
    $region11: #{tpu_custom_call.1} parent=1 // pred_check_branch
      %42 = sbr.rel (0) target = $region13
    $region12: #{tpu_custom_call.1} parent=1 // pred_region
      _
    $region13: #{tpu_custom_call.1} parent=1 // pred_fallthru
      _
    // Predicated region
    $region14: #{tpu_custom_call.1} parent=1 // pred_check
      _
    $region15: #{tpu_custom_call.1} parent=1 // pred_check_branch
      %44 = sbr.rel (0) target = $region17
    $region16: #{tpu_custom_call.1} parent=1 // pred_region
      %s46 = ssub.s32 2560, 2560
      %47 = vsyncadd [#allocation8], %s46
      %s48 = sshll.u32 [#allocation9], 4
      %s49 = int_to_ptr.vmem [resolvable:$true] %s48
      %54 = dma.hbm_to_vmem [thread:$0]  %s3, 2560, %s49, [#allocation8], 128, 128, 8
    $region17: #{tpu_custom_call.1} parent=1 // pred_fallthru
      _
    // Predicated region
    $region18: #{tpu_custom_call.1} parent=1 // pred_check
      _
    $region19: #{tpu_custom_call.1} parent=1 // pred_check_branch
      %56 = sbr.rel (0) target = $region21
    $region20: #{tpu_custom_call.1} parent=1 // pred_region
      _
    $region21: #{tpu_custom_call.1} parent=1 // pred_fallthru
      _
    // Predicated region
    $region22: #{tpu_custom_call.1} parent=1 // pred_check
      _
    $region23: #{tpu_custom_call.1} parent=1 // pred_check_branch
      %58 = sbr.rel (0) target = $region25
    $region24: #{tpu_custom_call.1} parent=1 // pred_region
      %59 = dma.done [#allocation5], 256
    $region25: #{tpu_custom_call.1} parent=1 // pred_fallthru
      _
    // Predicated region
    $region26: #{tpu_custom_call.1} parent=1 // pred_check
      _
    $region27: #{tpu_custom_call.1} parent=1 // pred_check_branch
      %61 = sbr.rel (0) target = $region29
    $region28: #{tpu_custom_call.1} parent=1 // pred_region
      %62 = dma.done [#allocation8], 1536
    $region29: #{tpu_custom_call.1} parent=1 // pred_fallthru
      _
    // Predicated region
    $region30: #{tpu_custom_call.1} parent=1 // pred_check
      _
    $region31: #{tpu_custom_call.1} parent=1 // pred_check_branch
      %64 = sbr.rel (0) target = $region33
    $region32: #{tpu_custom_call.1} parent=1 // pred_region
      %65 = dma.done [#allocation8], 2560
    $region33: #{tpu_custom_call.1} parent=1 // pred_fallthru
      _
    %p67 = scmp.eq.s32.totalorder 0, 0
    // Predicated region
    $region34: #{tpu_custom_call.1} parent=1 // pred_check
      %p68 = pneg %p67
    $region35: #{tpu_custom_call.1} parent=1 // pred_check_branch
      %70 = sbr.rel (%p68) target = $region37
    $region36: #{tpu_custom_call.1} parent=1 // pred_region
      %vm71 = vcmask 254976
      %72 = vst.msk [vmem:[#allocation2] sm:$0x3] %vm71, 0.0
      %73 = vst.msk [vmem:[#allocation3] sm:$0x3] %vm71, 0.0
    $region37: #{tpu_custom_call.1} parent=1 // pred_fallthru
      _
    %v74 = vld [vmem:[#allocation7] sm:$0xff]
    %v75 = vld [vmem:[#allocation7 + $0x8] sm:$0xf]
    %v76 = vld [vmem:[#allocation7 + $0xc] sm:$0xff]
    %v77 = vld [vmem:[#allocation7 + $0x14] sm:$0xf]
    %v78 = vld [vmem:[#allocation7 + $0x18] sm:$0xff]
    %v79 = vld [vmem:[#allocation7 + $0x20] sm:$0xf]
    %v80 = vld [vmem:[#allocation7 + $0x24] sm:$0xff]
    %v81 = vld [vmem:[#allocation7 + $0x2c] sm:$0xf]
    %v82 = vld [vmem:[#allocation7 + $0x30] sm:$0xff]
    %v83 = vld [vmem:[#allocation7 + $0x38] sm:$0xf]
    %v84 = vld [vmem:[#allocation7 + $0x3c] sm:$0xff]
    %v85 = vld [vmem:[#allocation7 + $0x44] sm:$0xf]
    %v86 = vld [vmem:[#allocation7 + $0x48] sm:$0xff]
    %v87 = vld [vmem:[#allocation7 + $0x50] sm:$0xf]
    %v88 = vld [vmem:[#allocation7 + $0x54] sm:$0xff]
    %v89 = vld [vmem:[#allocation7 + $0x5c] sm:$0xf]
    %v90 = vld [vmem:[%s2] sm:$0x7]
    %v91 = vld [vmem:[#allocation9] sm:$0xff]
    %v92 = vld [vmem:[#allocation9 + $0x8] sm:$0xff]
    %v93 = vld [vmem:[#allocation9 + $0x10] sm:$0xff]
    %v94 = vld [vmem:[#allocation9 + $0x18] sm:$0xff]
    %v95 = vld [vmem:[#allocation9 + $0x20] sm:$0xff]
    %v96 = vld [vmem:[#allocation9 + $0x28] sm:$0xff]
    %v97 = vld [vmem:[#allocation9 + $0x30] sm:$0xff]
    %v98 = vld [vmem:[#allocation9 + $0x38] sm:$0xff]
    %v99 = vld [vmem:[#allocation9 + $0x40] sm:$0xff]
    %v100 = vld [vmem:[#allocation9 + $0x48] sm:$0xff]
    %v101 = vld [vmem:[#allocation9 + $0x50] sm:$0xff]
    %v102 = vld [vmem:[#allocation9 + $0x58] sm:$0xff]
    %v103 = vld [vmem:[#allocation9 + $0x60] sm:$0xff]
    %v104 = vld [vmem:[#allocation9 + $0x68] sm:$0xff]
    %v105 = vld [vmem:[#allocation9 + $0x70] sm:$0xff]
    %v106 = vld [vmem:[#allocation9 + $0x78] sm:$0xff]
    %v107 = vld [vmem:[#allocation9 + $0x80] sm:$0xff]
    %v108 = vld [vmem:[#allocation9 + $0x88] sm:$0xff]
    %v109 = vld [vmem:[#allocation9 + $0x90] sm:$0xff]
    %v110 = vld [vmem:[#allocation9 + $0x98] sm:$0xff]
    %v111 = vld [vmem:[%s4] sm:$0x3]
    %v112 = vld [vmem:[#allocation2] sm:$0x3]
    %v113 = vld [vmem:[#allocation3] sm:$0x3]
    %v114 = vld [vmem:[#allocation4] sm:$0x3]
    %116 = vrot.lane.b32.xlu0 %v112, 32
    %v117 = vpop.permute.xlu0 %116
    %vm119 = vcmask 261120
    %v120 = vsel %vm119, %v114, %v117
    %v121 = vpack.c.bf16 %v120, %v120
    %v123 = vlaneseq
    %v124 = vshrl.u32 %v123, 7
    %v125 = vsub.s32 0, %v124
    %v126 = vrot.slane %v90, %v125
    %v127 = vlaneseq
    %v128 = vshrl.u32 %v127, 7
    %v129 = vsub.s32 1, %v128
    %v130 = vrot.slane %v90, %v129
    %v131 = vlaneseq
    %v132 = vshrl.u32 %v131, 7
    %v133 = vsub.s32 2, %v132
    %v134 = vrot.slane %v90, %v133
    %v154 = vunpack.c.l.b16 %v74
    %v155 = vunpack.c.h.b16 %v74
    %v156 = vunpack.c.l.b16 %v75
    %v157 = vunpack.c.l.b16 %v76
    %v158 = vunpack.c.h.b16 %v76
    %v159 = vunpack.c.l.b16 %v77
    %v160 = vunpack.c.l.b16 %v78
    %v161 = vunpack.c.h.b16 %v78
    %v162 = vunpack.c.l.b16 %v79
    %v163 = vunpack.c.l.b16 %v80
    %v164 = vunpack.c.h.b16 %v80
    %v165 = vunpack.c.l.b16 %v81
    %v166 = vunpack.c.l.b16 %v82
    %v167 = vunpack.c.h.b16 %v82
    %v168 = vunpack.c.l.b16 %v83
    %v169 = vunpack.c.l.b16 %v84
    %v170 = vunpack.c.h.b16 %v84
    %v171 = vunpack.c.l.b16 %v85
    %v172 = vunpack.c.l.b16 %v86
    %v173 = vunpack.c.h.b16 %v86
    %v174 = vunpack.c.l.b16 %v87
    %v175 = vunpack.c.l.b16 %v88
    %v176 = vunpack.c.h.b16 %v88
    %v177 = vunpack.c.l.b16 %v89
    %v178 = vpack.c.b16 %v157, %v154
    %v179 = vpack.c.b16 %v158, %v155
    %v180 = vpack.c.b16 %v159, %v156
    %v181 = vpack.c.b16 %v163, %v160
    %v182 = vpack.c.b16 %v164, %v161
    %v183 = vpack.c.b16 %v165, %v162
    %v184 = vpack.c.b16 %v169, %v166
    %v185 = vpack.c.b16 %v170, %v167
    %v186 = vpack.c.b16 %v171, %v168
    %v187 = vpack.c.b16 %v175, %v172
    %v188 = vpack.c.b16 %v176, %v173
    %v189 = vpack.c.b16 %v177, %v174
    %vm202 = vcmask 523264
    %v204 = vsel %vm202, %v121, 0
    %206 = vmatprep.subr.bf16.mxu0 0
    %207 = vmatpush1.bf16.msra.mxu0 0
    %208 = vmatprep.subr.bf16.mxu0 0
    %209 = vmatpush1.bf16.msra.mxu0 0
    %210 = vmatprep.subr.bf16.mxu0 0
    %211 = vmatpush1.bf16.msra.mxu0 0
    %212 = vmatprep.subr.bf16.mxu0 0
    %213 = vmatpush1.bf16.msra.mxu0 0
    %214 = vmatprep.subr.bf16.mxu0 %v188
    %215 = vmatpush1.bf16.msra.mxu0 %v187
    %216 = vmatprep.subr.bf16.mxu0 %v185
    %217 = vmatpush1.bf16.msra.mxu0 %v184
    %218 = vmatprep.subr.bf16.mxu0 %v182
    %219 = vmatpush1.bf16.msra.mxu0 %v181
    %220 = vmatprep.subr.bf16.mxu0 %v179
    %221 = vmatpush1.bf16.msra.mxu0 %v178
    %222 = vmatprep.subr.bf16.mxu0 0
    %223 = vmatpush2.bf16.msra.mxu0 0
    %224 = vmatprep.subr.bf16.mxu0 0
    %225 = vmatpush2.bf16.msra.mxu0 0
    %226 = vmatprep.subr.bf16.mxu0 0
    %227 = vmatpush2.bf16.msra.mxu0 0
    %228 = vmatprep.subr.bf16.mxu0 0
    %229 = vmatpush2.bf16.msra.mxu0 0
    %230 = vmatprep.subr.bf16.mxu0 0
    %231 = vmatpush2.bf16.msra.mxu0 0
    %232 = vmatprep.subr.bf16.mxu0 0
    %233 = vmatpush2.bf16.msra.mxu0 0
    %234 = vmatprep.subr.bf16.mxu0 0
    %235 = vmatpush2.bf16.msra.mxu0 0
    %236 = vmatprep.subr.bf16.mxu0 0
    %237 = vmatpush2.bf16.msra.mxu0 0
    %238 = vmatprep.mubr.bf16.mxu0 0
    %239 = vmatmul.mubr.bf16.gmra.mxu0 %v204
    %v240 = vpop.f32.mrf.mxu0
    %v241 = vadd.f32 %v126, %v240
    %v242 = vpop.f32.mrf.mxu0
    %v243 = vadd.f32 %v130, %v242
    %v244 = vpop.f32.mrf.mxu0
    %v245 = vpop.f32.mrf.mxu0
    %246 = vdwg.mxu0
    %247 = vmatprep.subr.bf16.mxu0 0
    %248 = vmatpush1.bf16.msra.mxu0 0
    %249 = vmatprep.subr.bf16.mxu0 0
    %250 = vmatpush1.bf16.msra.mxu0 0
    %251 = vmatprep.subr.bf16.mxu0 0
    %252 = vmatpush1.bf16.msra.mxu0 0
    %253 = vmatprep.subr.bf16.mxu0 0
    %254 = vmatpush1.bf16.msra.mxu0 0
    %255 = vmatprep.subr.bf16.mxu0 0
    %256 = vmatpush1.bf16.msra.mxu0 %v189
    %257 = vmatprep.subr.bf16.mxu0 0
    %258 = vmatpush1.bf16.msra.mxu0 %v186
    %259 = vmatprep.subr.bf16.mxu0 0
    %260 = vmatpush1.bf16.msra.mxu0 %v183
    %261 = vmatprep.subr.bf16.mxu0 0
    %262 = vmatpush1.bf16.msra.mxu0 %v180
    %263 = vmatprep.subr.bf16.mxu0 0
    %264 = vmatpush2.bf16.msra.mxu0 0
    %265 = vmatprep.subr.bf16.mxu0 0
    %266 = vmatpush2.bf16.msra.mxu0 0
    %267 = vmatprep.subr.bf16.mxu0 0
    %268 = vmatpush2.bf16.msra.mxu0 0
    %269 = vmatprep.subr.bf16.mxu0 0
    %270 = vmatpush2.bf16.msra.mxu0 0
    %271 = vmatprep.subr.bf16.mxu0 0
    %272 = vmatpush2.bf16.msra.mxu0 0
    %273 = vmatprep.subr.bf16.mxu0 0
    %274 = vmatpush2.bf16.msra.mxu0 0
    %275 = vmatprep.subr.bf16.mxu0 0
    %276 = vmatpush2.bf16.msra.mxu0 0
    %277 = vmatprep.subr.bf16.mxu0 0
    %278 = vmatpush2.bf16.msra.mxu0 0
    %279 = vmatprep.mubr.bf16.mxu0 0
    %280 = vmatmul.mubr.bf16.gmra.mxu0 %v204
    %v281 = vpop.f32.mrf.mxu0
    %v282 = vadd.f32 %v134, %v281
    %v283 = vpop.f32.mrf.mxu0
    %v284 = vpop.f32.mrf.mxu0
    %v285 = vpop.f32.mrf.mxu0
    %286 = vdwg.mxu0
    %v287 = vxor.u32 %v241, 2147483648
    %v288 = vmul.f32 %v287, 1.442695
    %v289 = vpow.pop %v288
    %v290 = vadd.f32 %v289, 1.0
    %v291 = vrcp.pop %v290
    %v292 = vmul.f32 1.0, %v291
    %v293 = vtanh.pop %v243
    %v294 = vxor.u32 %v282, 2147483648
    %v295 = vmul.f32 %v294, 1.442695
    %v296 = vpow.pop %v295
    %v297 = vadd.f32 %v296, 1.0
    %v298 = vrcp.pop %v297
    %v299 = vmul.f32 1.0, %v298
    %v300 = vtanh.pop %v282
    %302 = vrot.lane.b32.xlu0 %v113, 32
    %v303 = vpop.permute.xlu0 %302
    %305 = vrot.lane.b32.xlu0 %v113, 64
    %v306 = vpop.permute.xlu0 %305
    %308 = vrot.lane.b32.xlu0 %v113, 96
    %v309 = vpop.permute.xlu0 %308
    %v311 = vsel %vm119, %v113, %v303
    %v312 = vsel %vm202, %v311, %v306
    %vm313 = vcmask 785408
    %v314 = vsel %vm313, %v312, %v309
    %v315 = vmul.f32 %v292, %v293
    %v316 = vsub.f32 1.0, %v292
    %v317 = vmul.f32 %v316, %v314
    %v318 = vadd.f32 %v315, %v317
    %320 = vrot.lane.b32.xlu0 %v300, 64
    %v321 = vpop.permute.xlu0 %320
    %324 = vrot.lane.b32.xlu0 %v318, 32
    %v325 = vpop.permute.xlu0 %324
    %v327 = vsel %vm119, %v321, %v325
    %v328 = vpack.c.bf16 %v327, %v327
    %v329 = vpack.c.bf16 %v325, %v325
    %v350 = vunpack.c.l.b16 %v91
    %v351 = vunpack.c.h.b16 %v91
    %v352 = vunpack.c.l.b16 %v92
    %v353 = vunpack.c.h.b16 %v92
    %v354 = vunpack.c.l.b16 %v93
    %v355 = vunpack.c.h.b16 %v93
    %v356 = vunpack.c.l.b16 %v94
    %v357 = vunpack.c.h.b16 %v94
    %v358 = vunpack.c.l.b16 %v95
    %v359 = vunpack.c.h.b16 %v95
    %v360 = vunpack.c.l.b16 %v96
    %v361 = vunpack.c.h.b16 %v96
    %v362 = vunpack.c.l.b16 %v97
    %v363 = vunpack.c.h.b16 %v97
    %v364 = vunpack.c.l.b16 %v98
    %v365 = vunpack.c.h.b16 %v98
    %v366 = vunpack.c.l.b16 %v99
    %v367 = vunpack.c.h.b16 %v99
    %v368 = vunpack.c.l.b16 %v100
    %v369 = vunpack.c.h.b16 %v100
    %v370 = vunpack.c.l.b16 %v101
    %v371 = vunpack.c.h.b16 %v101
    %v372 = vunpack.c.l.b16 %v102
    %v373 = vunpack.c.h.b16 %v102
    %v374 = vunpack.c.l.b16 %v103
    %v375 = vunpack.c.h.b16 %v103
    %v376 = vunpack.c.l.b16 %v104
    %v377 = vunpack.c.h.b16 %v104
    %v378 = vunpack.c.l.b16 %v105
    %v379 = vunpack.c.h.b16 %v105
    %v380 = vunpack.c.l.b16 %v106
    %v381 = vunpack.c.h.b16 %v106
    %v382 = vunpack.c.l.b16 %v107
    %v383 = vunpack.c.h.b16 %v107
    %v384 = vunpack.c.l.b16 %v108
    %v385 = vunpack.c.h.b16 %v108
    %v386 = vunpack.c.l.b16 %v109
    %v387 = vunpack.c.h.b16 %v109
    %v388 = vunpack.c.l.b16 %v110
    %v389 = vunpack.c.h.b16 %v110
    %v390 = vpack.c.b16 %v352, %v350
    %v391 = vpack.c.b16 %v353, %v351
    %v392 = vpack.c.b16 %v356, %v354
    %v393 = vpack.c.b16 %v357, %v355
    %v394 = vpack.c.b16 %v360, %v358
    %v395 = vpack.c.b16 %v361, %v359
    %v396 = vpack.c.b16 %v364, %v362
    %v397 = vpack.c.b16 %v365, %v363
    %v398 = vpack.c.b16 %v368, %v366
    %v399 = vpack.c.b16 %v369, %v367
    %v400 = vpack.c.b16 %v372, %v370
    %v401 = vpack.c.b16 %v373, %v371
    %v402 = vpack.c.b16 %v376, %v374
    %v403 = vpack.c.b16 %v377, %v375
    %v404 = vpack.c.b16 %v380, %v378
    %v405 = vpack.c.b16 %v381, %v379
    %v406 = vpack.c.b16 %v384, %v382
    %v407 = vpack.c.b16 %v385, %v383
    %v408 = vpack.c.b16 %v388, %v386
    %v409 = vpack.c.b16 %v389, %v387
    %v431 = vsel %vm119, %v329, 0
    %433 = vmatprep.subr.bf16.mxu0 %v405
    %434 = vmatpush1.bf16.msra.mxu0 %v404
    %435 = vmatprep.subr.bf16.mxu0 %v403
    %436 = vmatpush1.bf16.msra.mxu0 %v402
    %437 = vmatprep.subr.bf16.mxu0 %v401
    %438 = vmatpush1.bf16.msra.mxu0 %v400
    %439 = vmatprep.subr.bf16.mxu0 %v399
    %440 = vmatpush1.bf16.msra.mxu0 %v398
    %441 = vmatprep.subr.bf16.mxu0 %v397
    %442 = vmatpush1.bf16.msra.mxu0 %v396
    %443 = vmatprep.subr.bf16.mxu0 %v395
    %444 = vmatpush1.bf16.msra.mxu0 %v394
    %445 = vmatprep.subr.bf16.mxu0 %v393
    %446 = vmatpush1.bf16.msra.mxu0 %v392
    %447 = vmatprep.subr.bf16.mxu0 %v391
    %448 = vmatpush1.bf16.msra.mxu0 %v390
    %449 = vmatprep.subr.bf16.mxu0 0
    %450 = vmatpush2.bf16.msra.mxu0 0
    %451 = vmatprep.subr.bf16.mxu0 0
    %452 = vmatpush2.bf16.msra.mxu0 0
    %453 = vmatprep.subr.bf16.mxu0 0
    %454 = vmatpush2.bf16.msra.mxu0 0
    %455 = vmatprep.subr.bf16.mxu0 0
    %456 = vmatpush2.bf16.msra.mxu0 0
    %457 = vmatprep.subr.bf16.mxu0 0
    %458 = vmatpush2.bf16.msra.mxu0 0
    %459 = vmatprep.subr.bf16.mxu0 0
    %460 = vmatpush2.bf16.msra.mxu0 0
    %461 = vmatprep.subr.bf16.mxu0 %v409
    %462 = vmatpush2.bf16.msra.mxu0 %v408
    %463 = vmatprep.subr.bf16.mxu0 %v407
    %464 = vmatpush2.bf16.msra.mxu0 %v406
    %465 = vmatprep.mubr.bf16.mxu0 %v431
    %466 = vmatmul.mubr.bf16.gmra.mxu0 %v328
    %v467 = vpop.f32.mrf.mxu0
    %v468 = vadd.f32 0.0, %v467
    %v469 = vpop.f32.mrf.mxu0
    %v470 = vadd.f32 0.0, %v469
    %v471 = vpop.f32.mrf.mxu0
    %v472 = vpop.f32.mrf.mxu0
    %473 = vdwg.mxu0
    %v474 = vtanh.pop %v468
    %v475 = vtanh.pop %v470
    %v477 = vlaneseq
    %v478 = vshrl.u32 %v477, 7
    %v479 = vsub.s32 0, %v478
    %v480 = vrot.slane %v111, %v479
    %v481 = vlaneseq
    %v482 = vshrl.u32 %v481, 7
    %v483 = vsub.s32 1, %v482
    %v484 = vrot.slane %v111, %v483
    %v487 = vmul.f32 %v474, %v480
    %v488 = vmul.f32 %v475, %v484
    %vm489 = vcmask 517120
    %v490 = vsel %vm489, %v487, 0.0
    %491 = vadd.xlane.f32.xlu0 %v490
    %v492 = vpop.xlane.xlu0 %491
    %494 = vrot.lane.b32.xlu0 %v487, 64
    %v495 = vpop.permute.xlu0 %494
    %v497 = vsel %vm489, %v495, 0.0
    %498 = vadd.xlane.f32.xlu0 %v497
    %v499 = vpop.xlane.xlu0 %498
    %v500 = vsel %vm489, %v488, 0.0
    %501 = vadd.xlane.f32.xlu0 %v500
    %v502 = vpop.xlane.xlu0 %501
    %504 = vrot.lane.b32.xlu0 %v488, 64
    %v505 = vpop.permute.xlu0 %504
    %v507 = vsel %vm489, %v505, 0.0
    %508 = vadd.xlane.f32.xlu0 %v507
    %v509 = vpop.xlane.xlu0 %508
    %vm510 = vcmask 7168
    %v511 = vsel %vm510, %v492, %v499
    %vm512 = vcmask 15360
    %v513 = vsel %vm512, %v511, %v502
    %vm514 = vcmask 23552
    %v515 = vsel %vm514, %v513, %v509
    %vm516 = vcmask 25600
    %v517 = vsel %vm516, %v515, -inf
    %518 = vmax.xlane.f32.xlu0 %v517
    %v519 = vpop.xlane.xlu0 %518
    %v520 = vsub.f32 %v515, %v519
    %v521 = vmul.f32 %v520, 1.442695
    %v522 = vpow.pop %v521
    %v523 = vsel %vm516, %v522, 0.0
    %524 = vadd.xlane.f32.xlu0 %v523
    %v525 = vpop.xlane.xlu0 %524
    %v526 = vrcp.pop %v525
    %v527 = vmul.f32 %v522, %v526
    %529 = vset.pattern.permute.xlu0 0
    %530 = vperm.xlu0 %529, %v527
    %v531 = vpop.permute.xlu0 %530
    %v533 = vmul.f32 %v531, %v318
    %v534 = vadd.f32 %v533, 0.0
    %535 = vset.pattern.permute.xlu0 1
    %536 = vperm.xlu0 %535, %v527
    %v537 = vpop.permute.xlu0 %536
    %v539 = vmul.f32 %v537, %v318
    %541 = vrot.lane.b32.xlu0 %v539, 96
    %v542 = vpop.permute.xlu0 %541
    %v544 = vadd.f32 %v534, %v542
    %545 = vset.pattern.permute.xlu0 2
    %546 = vperm.xlu0 %545, %v527
    %v547 = vpop.permute.xlu0 %546
    %v549 = vmul.f32 %v547, %v318
    %551 = vrot.lane.b32.xlu0 %v549, 64
    %v552 = vpop.permute.xlu0 %551
    %v554 = vadd.f32 %v544, %v552
    %555 = vset.pattern.permute.xlu0 3
    %556 = vperm.xlu0 %555, %v527
    %v557 = vpop.permute.xlu0 %556
    %v559 = vmul.f32 %v557, %v318
    %561 = vrot.lane.b32.xlu0 %v559, 32
    %v562 = vpop.permute.xlu0 %561
    %v564 = vadd.f32 %v554, %v562
    %v565 = vsub.f32 1.0, %v299
    %v566 = vmul.f32 %v565, %v113
    %v567 = vmul.f32 %v299, %v564
    %v568 = vadd.f32 %v566, %v567
    %v569 = vtanh.pop %v568
    %571 = vrot.lane.b32.xlu0 %v569, 32
    %v572 = vpop.permute.xlu0 %571
    %v574 = vmul.f32 %v299, %v572
    %576 = vrot.lane.b32.xlu0 %v574, 96
    %v577 = vpop.permute.xlu0 %576
    %vm579 = vcmask 254976
    %580 = vst.msk [vmem:[#allocation10] sm:$0x3] %vm579, %v577
    %581 = vst [vmem:[#allocation11] sm:$0x3] %v318
    %582 = vst.msk [vmem:[%s7] sm:$0x3] %vm516, %v527
    %s583 = scalar_lea.vmem [#allocation4], 2
    %v584 = vld [vmem:[%s583] sm:$0x3]
    %v585 = vsel %vm119, %v584, %v574
    %v586 = vpack.c.bf16 %v585, %v585
    %v588 = vsel %vm202, %v586, 0
    %590 = vmatprep.subr.bf16.mxu0 0
    %591 = vmatpush1.bf16.msra.mxu0 0
    %592 = vmatprep.subr.bf16.mxu0 0
    %593 = vmatpush1.bf16.msra.mxu0 0
    %594 = vmatprep.subr.bf16.mxu0 0
    %595 = vmatpush1.bf16.msra.mxu0 0
    %596 = vmatprep.subr.bf16.mxu0 0
    %597 = vmatpush1.bf16.msra.mxu0 0
    %598 = vmatprep.subr.bf16.mxu0 %v188
    %599 = vmatpush1.bf16.msra.mxu0 %v187
    %600 = vmatprep.subr.bf16.mxu0 %v185
    %601 = vmatpush1.bf16.msra.mxu0 %v184
    %602 = vmatprep.subr.bf16.mxu0 %v182
    %603 = vmatpush1.bf16.msra.mxu0 %v181
    %604 = vmatprep.subr.bf16.mxu0 %v179
    %605 = vmatpush1.bf16.msra.mxu0 %v178
    %606 = vmatprep.subr.bf16.mxu0 0
    %607 = vmatpush2.bf16.msra.mxu0 0
    %608 = vmatprep.subr.bf16.mxu0 0
    %609 = vmatpush2.bf16.msra.mxu0 0
    %610 = vmatprep.subr.bf16.mxu0 0
    %611 = vmatpush2.bf16.msra.mxu0 0
    %612 = vmatprep.subr.bf16.mxu0 0
    %613 = vmatpush2.bf16.msra.mxu0 0
    %614 = vmatprep.subr.bf16.mxu0 0
    %615 = vmatpush2.bf16.msra.mxu0 0
    %616 = vmatprep.subr.bf16.mxu0 0
    %617 = vmatpush2.bf16.msra.mxu0 0
    %618 = vmatprep.subr.bf16.mxu0 0
    %619 = vmatpush2.bf16.msra.mxu0 0
    %620 = vmatprep.subr.bf16.mxu0 0
    %621 = vmatpush2.bf16.msra.mxu0 0
    %622 = vmatprep.mubr.bf16.mxu0 0
    %623 = vmatmul.mubr.bf16.gmra.mxu0 %v588
    %v624 = vpop.f32.mrf.mxu0
    %v625 = vadd.f32 %v126, %v624
    %v626 = vpop.f32.mrf.mxu0
    %v627 = vadd.f32 %v130, %v626
    %v628 = vpop.f32.mrf.mxu0
    %v629 = vpop.f32.mrf.mxu0
    %630 = vdwg.mxu0
    %631 = vmatprep.subr.bf16.mxu0 0
    %632 = vmatpush1.bf16.msra.mxu0 0
    %633 = vmatprep.subr.bf16.mxu0 0
    %634 = vmatpush1.bf16.msra.mxu0 0
    %635 = vmatprep.subr.bf16.mxu0 0
    %636 = vmatpush1.bf16.msra.mxu0 0
    %637 = vmatprep.subr.bf16.mxu0 0
    %638 = vmatpush1.bf16.msra.mxu0 0
    %639 = vmatprep.subr.bf16.mxu0 0
    %640 = vmatpush1.bf16.msra.mxu0 %v189
    %641 = vmatprep.subr.bf16.mxu0 0
    %642 = vmatpush1.bf16.msra.mxu0 %v186
    %643 = vmatprep.subr.bf16.mxu0 0
    %644 = vmatpush1.bf16.msra.mxu0 %v183
    %645 = vmatprep.subr.bf16.mxu0 0
    %646 = vmatpush1.bf16.msra.mxu0 %v180
    %647 = vmatprep.subr.bf16.mxu0 0
    %648 = vmatpush2.bf16.msra.mxu0 0
    %649 = vmatprep.subr.bf16.mxu0 0
    %650 = vmatpush2.bf16.msra.mxu0 0
    %651 = vmatprep.subr.bf16.mxu0 0
    %652 = vmatpush2.bf16.msra.mxu0 0
    %653 = vmatprep.subr.bf16.mxu0 0
    %654 = vmatpush2.bf16.msra.mxu0 0
    %655 = vmatprep.subr.bf16.mxu0 0
    %656 = vmatpush2.bf16.msra.mxu0 0
    %657 = vmatprep.subr.bf16.mxu0 0
    %658 = vmatpush2.bf16.msra.mxu0 0
    %659 = vmatprep.subr.bf16.mxu0 0
    %660 = vmatpush2.bf16.msra.mxu0 0
    %661 = vmatprep.subr.bf16.mxu0 0
    %662 = vmatpush2.bf16.msra.mxu0 0
    %663 = vmatprep.mubr.bf16.mxu0 0
    %664 = vmatmul.mubr.bf16.gmra.mxu0 %v588
    %v665 = vpop.f32.mrf.mxu0
    %v666 = vadd.f32 %v134, %v665
    %v667 = vpop.f32.mrf.mxu0
    %v668 = vpop.f32.mrf.mxu0
    %v669 = vpop.f32.mrf.mxu0
    %670 = vdwg.mxu0
    %v671 = vxor.u32 %v625, 2147483648
    %v672 = vmul.f32 %v671, 1.442695
    %v673 = vpow.pop %v672
    %v674 = vadd.f32 %v673, 1.0
    %v675 = vrcp.pop %v674
    %v676 = vmul.f32 1.0, %v675
    %v677 = vtanh.pop %v627
    %v678 = vxor.u32 %v666, 2147483648
    %v679 = vmul.f32 %v678, 1.442695
    %v680 = vpow.pop %v679
    %v681 = vadd.f32 %v680, 1.0
    %v682 = vrcp.pop %v681
    %v683 = vmul.f32 1.0, %v682
    %v684 = vtanh.pop %v666
    %686 = vrot.lane.b32.xlu0 %v568, 32
    %v687 = vpop.permute.xlu0 %686
    %689 = vrot.lane.b32.xlu0 %v568, 64
    %v690 = vpop.permute.xlu0 %689
    %692 = vrot.lane.b32.xlu0 %v568, 96
    %v693 = vpop.permute.xlu0 %692
    %v695 = vsel %vm119, %v568, %v687
    %v696 = vsel %vm202, %v695, %v690
    %v697 = vsel %vm313, %v696, %v693
    %v698 = vmul.f32 %v676, %v677
    %v699 = vsub.f32 1.0, %v676
    %v700 = vmul.f32 %v699, %v697
    %v701 = vadd.f32 %v698, %v700
    %703 = vrot.lane.b32.xlu0 %v684, 64
    %v704 = vpop.permute.xlu0 %703
    %707 = vrot.lane.b32.xlu0 %v701, 32
    %v708 = vpop.permute.xlu0 %707
    %v710 = vsel %vm119, %v704, %v708
    %v711 = vpack.c.bf16 %v710, %v710
    %v712 = vpack.c.bf16 %v708, %v708
    %v714 = vsel %vm119, %v712, 0
    %716 = vmatprep.subr.bf16.mxu0 %v405
    %717 = vmatpush1.bf16.msra.mxu0 %v404
    %718 = vmatprep.subr.bf16.mxu0 %v403
    %719 = vmatpush1.bf16.msra.mxu0 %v402
    %720 = vmatprep.subr.bf16.mxu0 %v401
    %721 = vmatpush1.bf16.msra.mxu0 %v400
    %722 = vmatprep.subr.bf16.mxu0 %v399
    %723 = vmatpush1.bf16.msra.mxu0 %v398
    %724 = vmatprep.subr.bf16.mxu0 %v397
    %725 = vmatpush1.bf16.msra.mxu0 %v396
    %726 = vmatprep.subr.bf16.mxu0 %v395
    %727 = vmatpush1.bf16.msra.mxu0 %v394
    %728 = vmatprep.subr.bf16.mxu0 %v393
    %729 = vmatpush1.bf16.msra.mxu0 %v392
    %730 = vmatprep.subr.bf16.mxu0 %v391
    %731 = vmatpush1.bf16.msra.mxu0 %v390
    %732 = vmatprep.subr.bf16.mxu0 0
    %733 = vmatpush2.bf16.msra.mxu0 0
    %734 = vmatprep.subr.bf16.mxu0 0
    %735 = vmatpush2.bf16.msra.mxu0 0
    %736 = vmatprep.subr.bf16.mxu0 0
    %737 = vmatpush2.bf16.msra.mxu0 0
    %738 = vmatprep.subr.bf16.mxu0 0
    %739 = vmatpush2.bf16.msra.mxu0 0
    %740 = vmatprep.subr.bf16.mxu0 0
    %741 = vmatpush2.bf16.msra.mxu0 0
    %742 = vmatprep.subr.bf16.mxu0 0
    %743 = vmatpush2.bf16.msra.mxu0 0
    %744 = vmatprep.subr.bf16.mxu0 %v409
    %745 = vmatpush2.bf16.msra.mxu0 %v408
    %746 = vmatprep.subr.bf16.mxu0 %v407
    %747 = vmatpush2.bf16.msra.mxu0 %v406
    %748 = vmatprep.mubr.bf16.mxu0 %v714
    %749 = vmatmul.mubr.bf16.gmra.mxu0 %v711
    %v750 = vpop.f32.mrf.mxu0
    %v751 = vadd.f32 0.0, %v750
    %v752 = vpop.f32.mrf.mxu0
    %v753 = vadd.f32 0.0, %v752
    %v754 = vpop.f32.mrf.mxu0
    %v755 = vpop.f32.mrf.mxu0
    %756 = vdwg.mxu0
    %v757 = vtanh.pop %v751
    %v758 = vtanh.pop %v753
    %v759 = vmul.f32 %v757, %v480
    %v760 = vmul.f32 %v758, %v484
    %v761 = vsel %vm489, %v759, 0.0
    %762 = vadd.xlane.f32.xlu0 %v761
    %v763 = vpop.xlane.xlu0 %762
    %765 = vrot.lane.b32.xlu0 %v759, 64
    %v766 = vpop.permute.xlu0 %765
    %v768 = vsel %vm489, %v766, 0.0
    %769 = vadd.xlane.f32.xlu0 %v768
    %v770 = vpop.xlane.xlu0 %769
    %v771 = vsel %vm489, %v760, 0.0
    %772 = vadd.xlane.f32.xlu0 %v771
    %v773 = vpop.xlane.xlu0 %772
    %775 = vrot.lane.b32.xlu0 %v760, 64
    %v776 = vpop.permute.xlu0 %775
    %v778 = vsel %vm489, %v776, 0.0
    %779 = vadd.xlane.f32.xlu0 %v778
    %v780 = vpop.xlane.xlu0 %779
    %v781 = vsel %vm510, %v763, %v770
    %v782 = vsel %vm512, %v781, %v773
    %v783 = vsel %vm514, %v782, %v780
    %v784 = vsel %vm516, %v783, -inf
    %785 = vmax.xlane.f32.xlu0 %v784
    %v786 = vpop.xlane.xlu0 %785
    %v787 = vsub.f32 %v783, %v786
    %v788 = vmul.f32 %v787, 1.442695
    %v789 = vpow.pop %v788
    %v790 = vsel %vm516, %v789, 0.0
    %791 = vadd.xlane.f32.xlu0 %v790
    %v792 = vpop.xlane.xlu0 %791
    %v793 = vrcp.pop %v792
    %v794 = vmul.f32 %v789, %v793
    %796 = vset.pattern.permute.xlu0 0
    %797 = vperm.xlu0 %796, %v794
    %v798 = vpop.permute.xlu0 %797
    %v800 = vmul.f32 %v798, %v701
    %v801 = vadd.f32 %v800, 0.0
    %802 = vset.pattern.permute.xlu0 1
    %803 = vperm.xlu0 %802, %v794
    %v804 = vpop.permute.xlu0 %803
    %v806 = vmul.f32 %v804, %v701
    %808 = vrot.lane.b32.xlu0 %v806, 96
    %v809 = vpop.permute.xlu0 %808
    %v811 = vadd.f32 %v801, %v809
    %812 = vset.pattern.permute.xlu0 2
    %813 = vperm.xlu0 %812, %v794
    %v814 = vpop.permute.xlu0 %813
    %v816 = vmul.f32 %v814, %v701
    %818 = vrot.lane.b32.xlu0 %v816, 64
    %v819 = vpop.permute.xlu0 %818
    %v821 = vadd.f32 %v811, %v819
    %822 = vset.pattern.permute.xlu0 3
    %823 = vperm.xlu0 %822, %v794
    %v824 = vpop.permute.xlu0 %823
    %v826 = vmul.f32 %v824, %v701
    %828 = vrot.lane.b32.xlu0 %v826, 32
    %v829 = vpop.permute.xlu0 %828
    %v831 = vadd.f32 %v821, %v829
    %v832 = vsub.f32 1.0, %v683
    %v833 = vmul.f32 %v832, %v568
    %v834 = vmul.f32 %v683, %v831
    %v835 = vadd.f32 %v833, %v834
    %v836 = vtanh.pop %v835
    %838 = vrot.lane.b32.xlu0 %v836, 32
    %v839 = vpop.permute.xlu0 %838
    %v841 = vmul.f32 %v683, %v839
    %843 = vrot.lane.b32.xlu0 %v841, 96
    %v844 = vpop.permute.xlu0 %843
    %s846 = scalar_lea.vmem [#allocation10], 2
    %847 = vst.msk [vmem:[%s846] sm:$0x3] %vm579, %v844
    %s848 = scalar_lea.vmem [#allocation11], 2
    %849 = vst [vmem:[%s848] sm:$0x3] %v701
    %s850 = scalar_lea.vmem %s7, 2
    %851 = vst.msk [vmem:[%s850] sm:$0x3] %vm516, %v794
    %s852 = scalar_lea.vmem [#allocation4], 4
    %v853 = vld [vmem:[%s852] sm:$0x3]
    %v854 = vsel %vm119, %v853, %v841
    %v855 = vpack.c.bf16 %v854, %v854
    %v857 = vsel %vm202, %v855, 0
    %859 = vmatprep.subr.bf16.mxu0 0
    %860 = vmatpush1.bf16.msra.mxu0 0
    %861 = vmatprep.subr.bf16.mxu0 0
    %862 = vmatpush1.bf16.msra.mxu0 0
    %863 = vmatprep.subr.bf16.mxu0 0
    %864 = vmatpush1.bf16.msra.mxu0 0
    %865 = vmatprep.subr.bf16.mxu0 0
    %866 = vmatpush1.bf16.msra.mxu0 0
    %867 = vmatprep.subr.bf16.mxu0 %v188
    %868 = vmatpush1.bf16.msra.mxu0 %v187
    %869 = vmatprep.subr.bf16.mxu0 %v185
    %870 = vmatpush1.bf16.msra.mxu0 %v184
    %871 = vmatprep.subr.bf16.mxu0 %v182
    %872 = vmatpush1.bf16.msra.mxu0 %v181
    %873 = vmatprep.subr.bf16.mxu0 %v179
    %874 = vmatpush1.bf16.msra.mxu0 %v178
    %875 = vmatprep.subr.bf16.mxu0 0
    %876 = vmatpush2.bf16.msra.mxu0 0
    %877 = vmatprep.subr.bf16.mxu0 0
    %878 = vmatpush2.bf16.msra.mxu0 0
    %879 = vmatprep.subr.bf16.mxu0 0
    %880 = vmatpush2.bf16.msra.mxu0 0
    %881 = vmatprep.subr.bf16.mxu0 0
    %882 = vmatpush2.bf16.msra.mxu0 0
    %883 = vmatprep.subr.bf16.mxu0 0
    %884 = vmatpush2.bf16.msra.mxu0 0
    %885 = vmatprep.subr.bf16.mxu0 0
    %886 = vmatpush2.bf16.msra.mxu0 0
    %887 = vmatprep.subr.bf16.mxu0 0
    %888 = vmatpush2.bf16.msra.mxu0 0
    %889 = vmatprep.subr.bf16.mxu0 0
    %890 = vmatpush2.bf16.msra.mxu0 0
    %891 = vmatprep.mubr.bf16.mxu0 0
    %892 = vmatmul.mubr.bf16.gmra.mxu0 %v857
    %v893 = vpop.f32.mrf.mxu0
    %v894 = vadd.f32 %v126, %v893
    %v895 = vpop.f32.mrf.mxu0
    %v896 = vadd.f32 %v130, %v895
    %v897 = vpop.f32.mrf.mxu0
    %v898 = vpop.f32.mrf.mxu0
    %899 = vdwg.mxu0
    %900 = vmatprep.subr.bf16.mxu0 0
    %901 = vmatpush1.bf16.msra.mxu0 0
    %902 = vmatprep.subr.bf16.mxu0 0
    %903 = vmatpush1.bf16.msra.mxu0 0
    %904 = vmatprep.subr.bf16.mxu0 0
    %905 = vmatpush1.bf16.msra.mxu0 0
    %906 = vmatprep.subr.bf16.mxu0 0
    %907 = vmatpush1.bf16.msra.mxu0 0
    %908 = vmatprep.subr.bf16.mxu0 0
    %909 = vmatpush1.bf16.msra.mxu0 %v189
    %910 = vmatprep.subr.bf16.mxu0 0
    %911 = vmatpush1.bf16.msra.mxu0 %v186
    %912 = vmatprep.subr.bf16.mxu0 0
    %913 = vmatpush1.bf16.msra.mxu0 %v183
    %914 = vmatprep.subr.bf16.mxu0 0
    %915 = vmatpush1.bf16.msra.mxu0 %v180
    %916 = vmatprep.subr.bf16.mxu0 0
    %917 = vmatpush2.bf16.msra.mxu0 0
    %918 = vmatprep.subr.bf16.mxu0 0
    %919 = vmatpush2.bf16.msra.mxu0 0
    %920 = vmatprep.subr.bf16.mxu0 0
    %921 = vmatpush2.bf16.msra.mxu0 0
    %922 = vmatprep.subr.bf16.mxu0 0
    %923 = vmatpush2.bf16.msra.mxu0 0
    %924 = vmatprep.subr.bf16.mxu0 0
    %925 = vmatpush2.bf16.msra.mxu0 0
    %926 = vmatprep.subr.bf16.mxu0 0
    %927 = vmatpush2.bf16.msra.mxu0 0
    %928 = vmatprep.subr.bf16.mxu0 0
    %929 = vmatpush2.bf16.msra.mxu0 0
    %930 = vmatprep.subr.bf16.mxu0 0
    %931 = vmatpush2.bf16.msra.mxu0 0
    %932 = vmatprep.mubr.bf16.mxu0 0
    %933 = vmatmul.mubr.bf16.gmra.mxu0 %v857
    %v934 = vpop.f32.mrf.mxu0
    %v935 = vadd.f32 %v134, %v934
    %v936 = vpop.f32.mrf.mxu0
    %v937 = vpop.f32.mrf.mxu0
    %v938 = vpop.f32.mrf.mxu0
    %939 = vdwg.mxu0
    %v940 = vxor.u32 %v894, 2147483648
    %v941 = vmul.f32 %v940, 1.442695
    %v942 = vpow.pop %v941
    %v943 = vadd.f32 %v942, 1.0
    %v944 = vrcp.pop %v943
    %v945 = vmul.f32 1.0, %v944
    %v946 = vtanh.pop %v896
    %v947 = vxor.u32 %v935, 2147483648
    %v948 = vmul.f32 %v947, 1.442695
    %v949 = vpow.pop %v948
    %v950 = vadd.f32 %v949, 1.0
    %v951 = vrcp.pop %v950
    %v952 = vmul.f32 1.0, %v951
    %v953 = vtanh.pop %v935
    %955 = vrot.lane.b32.xlu0 %v835, 32
    %v956 = vpop.permute.xlu0 %955
    %958 = vrot.lane.b32.xlu0 %v835, 64
    %v959 = vpop.permute.xlu0 %958
    %961 = vrot.lane.b32.xlu0 %v835, 96
    %v962 = vpop.permute.xlu0 %961
    %v964 = vsel %vm119, %v835, %v956
    %v965 = vsel %vm202, %v964, %v959
    %v966 = vsel %vm313, %v965, %v962
    %v967 = vmul.f32 %v945, %v946
    %v968 = vsub.f32 1.0, %v945
    %v969 = vmul.f32 %v968, %v966
    %v970 = vadd.f32 %v967, %v969
    %972 = vrot.lane.b32.xlu0 %v953, 64
    %v973 = vpop.permute.xlu0 %972
    %976 = vrot.lane.b32.xlu0 %v970, 32
    %v977 = vpop.permute.xlu0 %976
    %v979 = vsel %vm119, %v973, %v977
    %v980 = vpack.c.bf16 %v979, %v979
    %v981 = vpack.c.bf16 %v977, %v977
    %v983 = vsel %vm119, %v981, 0
    %985 = vmatprep.subr.bf16.mxu0 %v405
    %986 = vmatpush1.bf16.msra.mxu0 %v404
    %987 = vmatprep.subr.bf16.mxu0 %v403
    %988 = vmatpush1.bf16.msra.mxu0 %v402
    %989 = vmatprep.subr.bf16.mxu0 %v401
    %990 = vmatpush1.bf16.msra.mxu0 %v400
    %991 = vmatprep.subr.bf16.mxu0 %v399
    %992 = vmatpush1.bf16.msra.mxu0 %v398
    %993 = vmatprep.subr.bf16.mxu0 %v397
    %994 = vmatpush1.bf16.msra.mxu0 %v396
    %995 = vmatprep.subr.bf16.mxu0 %v395
    %996 = vmatpush1.bf16.msra.mxu0 %v394
    %997 = vmatprep.subr.bf16.mxu0 %v393
    %998 = vmatpush1.bf16.msra.mxu0 %v392
    %999 = vmatprep.subr.bf16.mxu0 %v391
    %1000 = vmatpush1.bf16.msra.mxu0 %v390
    %1001 = vmatprep.subr.bf16.mxu0 0
    %1002 = vmatpush2.bf16.msra.mxu0 0
    %1003 = vmatprep.subr.bf16.mxu0 0
    %1004 = vmatpush2.bf16.msra.mxu0 0
    %1005 = vmatprep.subr.bf16.mxu0 0
    %1006 = vmatpush2.bf16.msra.mxu0 0
    %1007 = vmatprep.subr.bf16.mxu0 0
    %1008 = vmatpush2.bf16.msra.mxu0 0
    %1009 = vmatprep.subr.bf16.mxu0 0
    %1010 = vmatpush2.bf16.msra.mxu0 0
    %1011 = vmatprep.subr.bf16.mxu0 0
    %1012 = vmatpush2.bf16.msra.mxu0 0
    %1013 = vmatprep.subr.bf16.mxu0 %v409
    %1014 = vmatpush2.bf16.msra.mxu0 %v408
    %1015 = vmatprep.subr.bf16.mxu0 %v407
    %1016 = vmatpush2.bf16.msra.mxu0 %v406
    %1017 = vmatprep.mubr.bf16.mxu0 %v983
    %1018 = vmatmul.mubr.bf16.gmra.mxu0 %v980
    %v1019 = vpop.f32.mrf.mxu0
    %v1020 = vadd.f32 0.0, %v1019
    %v1021 = vpop.f32.mrf.mxu0
    %v1022 = vadd.f32 0.0, %v1021
    %v1023 = vpop.f32.mrf.mxu0
    %v1024 = vpop.f32.mrf.mxu0
    %1025 = vdwg.mxu0
    %v1026 = vtanh.pop %v1020
    %v1027 = vtanh.pop %v1022
    %v1028 = vmul.f32 %v1026, %v480
    %v1029 = vmul.f32 %v1027, %v484
    %v1030 = vsel %vm489, %v1028, 0.0
    %1031 = vadd.xlane.f32.xlu0 %v1030
    %v1032 = vpop.xlane.xlu0 %1031
    %1034 = vrot.lane.b32.xlu0 %v1028, 64
    %v1035 = vpop.permute.xlu0 %1034
    %v1037 = vsel %vm489, %v1035, 0.0
    %1038 = vadd.xlane.f32.xlu0 %v1037
    %v1039 = vpop.xlane.xlu0 %1038
    %v1040 = vsel %vm489, %v1029, 0.0
    %1041 = vadd.xlane.f32.xlu0 %v1040
    %v1042 = vpop.xlane.xlu0 %1041
    %1044 = vrot.lane.b32.xlu0 %v1029, 64
    %v1045 = vpop.permute.xlu0 %1044
    %v1047 = vsel %vm489, %v1045, 0.0
    %1048 = vadd.xlane.f32.xlu0 %v1047
    %v1049 = vpop.xlane.xlu0 %1048
    %v1050 = vsel %vm510, %v1032, %v1039
    %v1051 = vsel %vm512, %v1050, %v1042
    %v1052 = vsel %vm514, %v1051, %v1049
    %v1053 = vsel %vm516, %v1052, -inf
    %1054 = vmax.xlane.f32.xlu0 %v1053
    %v1055 = vpop.xlane.xlu0 %1054
    %v1056 = vsub.f32 %v1052, %v1055
    %v1057 = vmul.f32 %v1056, 1.442695
    %v1058 = vpow.pop %v1057
    %v1059 = vsel %vm516, %v1058, 0.0
    %1060 = vadd.xlane.f32.xlu0 %v1059
    %v1061 = vpop.xlane.xlu0 %1060
    %v1062 = vrcp.pop %v1061
    %v1063 = vmul.f32 %v1058, %v1062
    %1065 = vset.pattern.permute.xlu0 0
    %1066 = vperm.xlu0 %1065, %v1063
    %v1067 = vpop.permute.xlu0 %1066
    %v1069 = vmul.f32 %v1067, %v970
    %v1070 = vadd.f32 %v1069, 0.0
    %1071 = vset.pattern.permute.xlu0 1
    %1072 = vperm.xlu0 %1071, %v1063
    %v1073 = vpop.permute.xlu0 %1072
    %v1075 = vmul.f32 %v1073, %v970
    %1077 = vrot.lane.b32.xlu0 %v1075, 96
    %v1078 = vpop.permute.xlu0 %1077
    %v1080 = vadd.f32 %v1070, %v1078
    %1081 = vset.pattern.permute.xlu0 2
    %1082 = vperm.xlu0 %1081, %v1063
    %v1083 = vpop.permute.xlu0 %1082
    %v1085 = vmul.f32 %v1083, %v970
    %1087 = vrot.lane.b32.xlu0 %v1085, 64
    %v1088 = vpop.permute.xlu0 %1087
    %v1090 = vadd.f32 %v1080, %v1088
    %1091 = vset.pattern.permute.xlu0 3
    %1092 = vperm.xlu0 %1091, %v1063
    %v1093 = vpop.permute.xlu0 %1092
    %v1095 = vmul.f32 %v1093, %v970
    %1097 = vrot.lane.b32.xlu0 %v1095, 32
    %v1098 = vpop.permute.xlu0 %1097
    %v1100 = vadd.f32 %v1090, %v1098
    %v1101 = vsub.f32 1.0, %v952
    %v1102 = vmul.f32 %v1101, %v835
    %v1103 = vmul.f32 %v952, %v1100
    %v1104 = vadd.f32 %v1102, %v1103
    %v1105 = vtanh.pop %v1104
    %1107 = vrot.lane.b32.xlu0 %v1105, 32
    %v1108 = vpop.permute.xlu0 %1107
    %v1110 = vmul.f32 %v952, %v1108
    %1112 = vrot.lane.b32.xlu0 %v1110, 96
    %v1113 = vpop.permute.xlu0 %1112
    %s1115 = scalar_lea.vmem [#allocation10], 4
    %1116 = vst.msk [vmem:[%s1115] sm:$0x3] %vm579, %v1113
    %s1117 = scalar_lea.vmem [#allocation11], 4
    %1118 = vst [vmem:[%s1117] sm:$0x3] %v970
    %s1119 = scalar_lea.vmem %s7, 4
    %1120 = vst.msk [vmem:[%s1119] sm:$0x3] %vm516, %v1063
    %s1121 = scalar_lea.vmem [#allocation4], 6
    %v1122 = vld [vmem:[%s1121] sm:$0x3]
    %v1123 = vsel %vm119, %v1122, %v1110
    %v1124 = vpack.c.bf16 %v1123, %v1123
    %v1126 = vsel %vm202, %v1124, 0
    %1128 = vmatprep.subr.bf16.mxu0 0
    %1129 = vmatpush1.bf16.msra.mxu0 0
    %1130 = vmatprep.subr.bf16.mxu0 0
    %1131 = vmatpush1.bf16.msra.mxu0 0
    %1132 = vmatprep.subr.bf16.mxu0 0
    %1133 = vmatpush1.bf16.msra.mxu0 0
    %1134 = vmatprep.subr.bf16.mxu0 0
    %1135 = vmatpush1.bf16.msra.mxu0 0
    %1136 = vmatprep.subr.bf16.mxu0 %v188
    %1137 = vmatpush1.bf16.msra.mxu0 %v187
    %1138 = vmatprep.subr.bf16.mxu0 %v185
    %1139 = vmatpush1.bf16.msra.mxu0 %v184
    %1140 = vmatprep.subr.bf16.mxu0 %v182
    %1141 = vmatpush1.bf16.msra.mxu0 %v181
    %1142 = vmatprep.subr.bf16.mxu0 %v179
    %1143 = vmatpush1.bf16.msra.mxu0 %v178
    %1144 = vmatprep.subr.bf16.mxu0 0
    %1145 = vmatpush2.bf16.msra.mxu0 0
    %1146 = vmatprep.subr.bf16.mxu0 0
    %1147 = vmatpush2.bf16.msra.mxu0 0
    %1148 = vmatprep.subr.bf16.mxu0 0
    %1149 = vmatpush2.bf16.msra.mxu0 0
    %1150 = vmatprep.subr.bf16.mxu0 0
    %1151 = vmatpush2.bf16.msra.mxu0 0
    %1152 = vmatprep.subr.bf16.mxu0 0
    %1153 = vmatpush2.bf16.msra.mxu0 0
    %1154 = vmatprep.subr.bf16.mxu0 0
    %1155 = vmatpush2.bf16.msra.mxu0 0
    %1156 = vmatprep.subr.bf16.mxu0 0
    %1157 = vmatpush2.bf16.msra.mxu0 0
    %1158 = vmatprep.subr.bf16.mxu0 0
    %1159 = vmatpush2.bf16.msra.mxu0 0
    %1160 = vmatprep.mubr.bf16.mxu0 0
    %1161 = vmatmul.mubr.bf16.gmra.mxu0 %v1126
    %v1162 = vpop.f32.mrf.mxu0
    %v1163 = vadd.f32 %v126, %v1162
    %v1164 = vpop.f32.mrf.mxu0
    %v1165 = vadd.f32 %v130, %v1164
    %v1166 = vpop.f32.mrf.mxu0
    %v1167 = vpop.f32.mrf.mxu0
    %1168 = vdwg.mxu0
    %1169 = vmatprep.subr.bf16.mxu0 0
    %1170 = vmatpush1.bf16.msra.mxu0 0
    %1171 = vmatprep.subr.bf16.mxu0 0
    %1172 = vmatpush1.bf16.msra.mxu0 0
    %1173 = vmatprep.subr.bf16.mxu0 0
    %1174 = vmatpush1.bf16.msra.mxu0 0
    %1175 = vmatprep.subr.bf16.mxu0 0
    %1176 = vmatpush1.bf16.msra.mxu0 0
    %1177 = vmatprep.subr.bf16.mxu0 0
    %1178 = vmatpush1.bf16.msra.mxu0 %v189
    %1179 = vmatprep.subr.bf16.mxu0 0
    %1180 = vmatpush1.bf16.msra.mxu0 %v186
    %1181 = vmatprep.subr.bf16.mxu0 0
    %1182 = vmatpush1.bf16.msra.mxu0 %v183
    %1183 = vmatprep.subr.bf16.mxu0 0
    %1184 = vmatpush1.bf16.msra.mxu0 %v180
    %1185 = vmatprep.subr.bf16.mxu0 0
    %1186 = vmatpush2.bf16.msra.mxu0 0
    %1187 = vmatprep.subr.bf16.mxu0 0
    %1188 = vmatpush2.bf16.msra.mxu0 0
    %1189 = vmatprep.subr.bf16.mxu0 0
    %1190 = vmatpush2.bf16.msra.mxu0 0
    %1191 = vmatprep.subr.bf16.mxu0 0
    %1192 = vmatpush2.bf16.msra.mxu0 0
    %1193 = vmatprep.subr.bf16.mxu0 0
    %1194 = vmatpush2.bf16.msra.mxu0 0
    %1195 = vmatprep.subr.bf16.mxu0 0
    %1196 = vmatpush2.bf16.msra.mxu0 0
    %1197 = vmatprep.subr.bf16.mxu0 0
    %1198 = vmatpush2.bf16.msra.mxu0 0
    %1199 = vmatprep.subr.bf16.mxu0 0
    %1200 = vmatpush2.bf16.msra.mxu0 0
    %1201 = vmatprep.mubr.bf16.mxu0 0
    %1202 = vmatmul.mubr.bf16.gmra.mxu0 %v1126
    %v1203 = vpop.f32.mrf.mxu0
    %v1204 = vadd.f32 %v134, %v1203
    %v1205 = vpop.f32.mrf.mxu0
    %v1206 = vpop.f32.mrf.mxu0
    %v1207 = vpop.f32.mrf.mxu0
    %1208 = vdwg.mxu0
    %v1209 = vxor.u32 %v1163, 2147483648
    %v1210 = vmul.f32 %v1209, 1.442695
    %v1211 = vpow.pop %v1210
    %v1212 = vadd.f32 %v1211, 1.0
    %v1213 = vrcp.pop %v1212
    %v1214 = vmul.f32 1.0, %v1213
    %v1215 = vtanh.pop %v1165
    %v1216 = vxor.u32 %v1204, 2147483648
    %v1217 = vmul.f32 %v1216, 1.442695
    %v1218 = vpow.pop %v1217
    %v1219 = vadd.f32 %v1218, 1.0
    %v1220 = vrcp.pop %v1219
    %v1221 = vmul.f32 1.0, %v1220
    %v1222 = vtanh.pop %v1204
    %1224 = vrot.lane.b32.xlu0 %v1104, 32
    %v1225 = vpop.permute.xlu0 %1224
    %1227 = vrot.lane.b32.xlu0 %v1104, 64
    %v1228 = vpop.permute.xlu0 %1227
    %1230 = vrot.lane.b32.xlu0 %v1104, 96
    %v1231 = vpop.permute.xlu0 %1230
    %v1233 = vsel %vm119, %v1104, %v1225
    %v1234 = vsel %vm202, %v1233, %v1228
    %v1235 = vsel %vm313, %v1234, %v1231
    %v1236 = vmul.f32 %v1214, %v1215
    %v1237 = vsub.f32 1.0, %v1214
    %v1238 = vmul.f32 %v1237, %v1235
    %v1239 = vadd.f32 %v1236, %v1238
    %1241 = vrot.lane.b32.xlu0 %v1222, 64
    %v1242 = vpop.permute.xlu0 %1241
    %1245 = vrot.lane.b32.xlu0 %v1239, 32
    %v1246 = vpop.permute.xlu0 %1245
    %v1248 = vsel %vm119, %v1242, %v1246
    %v1249 = vpack.c.bf16 %v1248, %v1248
    %v1250 = vpack.c.bf16 %v1246, %v1246
    %v1252 = vsel %vm119, %v1250, 0
    %1254 = vmatprep.subr.bf16.mxu0 %v405
    %1255 = vmatpush1.bf16.msra.mxu0 %v404
    %1256 = vmatprep.subr.bf16.mxu0 %v403
    %1257 = vmatpush1.bf16.msra.mxu0 %v402
    %1258 = vmatprep.subr.bf16.mxu0 %v401
    %1259 = vmatpush1.bf16.msra.mxu0 %v400
    %1260 = vmatprep.subr.bf16.mxu0 %v399
    %1261 = vmatpush1.bf16.msra.mxu0 %v398
    %1262 = vmatprep.subr.bf16.mxu0 %v397
    %1263 = vmatpush1.bf16.msra.mxu0 %v396
    %1264 = vmatprep.subr.bf16.mxu0 %v395
    %1265 = vmatpush1.bf16.msra.mxu0 %v394
    %1266 = vmatprep.subr.bf16.mxu0 %v393
    %1267 = vmatpush1.bf16.msra.mxu0 %v392
    %1268 = vmatprep.subr.bf16.mxu0 %v391
    %1269 = vmatpush1.bf16.msra.mxu0 %v390
    %1270 = vmatprep.subr.bf16.mxu0 0
    %1271 = vmatpush2.bf16.msra.mxu0 0
    %1272 = vmatprep.subr.bf16.mxu0 0
    %1273 = vmatpush2.bf16.msra.mxu0 0
    %1274 = vmatprep.subr.bf16.mxu0 0
    %1275 = vmatpush2.bf16.msra.mxu0 0
    %1276 = vmatprep.subr.bf16.mxu0 0
    %1277 = vmatpush2.bf16.msra.mxu0 0
    %1278 = vmatprep.subr.bf16.mxu0 0
    %1279 = vmatpush2.bf16.msra.mxu0 0
    %1280 = vmatprep.subr.bf16.mxu0 0
    %1281 = vmatpush2.bf16.msra.mxu0 0
    %1282 = vmatprep.subr.bf16.mxu0 %v409
    %1283 = vmatpush2.bf16.msra.mxu0 %v408
    %1284 = vmatprep.subr.bf16.mxu0 %v407
    %1285 = vmatpush2.bf16.msra.mxu0 %v406
    %1286 = vmatprep.mubr.bf16.mxu0 %v1252
    %1287 = vmatmul.mubr.bf16.gmra.mxu0 %v1249
    %v1288 = vpop.f32.mrf.mxu0
    %v1289 = vadd.f32 0.0, %v1288
    %v1290 = vpop.f32.mrf.mxu0
    %v1291 = vadd.f32 0.0, %v1290
    %v1292 = vpop.f32.mrf.mxu0
    %v1293 = vpop.f32.mrf.mxu0
    %1294 = vdwg.mxu0
    %v1295 = vtanh.pop %v1289
    %v1296 = vtanh.pop %v1291
    %v1297 = vmul.f32 %v1295, %v480
    %v1298 = vmul.f32 %v1296, %v484
    %v1299 = vsel %vm489, %v1297, 0.0
    %1300 = vadd.xlane.f32.xlu0 %v1299
    %v1301 = vpop.xlane.xlu0 %1300
    %1303 = vrot.lane.b32.xlu0 %v1297, 64
    %v1304 = vpop.permute.xlu0 %1303
    %v1306 = vsel %vm489, %v1304, 0.0
    %1307 = vadd.xlane.f32.xlu0 %v1306
    %v1308 = vpop.xlane.xlu0 %1307
    %v1309 = vsel %vm489, %v1298, 0.0
    %1310 = vadd.xlane.f32.xlu0 %v1309
    %v1311 = vpop.xlane.xlu0 %1310
    %1313 = vrot.lane.b32.xlu0 %v1298, 64
    %v1314 = vpop.permute.xlu0 %1313
    %v1316 = vsel %vm489, %v1314, 0.0
    %1317 = vadd.xlane.f32.xlu0 %v1316
    %v1318 = vpop.xlane.xlu0 %1317
    %v1319 = vsel %vm510, %v1301, %v1308
    %v1320 = vsel %vm512, %v1319, %v1311
    %v1321 = vsel %vm514, %v1320, %v1318
    %v1322 = vsel %vm516, %v1321, -inf
    %1323 = vmax.xlane.f32.xlu0 %v1322
    %v1324 = vpop.xlane.xlu0 %1323
    %v1325 = vsub.f32 %v1321, %v1324
    %v1326 = vmul.f32 %v1325, 1.442695
    %v1327 = vpow.pop %v1326
    %v1328 = vsel %vm516, %v1327, 0.0
    %1329 = vadd.xlane.f32.xlu0 %v1328
    %v1330 = vpop.xlane.xlu0 %1329
    %v1331 = vrcp.pop %v1330
    %v1332 = vmul.f32 %v1327, %v1331
    %1334 = vset.pattern.permute.xlu0 0
    %1335 = vperm.xlu0 %1334, %v1332
    %v1336 = vpop.permute.xlu0 %1335
    %v1338 = vmul.f32 %v1336, %v1239
    %v1339 = vadd.f32 %v1338, 0.0
    %1340 = vset.pattern.permute.xlu0 1
    %1341 = vperm.xlu0 %1340, %v1332
    %v1342 = vpop.permute.xlu0 %1341
    %v1344 = vmul.f32 %v1342, %v1239
    %1346 = vrot.lane.b32.xlu0 %v1344, 96
    %v1347 = vpop.permute.xlu0 %1346
    %v1349 = vadd.f32 %v1339, %v1347
    %1350 = vset.pattern.permute.xlu0 2
    %1351 = vperm.xlu0 %1350, %v1332
    %v1352 = vpop.permute.xlu0 %1351
    %v1354 = vmul.f32 %v1352, %v1239
    %1356 = vrot.lane.b32.xlu0 %v1354, 64
    %v1357 = vpop.permute.xlu0 %1356
    %v1359 = vadd.f32 %v1349, %v1357
    %1360 = vset.pattern.permute.xlu0 3
    %1361 = vperm.xlu0 %1360, %v1332
    %v1362 = vpop.permute.xlu0 %1361
    %v1364 = vmul.f32 %v1362, %v1239
    %1366 = vrot.lane.b32.xlu0 %v1364, 32
    %v1367 = vpop.permute.xlu0 %1366
    %v1369 = vadd.f32 %v1359, %v1367
    %v1370 = vsub.f32 1.0, %v1221
    %v1371 = vmul.f32 %v1370, %v1104
    %v1372 = vmul.f32 %v1221, %v1369
    %v1373 = vadd.f32 %v1371, %v1372
    %v1374 = vtanh.pop %v1373
    %1376 = vrot.lane.b32.xlu0 %v1374, 32
    %v1377 = vpop.permute.xlu0 %1376
    %v1379 = vmul.f32 %v1221, %v1377
    %1381 = vrot.lane.b32.xlu0 %v1379, 96
    %v1382 = vpop.permute.xlu0 %1381
    %s1384 = scalar_lea.vmem [#allocation10], 6
    %1385 = vst.msk [vmem:[%s1384] sm:$0x3] %vm579, %v1382
    %s1386 = scalar_lea.vmem [#allocation11], 6
    %1387 = vst [vmem:[%s1386] sm:$0x3] %v1239
    %s1388 = scalar_lea.vmem %s7, 6
    %1389 = vst.msk [vmem:[%s1388] sm:$0x3] %vm516, %v1332
    %s1390 = scalar_lea.vmem [#allocation4], 8
    %v1391 = vld [vmem:[%s1390] sm:$0x3]
    %v1392 = vsel %vm119, %v1391, %v1379
    %v1393 = vpack.c.bf16 %v1392, %v1392
    %v1395 = vsel %vm202, %v1393, 0
    %1397 = vmatprep.subr.bf16.mxu0 0
    %1398 = vmatpush1.bf16.msra.mxu0 0
    %1399 = vmatprep.subr.bf16.mxu0 0
    %1400 = vmatpush1.bf16.msra.mxu0 0
    %1401 = vmatprep.subr.bf16.mxu0 0
    %1402 = vmatpush1.bf16.msra.mxu0 0
    %1403 = vmatprep.subr.bf16.mxu0 0
    %1404 = vmatpush1.bf16.msra.mxu0 0
    %1405 = vmatprep.subr.bf16.mxu0 %v188
    %1406 = vmatpush1.bf16.msra.mxu0 %v187
    %1407 = vmatprep.subr.bf16.mxu0 %v185
    %1408 = vmatpush1.bf16.msra.mxu0 %v184
    %1409 = vmatprep.subr.bf16.mxu0 %v182
    %1410 = vmatpush1.bf16.msra.mxu0 %v181
    %1411 = vmatprep.subr.bf16.mxu0 %v179
    %1412 = vmatpush1.bf16.msra.mxu0 %v178
    %1413 = vmatprep.subr.bf16.mxu0 0
    %1414 = vmatpush2.bf16.msra.mxu0 0
    %1415 = vmatprep.subr.bf16.mxu0 0
    %1416 = vmatpush2.bf16.msra.mxu0 0
    %1417 = vmatprep.subr.bf16.mxu0 0
    %1418 = vmatpush2.bf16.msra.mxu0 0
    %1419 = vmatprep.subr.bf16.mxu0 0
    %1420 = vmatpush2.bf16.msra.mxu0 0
    %1421 = vmatprep.subr.bf16.mxu0 0
    %1422 = vmatpush2.bf16.msra.mxu0 0
    %1423 = vmatprep.subr.bf16.mxu0 0
    %1424 = vmatpush2.bf16.msra.mxu0 0
    %1425 = vmatprep.subr.bf16.mxu0 0
    %1426 = vmatpush2.bf16.msra.mxu0 0
    %1427 = vmatprep.subr.bf16.mxu0 0
    %1428 = vmatpush2.bf16.msra.mxu0 0
    %1429 = vmatprep.mubr.bf16.mxu0 0
    %1430 = vmatmul.mubr.bf16.gmra.mxu0 %v1395
    %v1431 = vpop.f32.mrf.mxu0
    %v1432 = vadd.f32 %v126, %v1431
    %v1433 = vpop.f32.mrf.mxu0
    %v1434 = vadd.f32 %v130, %v1433
    %v1435 = vpop.f32.mrf.mxu0
    %v1436 = vpop.f32.mrf.mxu0
    %1437 = vdwg.mxu0
    %1438 = vmatprep.subr.bf16.mxu0 0
    %1439 = vmatpush1.bf16.msra.mxu0 0
    %1440 = vmatprep.subr.bf16.mxu0 0
    %1441 = vmatpush1.bf16.msra.mxu0 0
    %1442 = vmatprep.subr.bf16.mxu0 0
    %1443 = vmatpush1.bf16.msra.mxu0 0
    %1444 = vmatprep.subr.bf16.mxu0 0
    %1445 = vmatpush1.bf16.msra.mxu0 0
    %1446 = vmatprep.subr.bf16.mxu0 0
    %1447 = vmatpush1.bf16.msra.mxu0 %v189
    %1448 = vmatprep.subr.bf16.mxu0 0
    %1449 = vmatpush1.bf16.msra.mxu0 %v186
    %1450 = vmatprep.subr.bf16.mxu0 0
    %1451 = vmatpush1.bf16.msra.mxu0 %v183
    %1452 = vmatprep.subr.bf16.mxu0 0
    %1453 = vmatpush1.bf16.msra.mxu0 %v180
    %1454 = vmatprep.subr.bf16.mxu0 0
    %1455 = vmatpush2.bf16.msra.mxu0 0
    %1456 = vmatprep.subr.bf16.mxu0 0
    %1457 = vmatpush2.bf16.msra.mxu0 0
    %1458 = vmatprep.subr.bf16.mxu0 0
    %1459 = vmatpush2.bf16.msra.mxu0 0
    %1460 = vmatprep.subr.bf16.mxu0 0
    %1461 = vmatpush2.bf16.msra.mxu0 0
    %1462 = vmatprep.subr.bf16.mxu0 0
    %1463 = vmatpush2.bf16.msra.mxu0 0
    %1464 = vmatprep.subr.bf16.mxu0 0
    %1465 = vmatpush2.bf16.msra.mxu0 0
    %1466 = vmatprep.subr.bf16.mxu0 0
    %1467 = vmatpush2.bf16.msra.mxu0 0
    %1468 = vmatprep.subr.bf16.mxu0 0
    %1469 = vmatpush2.bf16.msra.mxu0 0
    %1470 = vmatprep.mubr.bf16.mxu0 0
    %1471 = vmatmul.mubr.bf16.gmra.mxu0 %v1395
    %v1472 = vpop.f32.mrf.mxu0
    %v1473 = vadd.f32 %v134, %v1472
    %v1474 = vpop.f32.mrf.mxu0
    %v1475 = vpop.f32.mrf.mxu0
    %v1476 = vpop.f32.mrf.mxu0
    %1477 = vdwg.mxu0
    %v1478 = vxor.u32 %v1432, 2147483648
    %v1479 = vmul.f32 %v1478, 1.442695
    %v1480 = vpow.pop %v1479
    %v1481 = vadd.f32 %v1480, 1.0
    %v1482 = vrcp.pop %v1481
    %v1483 = vmul.f32 1.0, %v1482
    %v1484 = vtanh.pop %v1434
    %v1485 = vxor.u32 %v1473, 2147483648
    %v1486 = vmul.f32 %v1485, 1.442695
    %v1487 = vpow.pop %v1486
    %v1488 = vadd.f32 %v1487, 1.0
    %v1489 = vrcp.pop %v1488
    %v1490 = vmul.f32 1.0, %v1489
    %v1491 = vtanh.pop %v1473
    %1493 = vrot.lane.b32.xlu0 %v1373, 32
    %v1494 = vpop.permute.xlu0 %1493
    %1496 = vrot.lane.b32.xlu0 %v1373, 64
    %v1497 = vpop.permute.xlu0 %1496
    %1499 = vrot.lane.b32.xlu0 %v1373, 96
    %v1500 = vpop.permute.xlu0 %1499
    %v1502 = vsel %vm119, %v1373, %v1494
    %v1503 = vsel %vm202, %v1502, %v1497
    %v1504 = vsel %vm313, %v1503, %v1500
    %v1505 = vmul.f32 %v1483, %v1484
    %v1506 = vsub.f32 1.0, %v1483
    %v1507 = vmul.f32 %v1506, %v1504
    %v1508 = vadd.f32 %v1505, %v1507
    %1510 = vrot.lane.b32.xlu0 %v1491, 64
    %v1511 = vpop.permute.xlu0 %1510
    %1514 = vrot.lane.b32.xlu0 %v1508, 32
    %v1515 = vpop.permute.xlu0 %1514
    %v1517 = vsel %vm119, %v1511, %v1515
    %v1518 = vpack.c.bf16 %v1517, %v1517
    %v1519 = vpack.c.bf16 %v1515, %v1515
    %v1521 = vsel %vm119, %v1519, 0
    %1523 = vmatprep.subr.bf16.mxu0 %v405
    %1524 = vmatpush1.bf16.msra.mxu0 %v404
    %1525 = vmatprep.subr.bf16.mxu0 %v403
    %1526 = vmatpush1.bf16.msra.mxu0 %v402
    %1527 = vmatprep.subr.bf16.mxu0 %v401
    %1528 = vmatpush1.bf16.msra.mxu0 %v400
    %1529 = vmatprep.subr.bf16.mxu0 %v399
    %1530 = vmatpush1.bf16.msra.mxu0 %v398
    %1531 = vmatprep.subr.bf16.mxu0 %v397
    %1532 = vmatpush1.bf16.msra.mxu0 %v396
    %1533 = vmatprep.subr.bf16.mxu0 %v395
    %1534 = vmatpush1.bf16.msra.mxu0 %v394
    %1535 = vmatprep.subr.bf16.mxu0 %v393
    %1536 = vmatpush1.bf16.msra.mxu0 %v392
    %1537 = vmatprep.subr.bf16.mxu0 %v391
    %1538 = vmatpush1.bf16.msra.mxu0 %v390
    %1539 = vmatprep.subr.bf16.mxu0 0
    %1540 = vmatpush2.bf16.msra.mxu0 0
    %1541 = vmatprep.subr.bf16.mxu0 0
    %1542 = vmatpush2.bf16.msra.mxu0 0
    %1543 = vmatprep.subr.bf16.mxu0 0
    %1544 = vmatpush2.bf16.msra.mxu0 0
    %1545 = vmatprep.subr.bf16.mxu0 0
    %1546 = vmatpush2.bf16.msra.mxu0 0
    %1547 = vmatprep.subr.bf16.mxu0 0
    %1548 = vmatpush2.bf16.msra.mxu0 0
    %1549 = vmatprep.subr.bf16.mxu0 0
    %1550 = vmatpush2.bf16.msra.mxu0 0
    %1551 = vmatprep.subr.bf16.mxu0 %v409
    %1552 = vmatpush2.bf16.msra.mxu0 %v408
    %1553 = vmatprep.subr.bf16.mxu0 %v407
    %1554 = vmatpush2.bf16.msra.mxu0 %v406
    %1555 = vmatprep.mubr.bf16.mxu0 %v1521
    %1556 = vmatmul.mubr.bf16.gmra.mxu0 %v1518
    %v1557 = vpop.f32.mrf.mxu0
    %v1558 = vadd.f32 0.0, %v1557
    %v1559 = vpop.f32.mrf.mxu0
    %v1560 = vadd.f32 0.0, %v1559
    %v1561 = vpop.f32.mrf.mxu0
    %v1562 = vpop.f32.mrf.mxu0
    %1563 = vdwg.mxu0
    %v1564 = vtanh.pop %v1558
    %v1565 = vtanh.pop %v1560
    %v1566 = vmul.f32 %v1564, %v480
    %v1567 = vmul.f32 %v1565, %v484
    %v1568 = vsel %vm489, %v1566, 0.0
    %1569 = vadd.xlane.f32.xlu0 %v1568
    %v1570 = vpop.xlane.xlu0 %1569
    %1572 = vrot.lane.b32.xlu0 %v1566, 64
    %v1573 = vpop.permute.xlu0 %1572
    %v1575 = vsel %vm489, %v1573, 0.0
    %1576 = vadd.xlane.f32.xlu0 %v1575
    %v1577 = vpop.xlane.xlu0 %1576
    %v1578 = vsel %vm489, %v1567, 0.0
    %1579 = vadd.xlane.f32.xlu0 %v1578
    %v1580 = vpop.xlane.xlu0 %1579
    %1582 = vrot.lane.b32.xlu0 %v1567, 64
    %v1583 = vpop.permute.xlu0 %1582
    %v1585 = vsel %vm489, %v1583, 0.0
    %1586 = vadd.xlane.f32.xlu0 %v1585
    %v1587 = vpop.xlane.xlu0 %1586
    %v1588 = vsel %vm510, %v1570, %v1577
    %v1589 = vsel %vm512, %v1588, %v1580
    %v1590 = vsel %vm514, %v1589, %v1587
    %v1591 = vsel %vm516, %v1590, -inf
    %1592 = vmax.xlane.f32.xlu0 %v1591
    %v1593 = vpop.xlane.xlu0 %1592
    %v1594 = vsub.f32 %v1590, %v1593
    %v1595 = vmul.f32 %v1594, 1.442695
    %v1596 = vpow.pop %v1595
    %v1597 = vsel %vm516, %v1596, 0.0
    %1598 = vadd.xlane.f32.xlu0 %v1597
    %v1599 = vpop.xlane.xlu0 %1598
    %v1600 = vrcp.pop %v1599
    %v1601 = vmul.f32 %v1596, %v1600
    %1603 = vset.pattern.permute.xlu0 0
    %1604 = vperm.xlu0 %1603, %v1601
    %v1605 = vpop.permute.xlu0 %1604
    %v1607 = vmul.f32 %v1605, %v1508
    %v1608 = vadd.f32 %v1607, 0.0
    %1609 = vset.pattern.permute.xlu0 1
    %1610 = vperm.xlu0 %1609, %v1601
    %v1611 = vpop.permute.xlu0 %1610
    %v1613 = vmul.f32 %v1611, %v1508
    %1615 = vrot.lane.b32.xlu0 %v1613, 96
    %v1616 = vpop.permute.xlu0 %1615
    %v1618 = vadd.f32 %v1608, %v1616
    %1619 = vset.pattern.permute.xlu0 2
    %1620 = vperm.xlu0 %1619, %v1601
    %v1621 = vpop.permute.xlu0 %1620
    %v1623 = vmul.f32 %v1621, %v1508
    %1625 = vrot.lane.b32.xlu0 %v1623, 64
    %v1626 = vpop.permute.xlu0 %1625
    %v1628 = vadd.f32 %v1618, %v1626
    %1629 = vset.pattern.permute.xlu0 3
    %1630 = vperm.xlu0 %1629, %v1601
    %v1631 = vpop.permute.xlu0 %1630
    %v1633 = vmul.f32 %v1631, %v1508
    %1635 = vrot.lane.b32.xlu0 %v1633, 32
    %v1636 = vpop.permute.xlu0 %1635
    %v1638 = vadd.f32 %v1628, %v1636
    %v1639 = vsub.f32 1.0, %v1490
    %v1640 = vmul.f32 %v1639, %v1373
    %v1641 = vmul.f32 %v1490, %v1638
    %v1642 = vadd.f32 %v1640, %v1641
    %v1643 = vtanh.pop %v1642
    %1645 = vrot.lane.b32.xlu0 %v1643, 32
    %v1646 = vpop.permute.xlu0 %1645
    %v1648 = vmul.f32 %v1490, %v1646
    %1650 = vrot.lane.b32.xlu0 %v1648, 96
    %v1651 = vpop.permute.xlu0 %1650
    %s1653 = scalar_lea.vmem [#allocation10], 8
    %1654 = vst.msk [vmem:[%s1653] sm:$0x3] %vm579, %v1651
    %s1655 = scalar_lea.vmem [#allocation11], 8
    %1656 = vst [vmem:[%s1655] sm:$0x3] %v1508
    %s1657 = scalar_lea.vmem %s7, 8
    %1658 = vst.msk [vmem:[%s1657] sm:$0x3] %vm516, %v1601
    %s1659 = scalar_lea.vmem [#allocation4], 10
    %v1660 = vld [vmem:[%s1659] sm:$0x3]
    %v1661 = vsel %vm119, %v1660, %v1648
    %v1662 = vpack.c.bf16 %v1661, %v1661
    %v1664 = vsel %vm202, %v1662, 0
    %1666 = vmatprep.subr.bf16.mxu0 0
    %1667 = vmatpush1.bf16.msra.mxu0 0
    %1668 = vmatprep.subr.bf16.mxu0 0
    %1669 = vmatpush1.bf16.msra.mxu0 0
    %1670 = vmatprep.subr.bf16.mxu0 0
    %1671 = vmatpush1.bf16.msra.mxu0 0
    %1672 = vmatprep.subr.bf16.mxu0 0
    %1673 = vmatpush1.bf16.msra.mxu0 0
    %1674 = vmatprep.subr.bf16.mxu0 %v188
    %1675 = vmatpush1.bf16.msra.mxu0 %v187
    %1676 = vmatprep.subr.bf16.mxu0 %v185
    %1677 = vmatpush1.bf16.msra.mxu0 %v184
    %1678 = vmatprep.subr.bf16.mxu0 %v182
    %1679 = vmatpush1.bf16.msra.mxu0 %v181
    %1680 = vmatprep.subr.bf16.mxu0 %v179
    %1681 = vmatpush1.bf16.msra.mxu0 %v178
    %1682 = vmatprep.subr.bf16.mxu0 0
    %1683 = vmatpush2.bf16.msra.mxu0 0
    %1684 = vmatprep.subr.bf16.mxu0 0
    %1685 = vmatpush2.bf16.msra.mxu0 0
    %1686 = vmatprep.subr.bf16.mxu0 0
    %1687 = vmatpush2.bf16.msra.mxu0 0
    %1688 = vmatprep.subr.bf16.mxu0 0
    %1689 = vmatpush2.bf16.msra.mxu0 0
    %1690 = vmatprep.subr.bf16.mxu0 0
    %1691 = vmatpush2.bf16.msra.mxu0 0
    %1692 = vmatprep.subr.bf16.mxu0 0
    %1693 = vmatpush2.bf16.msra.mxu0 0
    %1694 = vmatprep.subr.bf16.mxu0 0
    %1695 = vmatpush2.bf16.msra.mxu0 0
    %1696 = vmatprep.subr.bf16.mxu0 0
    %1697 = vmatpush2.bf16.msra.mxu0 0
    %1698 = vmatprep.mubr.bf16.mxu0 0
    %1699 = vmatmul.mubr.bf16.gmra.mxu0 %v1664
    %v1700 = vpop.f32.mrf.mxu0
    %v1701 = vadd.f32 %v126, %v1700
    %v1702 = vpop.f32.mrf.mxu0
    %v1703 = vadd.f32 %v130, %v1702
    %v1704 = vpop.f32.mrf.mxu0
    %v1705 = vpop.f32.mrf.mxu0
    %1706 = vdwg.mxu0
    %1707 = vmatprep.subr.bf16.mxu0 0
    %1708 = vmatpush1.bf16.msra.mxu0 0
    %1709 = vmatprep.subr.bf16.mxu0 0
    %1710 = vmatpush1.bf16.msra.mxu0 0
    %1711 = vmatprep.subr.bf16.mxu0 0
    %1712 = vmatpush1.bf16.msra.mxu0 0
    %1713 = vmatprep.subr.bf16.mxu0 0
    %1714 = vmatpush1.bf16.msra.mxu0 0
    %1715 = vmatprep.subr.bf16.mxu0 0
    %1716 = vmatpush1.bf16.msra.mxu0 %v189
    %1717 = vmatprep.subr.bf16.mxu0 0
    %1718 = vmatpush1.bf16.msra.mxu0 %v186
    %1719 = vmatprep.subr.bf16.mxu0 0
    %1720 = vmatpush1.bf16.msra.mxu0 %v183
    %1721 = vmatprep.subr.bf16.mxu0 0
    %1722 = vmatpush1.bf16.msra.mxu0 %v180
    %1723 = vmatprep.subr.bf16.mxu0 0
    %1724 = vmatpush2.bf16.msra.mxu0 0
    %1725 = vmatprep.subr.bf16.mxu0 0
    %1726 = vmatpush2.bf16.msra.mxu0 0
    %1727 = vmatprep.subr.bf16.mxu0 0
    %1728 = vmatpush2.bf16.msra.mxu0 0
    %1729 = vmatprep.subr.bf16.mxu0 0
    %1730 = vmatpush2.bf16.msra.mxu0 0
    %1731 = vmatprep.subr.bf16.mxu0 0
    %1732 = vmatpush2.bf16.msra.mxu0 0
    %1733 = vmatprep.subr.bf16.mxu0 0
    %1734 = vmatpush2.bf16.msra.mxu0 0
    %1735 = vmatprep.subr.bf16.mxu0 0
    %1736 = vmatpush2.bf16.msra.mxu0 0
    %1737 = vmatprep.subr.bf16.mxu0 0
    %1738 = vmatpush2.bf16.msra.mxu0 0
    %1739 = vmatprep.mubr.bf16.mxu0 0
    %1740 = vmatmul.mubr.bf16.gmra.mxu0 %v1664
    %v1741 = vpop.f32.mrf.mxu0
    %v1742 = vadd.f32 %v134, %v1741
    %v1743 = vpop.f32.mrf.mxu0
    %v1744 = vpop.f32.mrf.mxu0
    %v1745 = vpop.f32.mrf.mxu0
    %1746 = vdwg.mxu0
    %v1747 = vxor.u32 %v1701, 2147483648
    %v1748 = vmul.f32 %v1747, 1.442695
    %v1749 = vpow.pop %v1748
    %v1750 = vadd.f32 %v1749, 1.0
    %v1751 = vrcp.pop %v1750
    %v1752 = vmul.f32 1.0, %v1751
    %v1753 = vtanh.pop %v1703
    %v1754 = vxor.u32 %v1742, 2147483648
    %v1755 = vmul.f32 %v1754, 1.442695
    %v1756 = vpow.pop %v1755
    %v1757 = vadd.f32 %v1756, 1.0
    %v1758 = vrcp.pop %v1757
    %v1759 = vmul.f32 1.0, %v1758
    %v1760 = vtanh.pop %v1742
    %1762 = vrot.lane.b32.xlu0 %v1642, 32
    %v1763 = vpop.permute.xlu0 %1762
    %1765 = vrot.lane.b32.xlu0 %v1642, 64
    %v1766 = vpop.permute.xlu0 %1765
    %1768 = vrot.lane.b32.xlu0 %v1642, 96
    %v1769 = vpop.permute.xlu0 %1768
    %v1771 = vsel %vm119, %v1642, %v1763
    %v1772 = vsel %vm202, %v1771, %v1766
    %v1773 = vsel %vm313, %v1772, %v1769
    %v1774 = vmul.f32 %v1752, %v1753
    %v1775 = vsub.f32 1.0, %v1752
    %v1776 = vmul.f32 %v1775, %v1773
    %v1777 = vadd.f32 %v1774, %v1776
    %1779 = vrot.lane.b32.xlu0 %v1760, 64
    %v1780 = vpop.permute.xlu0 %1779
    %1783 = vrot.lane.b32.xlu0 %v1777, 32
    %v1784 = vpop.permute.xlu0 %1783
    %v1786 = vsel %vm119, %v1780, %v1784
    %v1787 = vpack.c.bf16 %v1786, %v1786
    %v1788 = vpack.c.bf16 %v1784, %v1784
    %v1790 = vsel %vm119, %v1788, 0
    %1792 = vmatprep.subr.bf16.mxu0 %v405
    %1793 = vmatpush1.bf16.msra.mxu0 %v404
    %1794 = vmatprep.subr.bf16.mxu0 %v403
    %1795 = vmatpush1.bf16.msra.mxu0 %v402
    %1796 = vmatprep.subr.bf16.mxu0 %v401
    %1797 = vmatpush1.bf16.msra.mxu0 %v400
    %1798 = vmatprep.subr.bf16.mxu0 %v399
    %1799 = vmatpush1.bf16.msra.mxu0 %v398
    %1800 = vmatprep.subr.bf16.mxu0 %v397
    %1801 = vmatpush1.bf16.msra.mxu0 %v396
    %1802 = vmatprep.subr.bf16.mxu0 %v395
    %1803 = vmatpush1.bf16.msra.mxu0 %v394
    %1804 = vmatprep.subr.bf16.mxu0 %v393
    %1805 = vmatpush1.bf16.msra.mxu0 %v392
    %1806 = vmatprep.subr.bf16.mxu0 %v391
    %1807 = vmatpush1.bf16.msra.mxu0 %v390
    %1808 = vmatprep.subr.bf16.mxu0 0
    %1809 = vmatpush2.bf16.msra.mxu0 0
    %1810 = vmatprep.subr.bf16.mxu0 0
    %1811 = vmatpush2.bf16.msra.mxu0 0
    %1812 = vmatprep.subr.bf16.mxu0 0
    %1813 = vmatpush2.bf16.msra.mxu0 0
    %1814 = vmatprep.subr.bf16.mxu0 0
    %1815 = vmatpush2.bf16.msra.mxu0 0
    %1816 = vmatprep.subr.bf16.mxu0 0
    %1817 = vmatpush2.bf16.msra.mxu0 0
    %1818 = vmatprep.subr.bf16.mxu0 0
    %1819 = vmatpush2.bf16.msra.mxu0 0
    %1820 = vmatprep.subr.bf16.mxu0 %v409
    %1821 = vmatpush2.bf16.msra.mxu0 %v408
    %1822 = vmatprep.subr.bf16.mxu0 %v407
    %1823 = vmatpush2.bf16.msra.mxu0 %v406
    %1824 = vmatprep.mubr.bf16.mxu0 %v1790
    %1825 = vmatmul.mubr.bf16.gmra.mxu0 %v1787
    %v1826 = vpop.f32.mrf.mxu0
    %v1827 = vadd.f32 0.0, %v1826
    %v1828 = vpop.f32.mrf.mxu0
    %v1829 = vadd.f32 0.0, %v1828
    %v1830 = vpop.f32.mrf.mxu0
    %v1831 = vpop.f32.mrf.mxu0
    %1832 = vdwg.mxu0
    %v1833 = vtanh.pop %v1827
    %v1834 = vtanh.pop %v1829
    %v1835 = vmul.f32 %v1833, %v480
    %v1836 = vmul.f32 %v1834, %v484
    %v1837 = vsel %vm489, %v1835, 0.0
    %1838 = vadd.xlane.f32.xlu0 %v1837
    %v1839 = vpop.xlane.xlu0 %1838
    %1841 = vrot.lane.b32.xlu0 %v1835, 64
    %v1842 = vpop.permute.xlu0 %1841
    %v1844 = vsel %vm489, %v1842, 0.0
    %1845 = vadd.xlane.f32.xlu0 %v1844
    %v1846 = vpop.xlane.xlu0 %1845
    %v1847 = vsel %vm489, %v1836, 0.0
    %1848 = vadd.xlane.f32.xlu0 %v1847
    %v1849 = vpop.xlane.xlu0 %1848
    %1851 = vrot.lane.b32.xlu0 %v1836, 64
    %v1852 = vpop.permute.xlu0 %1851
    %v1854 = vsel %vm489, %v1852, 0.0
    %1855 = vadd.xlane.f32.xlu0 %v1854
    %v1856 = vpop.xlane.xlu0 %1855
    %v1857 = vsel %vm510, %v1839, %v1846
    %v1858 = vsel %vm512, %v1857, %v1849
    %v1859 = vsel %vm514, %v1858, %v1856
    %v1860 = vsel %vm516, %v1859, -inf
    %1861 = vmax.xlane.f32.xlu0 %v1860
    %v1862 = vpop.xlane.xlu0 %1861
    %v1863 = vsub.f32 %v1859, %v1862
    %v1864 = vmul.f32 %v1863, 1.442695
    %v1865 = vpow.pop %v1864
    %v1866 = vsel %vm516, %v1865, 0.0
    %1867 = vadd.xlane.f32.xlu0 %v1866
    %v1868 = vpop.xlane.xlu0 %1867
    %v1869 = vrcp.pop %v1868
    %v1870 = vmul.f32 %v1865, %v1869
    %1872 = vset.pattern.permute.xlu0 0
    %1873 = vperm.xlu0 %1872, %v1870
    %v1874 = vpop.permute.xlu0 %1873
    %v1876 = vmul.f32 %v1874, %v1777
    %v1877 = vadd.f32 %v1876, 0.0
    %1878 = vset.pattern.permute.xlu0 1
    %1879 = vperm.xlu0 %1878, %v1870
    %v1880 = vpop.permute.xlu0 %1879
    %v1882 = vmul.f32 %v1880, %v1777
    %1884 = vrot.lane.b32.xlu0 %v1882, 96
    %v1885 = vpop.permute.xlu0 %1884
    %v1887 = vadd.f32 %v1877, %v1885
    %1888 = vset.pattern.permute.xlu0 2
    %1889 = vperm.xlu0 %1888, %v1870
    %v1890 = vpop.permute.xlu0 %1889
    %v1892 = vmul.f32 %v1890, %v1777
    %1894 = vrot.lane.b32.xlu0 %v1892, 64
    %v1895 = vpop.permute.xlu0 %1894
    %v1897 = vadd.f32 %v1887, %v1895
    %1898 = vset.pattern.permute.xlu0 3
    %1899 = vperm.xlu0 %1898, %v1870
    %v1900 = vpop.permute.xlu0 %1899
    %v1902 = vmul.f32 %v1900, %v1777
    %1904 = vrot.lane.b32.xlu0 %v1902, 32
    %v1905 = vpop.permute.xlu0 %1904
    %v1907 = vadd.f32 %v1897, %v1905
    %v1908 = vsub.f32 1.0, %v1759
    %v1909 = vmul.f32 %v1908, %v1642
    %v1910 = vmul.f32 %v1759, %v1907
    %v1911 = vadd.f32 %v1909, %v1910
    %v1912 = vtanh.pop %v1911
    %1914 = vrot.lane.b32.xlu0 %v1912, 32
    %v1915 = vpop.permute.xlu0 %1914
    %v1917 = vmul.f32 %v1759, %v1915
    %1919 = vrot.lane.b32.xlu0 %v1917, 96
    %v1920 = vpop.permute.xlu0 %1919
    %s1922 = scalar_lea.vmem [#allocation10], 10
    %1923 = vst.msk [vmem:[%s1922] sm:$0x3] %vm579, %v1920
    %s1924 = scalar_lea.vmem [#allocation11], 10
    %1925 = vst [vmem:[%s1924] sm:$0x3] %v1777
    %s1926 = scalar_lea.vmem %s7, 10
    %1927 = vst.msk [vmem:[%s1926] sm:$0x3] %vm516, %v1870
    %s1928 = scalar_lea.vmem [#allocation4], 12
    %v1929 = vld [vmem:[%s1928] sm:$0x3]
    %v1930 = vsel %vm119, %v1929, %v1917
    %v1931 = vpack.c.bf16 %v1930, %v1930
    %v1933 = vsel %vm202, %v1931, 0
    %1935 = vmatprep.subr.bf16.mxu0 0
    %1936 = vmatpush1.bf16.msra.mxu0 0
    %1937 = vmatprep.subr.bf16.mxu0 0
    %1938 = vmatpush1.bf16.msra.mxu0 0
    %1939 = vmatprep.subr.bf16.mxu0 0
    %1940 = vmatpush1.bf16.msra.mxu0 0
    %1941 = vmatprep.subr.bf16.mxu0 0
    %1942 = vmatpush1.bf16.msra.mxu0 0
    %1943 = vmatprep.subr.bf16.mxu0 %v188
    %1944 = vmatpush1.bf16.msra.mxu0 %v187
    %1945 = vmatprep.subr.bf16.mxu0 %v185
    %1946 = vmatpush1.bf16.msra.mxu0 %v184
    %1947 = vmatprep.subr.bf16.mxu0 %v182
    %1948 = vmatpush1.bf16.msra.mxu0 %v181
    %1949 = vmatprep.subr.bf16.mxu0 %v179
    %1950 = vmatpush1.bf16.msra.mxu0 %v178
    %1951 = vmatprep.subr.bf16.mxu0 0
    %1952 = vmatpush2.bf16.msra.mxu0 0
    %1953 = vmatprep.subr.bf16.mxu0 0
    %1954 = vmatpush2.bf16.msra.mxu0 0
    %1955 = vmatprep.subr.bf16.mxu0 0
    %1956 = vmatpush2.bf16.msra.mxu0 0
    %1957 = vmatprep.subr.bf16.mxu0 0
    %1958 = vmatpush2.bf16.msra.mxu0 0
    %1959 = vmatprep.subr.bf16.mxu0 0
    %1960 = vmatpush2.bf16.msra.mxu0 0
    %1961 = vmatprep.subr.bf16.mxu0 0
    %1962 = vmatpush2.bf16.msra.mxu0 0
    %1963 = vmatprep.subr.bf16.mxu0 0
    %1964 = vmatpush2.bf16.msra.mxu0 0
    %1965 = vmatprep.subr.bf16.mxu0 0
    %1966 = vmatpush2.bf16.msra.mxu0 0
    %1967 = vmatprep.mubr.bf16.mxu0 0
    %1968 = vmatmul.mubr.bf16.gmra.mxu0 %v1933
    %v1969 = vpop.f32.mrf.mxu0
    %v1970 = vadd.f32 %v126, %v1969
    %v1971 = vpop.f32.mrf.mxu0
    %v1972 = vadd.f32 %v130, %v1971
    %v1973 = vpop.f32.mrf.mxu0
    %v1974 = vpop.f32.mrf.mxu0
    %1975 = vdwg.mxu0
    %1976 = vmatprep.subr.bf16.mxu0 0
    %1977 = vmatpush1.bf16.msra.mxu0 0
    %1978 = vmatprep.subr.bf16.mxu0 0
    %1979 = vmatpush1.bf16.msra.mxu0 0
    %1980 = vmatprep.subr.bf16.mxu0 0
    %1981 = vmatpush1.bf16.msra.mxu0 0
    %1982 = vmatprep.subr.bf16.mxu0 0
    %1983 = vmatpush1.bf16.msra.mxu0 0
    %1984 = vmatprep.subr.bf16.mxu0 0
    %1985 = vmatpush1.bf16.msra.mxu0 %v189
    %1986 = vmatprep.subr.bf16.mxu0 0
    %1987 = vmatpush1.bf16.msra.mxu0 %v186
    %1988 = vmatprep.subr.bf16.mxu0 0
    %1989 = vmatpush1.bf16.msra.mxu0 %v183
    %1990 = vmatprep.subr.bf16.mxu0 0
    %1991 = vmatpush1.bf16.msra.mxu0 %v180
    %1992 = vmatprep.subr.bf16.mxu0 0
    %1993 = vmatpush2.bf16.msra.mxu0 0
    %1994 = vmatprep.subr.bf16.mxu0 0
    %1995 = vmatpush2.bf16.msra.mxu0 0
    %1996 = vmatprep.subr.bf16.mxu0 0
    %1997 = vmatpush2.bf16.msra.mxu0 0
    %1998 = vmatprep.subr.bf16.mxu0 0
    %1999 = vmatpush2.bf16.msra.mxu0 0
    %2000 = vmatprep.subr.bf16.mxu0 0
    %2001 = vmatpush2.bf16.msra.mxu0 0
    %2002 = vmatprep.subr.bf16.mxu0 0
    %2003 = vmatpush2.bf16.msra.mxu0 0
    %2004 = vmatprep.subr.bf16.mxu0 0
    %2005 = vmatpush2.bf16.msra.mxu0 0
    %2006 = vmatprep.subr.bf16.mxu0 0
    %2007 = vmatpush2.bf16.msra.mxu0 0
    %2008 = vmatprep.mubr.bf16.mxu0 0
    %2009 = vmatmul.mubr.bf16.gmra.mxu0 %v1933
    %v2010 = vpop.f32.mrf.mxu0
    %v2011 = vadd.f32 %v134, %v2010
    %v2012 = vpop.f32.mrf.mxu0
    %v2013 = vpop.f32.mrf.mxu0
    %v2014 = vpop.f32.mrf.mxu0
    %2015 = vdwg.mxu0
    %v2016 = vxor.u32 %v1970, 2147483648
    %v2017 = vmul.f32 %v2016, 1.442695
    %v2018 = vpow.pop %v2017
    %v2019 = vadd.f32 %v2018, 1.0
    %v2020 = vrcp.pop %v2019
    %v2021 = vmul.f32 1.0, %v2020
    %v2022 = vtanh.pop %v1972
    %v2023 = vxor.u32 %v2011, 2147483648
    %v2024 = vmul.f32 %v2023, 1.442695
    %v2025 = vpow.pop %v2024
    %v2026 = vadd.f32 %v2025, 1.0
    %v2027 = vrcp.pop %v2026
    %v2028 = vmul.f32 1.0, %v2027
    %v2029 = vtanh.pop %v2011
    %2031 = vrot.lane.b32.xlu0 %v1911, 32
    %v2032 = vpop.permute.xlu0 %2031
    %2034 = vrot.lane.b32.xlu0 %v1911, 64
    %v2035 = vpop.permute.xlu0 %2034
    %2037 = vrot.lane.b32.xlu0 %v1911, 96
    %v2038 = vpop.permute.xlu0 %2037
    %v2040 = vsel %vm119, %v1911, %v2032
    %v2041 = vsel %vm202, %v2040, %v2035
    %v2042 = vsel %vm313, %v2041, %v2038
    %v2043 = vmul.f32 %v2021, %v2022
    %v2044 = vsub.f32 1.0, %v2021
    %v2045 = vmul.f32 %v2044, %v2042
    %v2046 = vadd.f32 %v2043, %v2045
    %2048 = vrot.lane.b32.xlu0 %v2029, 64
    %v2049 = vpop.permute.xlu0 %2048
    %2052 = vrot.lane.b32.xlu0 %v2046, 32
    %v2053 = vpop.permute.xlu0 %2052
    %v2055 = vsel %vm119, %v2049, %v2053
    %v2056 = vpack.c.bf16 %v2055, %v2055
    %v2057 = vpack.c.bf16 %v2053, %v2053
    %v2059 = vsel %vm119, %v2057, 0
    %2061 = vmatprep.subr.bf16.mxu0 %v405
    %2062 = vmatpush1.bf16.msra.mxu0 %v404
    %2063 = vmatprep.subr.bf16.mxu0 %v403
    %2064 = vmatpush1.bf16.msra.mxu0 %v402
    %2065 = vmatprep.subr.bf16.mxu0 %v401
    %2066 = vmatpush1.bf16.msra.mxu0 %v400
    %2067 = vmatprep.subr.bf16.mxu0 %v399
    %2068 = vmatpush1.bf16.msra.mxu0 %v398
    %2069 = vmatprep.subr.bf16.mxu0 %v397
    %2070 = vmatpush1.bf16.msra.mxu0 %v396
    %2071 = vmatprep.subr.bf16.mxu0 %v395
    %2072 = vmatpush1.bf16.msra.mxu0 %v394
    %2073 = vmatprep.subr.bf16.mxu0 %v393
    %2074 = vmatpush1.bf16.msra.mxu0 %v392
    %2075 = vmatprep.subr.bf16.mxu0 %v391
    %2076 = vmatpush1.bf16.msra.mxu0 %v390
    %2077 = vmatprep.subr.bf16.mxu0 0
    %2078 = vmatpush2.bf16.msra.mxu0 0
    %2079 = vmatprep.subr.bf16.mxu0 0
    %2080 = vmatpush2.bf16.msra.mxu0 0
    %2081 = vmatprep.subr.bf16.mxu0 0
    %2082 = vmatpush2.bf16.msra.mxu0 0
    %2083 = vmatprep.subr.bf16.mxu0 0
    %2084 = vmatpush2.bf16.msra.mxu0 0
    %2085 = vmatprep.subr.bf16.mxu0 0
    %2086 = vmatpush2.bf16.msra.mxu0 0
    %2087 = vmatprep.subr.bf16.mxu0 0
    %2088 = vmatpush2.bf16.msra.mxu0 0
    %2089 = vmatprep.subr.bf16.mxu0 %v409
    %2090 = vmatpush2.bf16.msra.mxu0 %v408
    %2091 = vmatprep.subr.bf16.mxu0 %v407
    %2092 = vmatpush2.bf16.msra.mxu0 %v406
    %2093 = vmatprep.mubr.bf16.mxu0 %v2059
    %2094 = vmatmul.mubr.bf16.gmra.mxu0 %v2056
    %v2095 = vpop.f32.mrf.mxu0
    %v2096 = vadd.f32 0.0, %v2095
    %v2097 = vpop.f32.mrf.mxu0
    %v2098 = vadd.f32 0.0, %v2097
    %v2099 = vpop.f32.mrf.mxu0
    %v2100 = vpop.f32.mrf.mxu0
    %2101 = vdwg.mxu0
    %v2102 = vtanh.pop %v2096
    %v2103 = vtanh.pop %v2098
    %v2104 = vmul.f32 %v2102, %v480
    %v2105 = vmul.f32 %v2103, %v484
    %v2106 = vsel %vm489, %v2104, 0.0
    %2107 = vadd.xlane.f32.xlu0 %v2106
    %v2108 = vpop.xlane.xlu0 %2107
    %2110 = vrot.lane.b32.xlu0 %v2104, 64
    %v2111 = vpop.permute.xlu0 %2110
    %v2113 = vsel %vm489, %v2111, 0.0
    %2114 = vadd.xlane.f32.xlu0 %v2113
    %v2115 = vpop.xlane.xlu0 %2114
    %v2116 = vsel %vm489, %v2105, 0.0
    %2117 = vadd.xlane.f32.xlu0 %v2116
    %v2118 = vpop.xlane.xlu0 %2117
    %2120 = vrot.lane.b32.xlu0 %v2105, 64
    %v2121 = vpop.permute.xlu0 %2120
    %v2123 = vsel %vm489, %v2121, 0.0
    %2124 = vadd.xlane.f32.xlu0 %v2123
    %v2125 = vpop.xlane.xlu0 %2124
    %v2126 = vsel %vm510, %v2108, %v2115
    %v2127 = vsel %vm512, %v2126, %v2118
    %v2128 = vsel %vm514, %v2127, %v2125
    %v2129 = vsel %vm516, %v2128, -inf
    %2130 = vmax.xlane.f32.xlu0 %v2129
    %v2131 = vpop.xlane.xlu0 %2130
    %v2132 = vsub.f32 %v2128, %v2131
    %v2133 = vmul.f32 %v2132, 1.442695
    %v2134 = vpow.pop %v2133
    %v2135 = vsel %vm516, %v2134, 0.0
    %2136 = vadd.xlane.f32.xlu0 %v2135
    %v2137 = vpop.xlane.xlu0 %2136
    %v2138 = vrcp.pop %v2137
    %v2139 = vmul.f32 %v2134, %v2138
    %2141 = vset.pattern.permute.xlu0 0
    %2142 = vperm.xlu0 %2141, %v2139
    %v2143 = vpop.permute.xlu0 %2142
    %v2145 = vmul.f32 %v2143, %v2046
    %v2146 = vadd.f32 %v2145, 0.0
    %2147 = vset.pattern.permute.xlu0 1
    %2148 = vperm.xlu0 %2147, %v2139
    %v2149 = vpop.permute.xlu0 %2148
    %v2151 = vmul.f32 %v2149, %v2046
    %2153 = vrot.lane.b32.xlu0 %v2151, 96
    %v2154 = vpop.permute.xlu0 %2153
    %v2156 = vadd.f32 %v2146, %v2154
    %2157 = vset.pattern.permute.xlu0 2
    %2158 = vperm.xlu0 %2157, %v2139
    %v2159 = vpop.permute.xlu0 %2158
    %v2161 = vmul.f32 %v2159, %v2046
    %2163 = vrot.lane.b32.xlu0 %v2161, 64
    %v2164 = vpop.permute.xlu0 %2163
    %v2166 = vadd.f32 %v2156, %v2164
    %2167 = vset.pattern.permute.xlu0 3
    %2168 = vperm.xlu0 %2167, %v2139
    %v2169 = vpop.permute.xlu0 %2168
    %v2171 = vmul.f32 %v2169, %v2046
    %2173 = vrot.lane.b32.xlu0 %v2171, 32
    %v2174 = vpop.permute.xlu0 %2173
    %v2176 = vadd.f32 %v2166, %v2174
    %v2177 = vsub.f32 1.0, %v2028
    %v2178 = vmul.f32 %v2177, %v1911
    %v2179 = vmul.f32 %v2028, %v2176
    %v2180 = vadd.f32 %v2178, %v2179
    %v2181 = vtanh.pop %v2180
    %2183 = vrot.lane.b32.xlu0 %v2181, 32
    %v2184 = vpop.permute.xlu0 %2183
    %v2186 = vmul.f32 %v2028, %v2184
    %2188 = vrot.lane.b32.xlu0 %v2186, 96
    %v2189 = vpop.permute.xlu0 %2188
    %s2191 = scalar_lea.vmem [#allocation10], 12
    %2192 = vst.msk [vmem:[%s2191] sm:$0x3] %vm579, %v2189
    %s2193 = scalar_lea.vmem [#allocation11], 12
    %2194 = vst [vmem:[%s2193] sm:$0x3] %v2046
    %s2195 = scalar_lea.vmem %s7, 12
    %2196 = vst.msk [vmem:[%s2195] sm:$0x3] %vm516, %v2139
    %s2197 = scalar_lea.vmem [#allocation4], 14
    %v2198 = vld [vmem:[%s2197] sm:$0x3]
    %v2199 = vsel %vm119, %v2198, %v2186
    %v2200 = vpack.c.bf16 %v2199, %v2199
    %v2202 = vsel %vm202, %v2200, 0
    %2204 = vmatprep.subr.bf16.mxu0 0
    %2205 = vmatpush1.bf16.msra.mxu0 0
    %2206 = vmatprep.subr.bf16.mxu0 0
    %2207 = vmatpush1.bf16.msra.mxu0 0
    %2208 = vmatprep.subr.bf16.mxu0 0
    %2209 = vmatpush1.bf16.msra.mxu0 0
    %2210 = vmatprep.subr.bf16.mxu0 0
    %2211 = vmatpush1.bf16.msra.mxu0 0
    %2212 = vmatprep.subr.bf16.mxu0 %v188
    %2213 = vmatpush1.bf16.msra.mxu0 %v187
    %2214 = vmatprep.subr.bf16.mxu0 %v185
    %2215 = vmatpush1.bf16.msra.mxu0 %v184
    %2216 = vmatprep.subr.bf16.mxu0 %v182
    %2217 = vmatpush1.bf16.msra.mxu0 %v181
    %2218 = vmatprep.subr.bf16.mxu0 %v179
    %2219 = vmatpush1.bf16.msra.mxu0 %v178
    %2220 = vmatprep.subr.bf16.mxu0 0
    %2221 = vmatpush2.bf16.msra.mxu0 0
    %2222 = vmatprep.subr.bf16.mxu0 0
    %2223 = vmatpush2.bf16.msra.mxu0 0
    %2224 = vmatprep.subr.bf16.mxu0 0
    %2225 = vmatpush2.bf16.msra.mxu0 0
    %2226 = vmatprep.subr.bf16.mxu0 0
    %2227 = vmatpush2.bf16.msra.mxu0 0
    %2228 = vmatprep.subr.bf16.mxu0 0
    %2229 = vmatpush2.bf16.msra.mxu0 0
    %2230 = vmatprep.subr.bf16.mxu0 0
    %2231 = vmatpush2.bf16.msra.mxu0 0
    %2232 = vmatprep.subr.bf16.mxu0 0
    %2233 = vmatpush2.bf16.msra.mxu0 0
    %2234 = vmatprep.subr.bf16.mxu0 0
    %2235 = vmatpush2.bf16.msra.mxu0 0
    %2236 = vmatprep.mubr.bf16.mxu0 0
    %2237 = vmatmul.mubr.bf16.gmra.mxu0 %v2202
    %v2238 = vpop.f32.mrf.mxu0
    %v2239 = vadd.f32 %v126, %v2238
    %v2240 = vpop.f32.mrf.mxu0
    %v2241 = vadd.f32 %v130, %v2240
    %v2242 = vpop.f32.mrf.mxu0
    %v2243 = vpop.f32.mrf.mxu0
    %2244 = vdwg.mxu0
    %2245 = vmatprep.subr.bf16.mxu0 0
    %2246 = vmatpush1.bf16.msra.mxu0 0
    %2247 = vmatprep.subr.bf16.mxu0 0
    %2248 = vmatpush1.bf16.msra.mxu0 0
    %2249 = vmatprep.subr.bf16.mxu0 0
    %2250 = vmatpush1.bf16.msra.mxu0 0
    %2251 = vmatprep.subr.bf16.mxu0 0
    %2252 = vmatpush1.bf16.msra.mxu0 0
    %2253 = vmatprep.subr.bf16.mxu0 0
    %2254 = vmatpush1.bf16.msra.mxu0 %v189
    %2255 = vmatprep.subr.bf16.mxu0 0
    %2256 = vmatpush1.bf16.msra.mxu0 %v186
    %2257 = vmatprep.subr.bf16.mxu0 0
    %2258 = vmatpush1.bf16.msra.mxu0 %v183
    %2259 = vmatprep.subr.bf16.mxu0 0
    %2260 = vmatpush1.bf16.msra.mxu0 %v180
    %2261 = vmatprep.subr.bf16.mxu0 0
    %2262 = vmatpush2.bf16.msra.mxu0 0
    %2263 = vmatprep.subr.bf16.mxu0 0
    %2264 = vmatpush2.bf16.msra.mxu0 0
    %2265 = vmatprep.subr.bf16.mxu0 0
    %2266 = vmatpush2.bf16.msra.mxu0 0
    %2267 = vmatprep.subr.bf16.mxu0 0
    %2268 = vmatpush2.bf16.msra.mxu0 0
    %2269 = vmatprep.subr.bf16.mxu0 0
    %2270 = vmatpush2.bf16.msra.mxu0 0
    %2271 = vmatprep.subr.bf16.mxu0 0
    %2272 = vmatpush2.bf16.msra.mxu0 0
    %2273 = vmatprep.subr.bf16.mxu0 0
    %2274 = vmatpush2.bf16.msra.mxu0 0
    %2275 = vmatprep.subr.bf16.mxu0 0
    %2276 = vmatpush2.bf16.msra.mxu0 0
    %2277 = vmatprep.mubr.bf16.mxu0 0
    %2278 = vmatmul.mubr.bf16.gmra.mxu0 %v2202
    %v2279 = vpop.f32.mrf.mxu0
    %v2280 = vadd.f32 %v134, %v2279
    %v2281 = vpop.f32.mrf.mxu0
    %v2282 = vpop.f32.mrf.mxu0
    %v2283 = vpop.f32.mrf.mxu0
    %2284 = vdwg.mxu0
    %v2285 = vxor.u32 %v2239, 2147483648
    %v2286 = vmul.f32 %v2285, 1.442695
    %v2287 = vpow.pop %v2286
    %v2288 = vadd.f32 %v2287, 1.0
    %v2289 = vrcp.pop %v2288
    %v2290 = vmul.f32 1.0, %v2289
    %v2291 = vtanh.pop %v2241
    %v2292 = vxor.u32 %v2280, 2147483648
    %v2293 = vmul.f32 %v2292, 1.442695
    %v2294 = vpow.pop %v2293
    %v2295 = vadd.f32 %v2294, 1.0
    %v2296 = vrcp.pop %v2295
    %v2297 = vmul.f32 1.0, %v2296
    %v2298 = vtanh.pop %v2280
    %2300 = vrot.lane.b32.xlu0 %v2180, 32
    %v2301 = vpop.permute.xlu0 %2300
    %2303 = vrot.lane.b32.xlu0 %v2180, 64
    %v2304 = vpop.permute.xlu0 %2303
    %2306 = vrot.lane.b32.xlu0 %v2180, 96
    %v2307 = vpop.permute.xlu0 %2306
    %v2309 = vsel %vm119, %v2180, %v2301
    %v2310 = vsel %vm202, %v2309, %v2304
    %v2311 = vsel %vm313, %v2310, %v2307
    %v2312 = vmul.f32 %v2290, %v2291
    %v2313 = vsub.f32 1.0, %v2290
    %v2314 = vmul.f32 %v2313, %v2311
    %v2315 = vadd.f32 %v2312, %v2314
    %2317 = vrot.lane.b32.xlu0 %v2298, 64
    %v2318 = vpop.permute.xlu0 %2317
    %2321 = vrot.lane.b32.xlu0 %v2315, 32
    %v2322 = vpop.permute.xlu0 %2321
    %v2324 = vsel %vm119, %v2318, %v2322
    %v2325 = vpack.c.bf16 %v2324, %v2324
    %v2326 = vpack.c.bf16 %v2322, %v2322
    %v2328 = vsel %vm119, %v2326, 0
    %2330 = vmatprep.subr.bf16.mxu0 %v405
    %2331 = vmatpush1.bf16.msra.mxu0 %v404
    %2332 = vmatprep.subr.bf16.mxu0 %v403
    %2333 = vmatpush1.bf16.msra.mxu0 %v402
    %2334 = vmatprep.subr.bf16.mxu0 %v401
    %2335 = vmatpush1.bf16.msra.mxu0 %v400
    %2336 = vmatprep.subr.bf16.mxu0 %v399
    %2337 = vmatpush1.bf16.msra.mxu0 %v398
    %2338 = vmatprep.subr.bf16.mxu0 %v397
    %2339 = vmatpush1.bf16.msra.mxu0 %v396
    %2340 = vmatprep.subr.bf16.mxu0 %v395
    %2341 = vmatpush1.bf16.msra.mxu0 %v394
    %2342 = vmatprep.subr.bf16.mxu0 %v393
    %2343 = vmatpush1.bf16.msra.mxu0 %v392
    %2344 = vmatprep.subr.bf16.mxu0 %v391
    %2345 = vmatpush1.bf16.msra.mxu0 %v390
    %2346 = vmatprep.subr.bf16.mxu0 0
    %2347 = vmatpush2.bf16.msra.mxu0 0
    %2348 = vmatprep.subr.bf16.mxu0 0
    %2349 = vmatpush2.bf16.msra.mxu0 0
    %2350 = vmatprep.subr.bf16.mxu0 0
    %2351 = vmatpush2.bf16.msra.mxu0 0
    %2352 = vmatprep.subr.bf16.mxu0 0
    %2353 = vmatpush2.bf16.msra.mxu0 0
    %2354 = vmatprep.subr.bf16.mxu0 0
    %2355 = vmatpush2.bf16.msra.mxu0 0
    %2356 = vmatprep.subr.bf16.mxu0 0
    %2357 = vmatpush2.bf16.msra.mxu0 0
    %2358 = vmatprep.subr.bf16.mxu0 %v409
    %2359 = vmatpush2.bf16.msra.mxu0 %v408
    %2360 = vmatprep.subr.bf16.mxu0 %v407
    %2361 = vmatpush2.bf16.msra.mxu0 %v406
    %2362 = vmatprep.mubr.bf16.mxu0 %v2328
    %2363 = vmatmul.mubr.bf16.gmra.mxu0 %v2325
    %v2364 = vpop.f32.mrf.mxu0
    %v2365 = vadd.f32 0.0, %v2364
    %v2366 = vpop.f32.mrf.mxu0
    %v2367 = vadd.f32 0.0, %v2366
    %v2368 = vpop.f32.mrf.mxu0
    %v2369 = vpop.f32.mrf.mxu0
    %2370 = vdwg.mxu0
    %v2371 = vtanh.pop %v2365
    %v2372 = vtanh.pop %v2367
    %v2373 = vmul.f32 %v2371, %v480
    %v2374 = vmul.f32 %v2372, %v484
    %v2375 = vsel %vm489, %v2373, 0.0
    %2376 = vadd.xlane.f32.xlu0 %v2375
    %v2377 = vpop.xlane.xlu0 %2376
    %2379 = vrot.lane.b32.xlu0 %v2373, 64
    %v2380 = vpop.permute.xlu0 %2379
    %v2382 = vsel %vm489, %v2380, 0.0
    %2383 = vadd.xlane.f32.xlu0 %v2382
    %v2384 = vpop.xlane.xlu0 %2383
    %v2385 = vsel %vm489, %v2374, 0.0
    %2386 = vadd.xlane.f32.xlu0 %v2385
    %v2387 = vpop.xlane.xlu0 %2386
    %2389 = vrot.lane.b32.xlu0 %v2374, 64
    %v2390 = vpop.permute.xlu0 %2389
    %v2392 = vsel %vm489, %v2390, 0.0
    %2393 = vadd.xlane.f32.xlu0 %v2392
    %v2394 = vpop.xlane.xlu0 %2393
    %v2395 = vsel %vm510, %v2377, %v2384
    %v2396 = vsel %vm512, %v2395, %v2387
    %v2397 = vsel %vm514, %v2396, %v2394
    %v2398 = vsel %vm516, %v2397, -inf
    %2399 = vmax.xlane.f32.xlu0 %v2398
    %v2400 = vpop.xlane.xlu0 %2399
    %v2401 = vsub.f32 %v2397, %v2400
    %v2402 = vmul.f32 %v2401, 1.442695
    %v2403 = vpow.pop %v2402
    %v2404 = vsel %vm516, %v2403, 0.0
    %2405 = vadd.xlane.f32.xlu0 %v2404
    %v2406 = vpop.xlane.xlu0 %2405
    %v2407 = vrcp.pop %v2406
    %v2408 = vmul.f32 %v2403, %v2407
    %2410 = vset.pattern.permute.xlu0 0
    %2411 = vperm.xlu0 %2410, %v2408
    %v2412 = vpop.permute.xlu0 %2411
    %v2414 = vmul.f32 %v2412, %v2315
    %v2415 = vadd.f32 %v2414, 0.0
    %2416 = vset.pattern.permute.xlu0 1
    %2417 = vperm.xlu0 %2416, %v2408
    %v2418 = vpop.permute.xlu0 %2417
    %v2420 = vmul.f32 %v2418, %v2315
    %2422 = vrot.lane.b32.xlu0 %v2420, 96
    %v2423 = vpop.permute.xlu0 %2422
    %v2425 = vadd.f32 %v2415, %v2423
    %2426 = vset.pattern.permute.xlu0 2
    %2427 = vperm.xlu0 %2426, %v2408
    %v2428 = vpop.permute.xlu0 %2427
    %v2430 = vmul.f32 %v2428, %v2315
    %2432 = vrot.lane.b32.xlu0 %v2430, 64
    %v2433 = vpop.permute.xlu0 %2432
    %v2435 = vadd.f32 %v2425, %v2433
    %2436 = vset.pattern.permute.xlu0 3
    %2437 = vperm.xlu0 %2436, %v2408
    %v2438 = vpop.permute.xlu0 %2437
    %v2440 = vmul.f32 %v2438, %v2315
    %2442 = vrot.lane.b32.xlu0 %v2440, 32
    %v2443 = vpop.permute.xlu0 %2442
    %v2445 = vadd.f32 %v2435, %v2443
    %v2446 = vsub.f32 1.0, %v2297
    %v2447 = vmul.f32 %v2446, %v2180
    %v2448 = vmul.f32 %v2297, %v2445
    %v2449 = vadd.f32 %v2447, %v2448
    %v2450 = vtanh.pop %v2449
    %2452 = vrot.lane.b32.xlu0 %v2450, 32
    %v2453 = vpop.permute.xlu0 %2452
    %v2455 = vmul.f32 %v2297, %v2453
    %2457 = vrot.lane.b32.xlu0 %v2455, 96
    %v2458 = vpop.permute.xlu0 %2457
    %s2460 = scalar_lea.vmem [#allocation10], 14
    %2461 = vst.msk [vmem:[%s2460] sm:$0x3] %vm579, %v2458
    %s2462 = scalar_lea.vmem [#allocation11], 14
    %2463 = vst [vmem:[%s2462] sm:$0x3] %v2315
    %s2464 = scalar_lea.vmem %s7, 14
    %2465 = vst.msk [vmem:[%s2464] sm:$0x3] %vm516, %v2408
    %2466 = vst.msk [vmem:[#allocation2] sm:$0x3] %vm579, %v2458
    %2467 = vst.msk [vmem:[#allocation3] sm:$0x3] %vm579, %v2449
    // Predicated region
    $region38: #{tpu_custom_call.1} parent=1 // pred_check
      _
    $region39: #{tpu_custom_call.1} parent=1 // pred_check_branch
      %2469 = sbr.rel (0) target = $region41
    $region40: #{tpu_custom_call.1} parent=1 // pred_region
      %s2471 = ssub.s32 256, 256
      %2472 = vsyncadd [#allocation6], %s2471
      %s2473 = sshll.u32 [#allocation10], 4
      %s2474 = int_to_ptr.vmem [resolvable:$true] %s2473
      %2479 = dma.vmem_to_hbm [thread:$0]  %s2474, 256, %s5, [#allocation6], 32, 32, 2
    $region41: #{tpu_custom_call.1} parent=1 // pred_fallthru
      _
    // Predicated region
    $region42: #{tpu_custom_call.1} parent=1 // pred_check
      _
    $region43: #{tpu_custom_call.1} parent=1 // pred_check_branch
      %2481 = sbr.rel (0) target = $region45
    $region44: #{tpu_custom_call.1} parent=1 // pred_region
      %s2483 = ssub.s32 256, 256
      %2484 = vsyncadd [#allocation12], %s2483
      %s2485 = sshll.u32 [#allocation11], 4
      %s2486 = int_to_ptr.vmem [resolvable:$true] %s2485
      %2491 = dma.vmem_to_hbm [thread:$0]  %s2486, 256, %s6, [#allocation12], 32, 32, 2
    $region45: #{tpu_custom_call.1} parent=1 // pred_fallthru
      _
    // Predicated region
    $region46: #{tpu_custom_call.1} parent=1 // pred_check
      _
    $region47: #{tpu_custom_call.1} parent=1 // pred_check_branch
      %2493 = sbr.rel (0) target = $region49
    $region48: #{tpu_custom_call.1} parent=1 // pred_region
      _
    $region49: #{tpu_custom_call.1} parent=1 // pred_fallthru
      _
    // Predicated region
    $region50: #{tpu_custom_call.1} parent=1 // pred_check
      _
    $region51: #{tpu_custom_call.1} parent=1 // pred_check_branch
      %2495 = sbr.rel (0) target = $region53
    $region52: #{tpu_custom_call.1} parent=1 // pred_region
      %2496 = dma.done [#allocation6], 256
    $region53: #{tpu_custom_call.1} parent=1 // pred_fallthru
      _
    // Predicated region
    $region54: #{tpu_custom_call.1} parent=1 // pred_check
      _
    $region55: #{tpu_custom_call.1} parent=1 // pred_check_branch
      %2498 = sbr.rel (0) target = $region57
    $region56: #{tpu_custom_call.1} parent=1 // pred_region
      %2499 = dma.done [#allocation12], 256
    $region57: #{tpu_custom_call.1} parent=1 // pred_fallthru
      _
    // Predicated region
    $region58: #{tpu_custom_call.1} parent=1 // pred_check
      _
    $region59: #{tpu_custom_call.1} parent=1 // pred_check_branch
      %2501 = sbr.rel (0) target = $region61
    $region60: #{tpu_custom_call.1} parent=1 // pred_region
      _
    $region61: #{tpu_custom_call.1} parent=1 // pred_fallthru
      _
    %2502 = vsyncpa [#allocation5], 1
    %2503 = vsyncpa [#allocation8], 1
    %2504 = vsyncpa [#allocation6], 1
    %2505 = vsyncpa [#allocation12], 1

</llo_original>
